<compile_context>
chip_gen: v7x
topology: tpu7x:2x2x1
jax: 0.10.0
libtpu: 0.0.40
codegen_flags: <defaults>
</compile_context>

<pallas_src>
import functools

import jax
import jax.numpy as jnp
from jax.experimental import pallas as pl
from jax.experimental.pallas import tpu as pltpu

LANE = 128                       # lane width: matmul N dims / conv output channels padded to this
EPS = 1e-5
VMEM_LIMIT = 32 * 1024 * 1024    # safe scoped-VMEM limit on v5e/v6e/v7x


def _round_up(x, m):
    return ((x + m - 1) // m) * m


# --------------------------------------------------------------------------
# Pallas kernels
# --------------------------------------------------------------------------
def _matmul_bias_act_kernel(x_ref, w_ref, b_ref, o_ref, *, relu):
    # (tm, Kp) @ (Kp, N) on the MXU, f32 accumulate, then f32 bias (+ ReLU).
    acc = jnp.dot(x_ref[...], w_ref[...], preferred_element_type=jnp.float32)
    y = acc + b_ref[...]
    if relu:
        y = jnp.maximum(y, 0.0)
    o_ref[...] = y.astype(o_ref.dtype)


def matmul_bias_act(x, w, bias, *, relu, out_dtype=jnp.float32):
    """y = act(x @ w + bias), row-tiled; weights/bias resident in VMEM.

    x:    (M, K)  cast to bf16 for the MXU
    w:    (Kp, N) bf16 with Kp >= K, Kp % 128 == 0, N % 128 == 0 (lane dense)
    bias: (1, N)  f32, applied in the f32 epilogue
    """
    x = x.astype(jnp.bfloat16)
    M, K = x.shape
    Kp, N = w.shape
    assert Kp >= K and Kp % LANE == 0 and N % LANE == 0

    # v7x: split rows into 2 balanced "parallel" steps (one per TensorCore)
    # whenever there is enough work; on v5e/v6e the extra step is ~0.35us.
    # Rows are rounded to 16 sublanes for clean bf16 vreg packing.
    n_steps = 2 if M >= 32 else 1
    tm = _round_up(-(-M // n_steps), 16)
    Mp = tm * n_steps
    if (Mp, Kp) != (M, K):
        x = jnp.pad(x, ((0, Mp - M), (0, Kp - K)))   # zero pad: no effect on result

    out = pl.pallas_call(
        functools.partial(_matmul_bias_act_kernel, relu=relu),
        out_shape=jax.ShapeDtypeStruct((Mp, N), out_dtype),
        grid=(n_steps,),
        in_specs=[
            pl.BlockSpec((tm, Kp), lambda i: (i, 0)),   # streamed row tile
            pl.BlockSpec((Kp, N), lambda i: (0, 0)),    # resident weights
            pl.BlockSpec((1, N), lambda i: (0, 0)),     # resident bias
        ],
        out_specs=pl.BlockSpec((tm, N), lambda i: (i, 0)),
        compiler_params=pltpu.CompilerParams(
            dimension_semantics=("parallel",),          # shard row tiles across TCs (v7x)
            vmem_limit_bytes=VMEM_LIMIT,
        ),
    )(x, w, bias)
    return out if Mp == M else out[:M]


def _fc_stack_kernel(x_ref, w1_ref, b1_ref, w2_ref, b2_ref, w3_ref, b3_ref, o_ref):
    # fc1 + ReLU + fc2 + ReLU + fc3 fused in a single launch.
    h = jnp.dot(x_ref[...], w1_ref[...], preferred_element_type=jnp.float32)
    h = jnp.maximum(h + b1_ref[...], 0.0)
    h = jnp.dot(h.astype(w2_ref.dtype), w2_ref[...], preferred_element_type=jnp.float32)
    h = jnp.maximum(h + b2_ref[...], 0.0)
    h = jnp.dot(h.astype(w3_ref.dtype), w3_ref[...], preferred_element_type=jnp.float32)
    o_ref[...] = h + b3_ref[...]


def fc_stack(x, w1, b1, w2, b2, w3, b3):
    """Fused 3-layer MLP head; all weight dims 128-padded (lane dense)."""
    x = x.astype(jnp.bfloat16)
    M, K1 = x.shape
    N1, N2, N3 = w1.shape[1], w2.shape[1], w3.shape[1]
    assert w1.shape[0] == K1 and w2.shape[0] == N1 and w3.shape[0] == N2
    assert K1 % LANE == 0 and N1 % LANE == 0 and N2 % LANE == 0 and N3 % LANE == 0

    n_steps = 2 if M >= 32 else 1
    tm = _round_up(-(-M // n_steps), 16)
    Mp = tm * n_steps
    if Mp != M:
        x = jnp.pad(x, ((0, Mp - M), (0, 0)))

    out = pl.pallas_call(
        _fc_stack_kernel,
        out_shape=jax.ShapeDtypeStruct((Mp, N3), jnp.float32),
        grid=(n_steps,),
        in_specs=[
            pl.BlockSpec((tm, K1), lambda i: (i, 0)),
            pl.BlockSpec((K1, N1), lambda i: (0, 0)),
            pl.BlockSpec((1, N1), lambda i: (0, 0)),
            pl.BlockSpec((N1, N2), lambda i: (0, 0)),
            pl.BlockSpec((1, N2), lambda i: (0, 0)),
            pl.BlockSpec((N2, N3), lambda i: (0, 0)),
            pl.BlockSpec((1, N3), lambda i: (0, 0)),
        ],
        out_specs=pl.BlockSpec((tm, N3), lambda i: (i, 0)),
        compiler_params=pltpu.CompilerParams(
            dimension_semantics=("parallel",),
            vmem_limit_bytes=VMEM_LIMIT,
        ),
    )(x, w1, b1, w2, b2, w3, b3)
    return out if Mp == M else out[:M]


def _maxpool_kernel(x_ref, o_ref, *, c):
    # x block: (R, 2, Wo, 2*C) -> out block: (R, Wo, C)
    x = x_ref[...]
    m = jnp.maximum(x[:, 0], x[:, 1])                  # max over the H pair (leading axis)
    o_ref[...] = jnp.maximum(m[..., :c], m[..., c:])   # max over the W pair (lane halves)


def maxpool2x2_nhwc(x):
    """MaxPool2d(kernel_size=2, stride=2) on NHWC input; single grid step."""
    B, H, W, C = x.shape
    assert H % 2 == 0 and W % 2 == 0, "maxpool2x2 expects even spatial dims"
    assert C % LANE == 0
    Ho, Wo = H // 2, W // 2
    R = B * Ho
    xr = x.reshape(R, 2, Wo, 2 * C)                    # pure reshape: (b*ho, hp, wo, wp*c)
    out = pl.pallas_call(
        functools.partial(_maxpool_kernel, c=C),
        out_shape=jax.ShapeDtypeStruct((R, Wo, C), x.dtype),
        grid=(1,),
        in_specs=[pl.BlockSpec((R, 2, Wo, 2 * C), lambda i: (0, 0, 0, 0))],
        out_specs=pl.BlockSpec((R, Wo, C), lambda i: (0, 0, 0)),
        compiler_params=pltpu.CompilerParams(vmem_limit_bytes=VMEM_LIMIT),
    )(xr)
    return out.reshape(B, Ho, Wo, C)


# --------------------------------------------------------------------------
# Glue: im2col (NHWC, REAL channel count) + conv wrapper
# --------------------------------------------------------------------------
def im2col_nhwc(x, kh, kw, padding, c_real):
    """x: (B, H, W, >=c_real) -> (B*OH*OW, kh*kw*c_real); tap-major, channel-minor."""
    x = x[..., :c_real]                                 # drop lane padding from prev layer
    if padding:
        x = jnp.pad(x, ((0, 0), (padding, padding), (padding, padding), (0, 0)))
    B, H, W, C = x.shape
    OH, OW = H - kh + 1, W - kw + 1
    cols = [x[:, i:i + OH, j:j + OW, :] for i in range(kh) for j in range(kw)]
    p = jnp.concatenate(cols, axis=-1)                  # (B, OH, OW, kh*kw*C)
    return p.reshape(B * OH * OW, kh * kw * C), (B, OH, OW)


def conv_bn_relu(x, layer, cin, *, padding=0):
    """Conv2d(k=3) + folded BatchNorm (eval) + ReLU; output stays 128-channel NHWC."""
    patches, (B, OH, OW) = im2col_nhwc(x, 3, 3, padding, cin)
    y = matmul_bias_act(patches, layer["wm"], layer["bias"],
                        relu=True, out_dtype=jnp.bfloat16)
    return y.reshape(B, OH, OW, layer["wm"].shape[1])


# --------------------------------------------------------------------------
# Parameter construction (PyTorch layouts) + host-side folding / padding
# --------------------------------------------------------------------------
def make_conv_bn_params(key, in_c, out_c):
    k = jax.random.split(key, 6)
    fan_in = in_c * 9
    return {
        "w": jax.random.normal(k[0], (out_c, in_c, 3, 3), jnp.float32) / jnp.sqrt(fan_in),
        "b": 0.1 * jax.random.normal(k[1], (out_c,), jnp.float32),
        "gamma": 1.0 + 0.1 * jax.random.normal(k[2], (out_c,), jnp.float32),
        "beta": 0.1 * jax.random.normal(k[3], (out_c,), jnp.float32),
        "mean": 0.1 * jax.random.normal(k[4], (out_c,), jnp.float32),
        "var": jax.random.uniform(k[5], (out_c,), jnp.float32, 0.5, 1.5),
    }


def make_linear_params(key, in_f, out_f):
    k = jax.random.split(key, 2)
    return {
        "w": jax.random.normal(k[0], (out_f, in_f), jnp.float32) / jnp.sqrt(in_f),
        "b": 0.1 * jax.random.normal(k[1], (out_f,), jnp.float32),
    }


def make_params(key, input_shape, hidden_units, n_classes):
    ks = jax.random.split(key, 8)
    h, h4, h8 = hidden_units, hidden_units * 4, hidden_units * 8
    return {
        "layer1": make_conv_bn_params(ks[0], input_shape, h),
        "layer2": make_conv_bn_params(ks[1], h, h),
        "layer3": make_conv_bn_params(ks[2], h, h4),
        "layer4": make_conv_bn_params(ks[3], h4, h4),
        "layer5": make_conv_bn_params(ks[4], h4, h4),
        "fc1": make_linear_params(ks[5], h4 * 4 * 4, h8),
        "fc2": make_linear_params(ks[6], h8, h8),
        "fc3": make_linear_params(ks[7], h8, n_classes),
    }


def _prepare_conv(p):
    """Fold BN (eval mode) into weight/bias.  K uses real input channels (padded
    only at the end to a multiple of 128); output channels padded to 128."""
    w, b = p["w"], p["b"]
    oc, cin, kh, kw = w.shape
    k_real = kh * kw * cin
    kp = _round_up(k_real, LANE)
    ocp = _round_up(oc, LANE)
    scale = p["gamma"] / jnp.sqrt(p["var"] + EPS)
    bias = p["beta"] + (b - p["mean"]) * scale
    wt = (w * scale[:, None, None, None]).transpose(2, 3, 1, 0)   # (kh, kw, cin, oc)
    wm = wt.reshape(k_real, oc)
    wm = jnp.pad(wm, ((0, kp - k_real), (0, ocp - oc)))
    return {
        "wm": wm.astype(jnp.bfloat16),                                     # (Kp, 128)
        "bias": jnp.pad(bias, (0, ocp - oc)).reshape(1, ocp).astype(jnp.float32),
    }


def _prepare_linear(p, in_pad, perm_chw=None):
    w, b = p["w"], p["b"]                     # torch layout (out, in)
    out_f, in_f = w.shape
    if perm_chw is not None:
        # torch flattens (C, H, W); our features are flattened (H, W, C):
        # permute the weight columns to match.
        c, hh, ww = perm_chw
        w = w.reshape(out_f, c, hh, ww).transpose(0, 2, 3, 1).reshape(out_f, in_f)
    outp = _round_up(out_f, LANE)
    return {
        "wm": jnp.pad(w.T, ((0, in_pad - in_f), (0, outp - out_f))).astype(jnp.bfloat16),
        "bias": jnp.pad(b, (0, outp - out_f)).reshape(1, outp).astype(jnp.float32),
    }


def prepare_params(params, in_channels):
    prep, cins = {}, {}
    c = int(in_channels)
    for name in ("layer1", "layer2", "layer3", "layer4", "layer5"):
        cins[name] = c                                   # real input channels (static)
        prep[name] = _prepare_conv(params[name])
        c = int(params[name]["w"].shape[0])              # real output channels
    oc5 = c
    fc1_in = int(params["fc1"]["w"].shape[1])
    spat = int(round((fc1_in // oc5) ** 0.5))            # 4 for 28x28 inputs
    prep["fc1"] = _prepare_linear(params["fc1"], _round_up(fc1_in, LANE),
                                  perm_chw=(oc5, spat, spat))
    prep["fc2"] = _prepare_linear(params["fc2"], prep["fc1"]["wm"].shape[1])
    prep["fc3"] = _prepare_linear(params["fc3"], prep["fc2"]["wm"].shape[1])
    cfg = {"cins": cins, "oc5": oc5, "n_classes": int(params["fc3"]["w"].shape[0])}
    return prep, cfg


# --------------------------------------------------------------------------
# Forward pass (mirrors cnn.forward, inference-mode BatchNorm)
# --------------------------------------------------------------------------
def cnn_forward(prep, x_nchw, *, cfg):
    cins, oc5, n_classes = cfg["cins"], cfg["oc5"], cfg["n_classes"]
    B = x_nchw.shape[0]
    # NCHW -> NHWC once; activations stay NHWC bf16 with 128-padded (lane-dense)
    # output channels, but im2col slices back to the real channel count.
    x = jnp.transpose(x_nchw, (0, 2, 3, 1)).astype(jnp.bfloat16)

    x = conv_bn_relu(x, prep["layer1"], cins["layer1"])                              # (B,26,26,128)
    x = maxpool2x2_nhwc(conv_bn_relu(x, prep["layer2"], cins["layer2"]))             # (B,12,12,128)
    x = conv_bn_relu(x, prep["layer3"], cins["layer3"])                              # (B,10,10,128)
    x = conv_bn_relu(x, prep["layer4"], cins["layer4"])                              # (B, 8, 8,128)
    x = maxpool2x2_nhwc(conv_bn_relu(x, prep["layer5"], cins["layer5"], padding=1))  # (B, 4, 4,128)

    # Flatten in (h, w, c) order; fc1's weight columns were permuted to match
    # torch's (c, h, w) flatten, so logits are numerically equivalent.
    feat = x[..., :oc5].reshape(B, -1)
    k1 = prep["fc1"]["wm"].shape[0]
    if feat.shape[1] != k1:
        feat = jnp.pad(feat, ((0, 0), (0, k1 - feat.shape[1])))
    logits = fc_stack(feat,
                      prep["fc1"]["wm"], prep["fc1"]["bias"],
                      prep["fc2"]["wm"], prep["fc2"]["bias"],
                      prep["fc3"]["wm"], prep["fc3"]["bias"])
    return logits[:, :n_classes]


if __name__ == "__main__":
    # PathMNIST-style config: 3x28x28 input, hidden_units=8, 9 classes.
    batch, in_channels, H, W = 2, 3, 28, 28
    hidden_units, n_classes = 8, 9

    key = jax.random.PRNGKey(0)
    kp, kx = jax.random.split(key)
    params = make_params(kp, in_channels, hidden_units, n_classes)
    prep, cfg = prepare_params(params, in_channels)
    x = jax.random.normal(kx, (batch, in_channels, H, W), jnp.float32)

    fwd = jax.jit(functools.partial(cnn_forward, cfg=cfg))
    out = jax.block_until_ready(fwd(prep, x))
    assert out.shape == (batch, n_classes), out.shape
    assert bool(jnp.all(jnp.isfinite(out)))
    print("KERNEL_OK")
</pallas_src>

<mosaic_0001>
module attributes {stable_mosaic.version = 11 : i64} {
  func.func @_matmul_bias_act_kernel(%arg0: i32, %arg1: memref<688x128xbf16, #tpu.memory_space<vmem>>, %arg2: memref<128x128xbf16, #tpu.memory_space<vmem>>, %arg3: memref<1x128xf32, #tpu.memory_space<vmem>>, %arg4: memref<688x128xbf16, #tpu.memory_space<vmem>>) attributes {dimension_semantics = [#tpu.dimension_semantics<parallel>], iteration_bounds = array<i64: 2>, scalar_prefetch = 0 : i64, scratch_operands = 0 : i64, tpu.core_type = #tpu.core_type<tc>, window_params = [{transform_indices = @transform_0, window_bounds = array<i64: 688, 128>}, {pipeline_mode = #tpu.pipeline_mode<synchronous>, transform_indices = @transform_1, window_bounds = array<i64: 128, 128>}, {pipeline_mode = #tpu.pipeline_mode<synchronous>, transform_indices = @transform_2, window_bounds = array<i64: 1, 128>}, {transform_indices = @transform_3, window_bounds = array<i64: 688, 128>}]} {
    %c0 = arith.constant 0 : index
    %c0_0 = arith.constant 0 : index
    %0 = vector.load %arg1[%c0, %c0_0] : memref<688x128xbf16, #tpu.memory_space<vmem>>, vector<688x128xbf16>
    %c0_1 = arith.constant 0 : index
    %c0_2 = arith.constant 0 : index
    %1 = vector.load %arg2[%c0_1, %c0_2] : memref<128x128xbf16, #tpu.memory_space<vmem>>, vector<128x128xbf16>
    %cst = arith.constant dense<0.000000e+00> : vector<688x128xf32>
    %2 = tpu.matmul %0, %1, %cst {dimension_numbers = #tpu.dot_dimension_numbers<[1], [0], [0], [1], [0, 0, 1, 1], [], []>} : vector<688x128xbf16>, vector<128x128xbf16>, vector<688x128xf32> -> vector<688x128xf32>
    %c0_3 = arith.constant 0 : index
    %c0_4 = arith.constant 0 : index
    %3 = vector.load %arg3[%c0_3, %c0_4] : memref<1x128xf32, #tpu.memory_space<vmem>>, vector<1x128xf32>
    %4 = vector.broadcast %3 : vector<1x128xf32> to vector<688x128xf32>
    %5 = arith.addf %2, %4 : vector<688x128xf32>
    %cst_5 = arith.constant 0.000000e+00 : f32
    %6 = vector.broadcast %cst_5 : f32 to vector<688x128xf32>
    %7 = arith.maximumf %5, %6 : vector<688x128xf32>
    %8 = arith.truncf %7 : vector<688x128xf32> to vector<688x128xbf16>
    %c0_6 = arith.constant 0 : index
    %c0_7 = arith.constant 0 : index
    %9 = vector.load %arg4[%c0_6, %c0_7] : memref<688x128xbf16, #tpu.memory_space<vmem>>, vector<688x128xbf16>
    tpu.vector_store %arg4[%c0_6, %c0_7], %8 {strides = array<i32>} : memref<688x128xbf16, #tpu.memory_space<vmem>>, vector<688x128xbf16>,
    return
  }
  func.func @transform_0(%arg0: i32) -> (i32, i32) {
    %c0_i32 = arith.constant 0 : i32
    %c0_i32_0 = arith.constant 0 : i32
    return %arg0, %c0_i32 : i32, i32
  }
  func.func @transform_1(%arg0: i32) -> (i32, i32) {
    %c0_i32 = arith.constant 0 : i32
    %c0_i32_0 = arith.constant 0 : i32
    %c0_i32_1 = arith.constant 0 : i32
    return %c0_i32, %c0_i32_0 : i32, i32
  }
  func.func @transform_2(%arg0: i32) -> (i32, i32) {
    %c0_i32 = arith.constant 0 : i32
    %c0_i32_0 = arith.constant 0 : i32
    %c0_i32_1 = arith.constant 0 : i32
    return %c0_i32, %c0_i32_0 : i32, i32
  }
  func.func @transform_3(%arg0: i32) -> (i32, i32) {
    %c0_i32 = arith.constant 0 : i32
    %c0_i32_0 = arith.constant 0 : i32
    return %arg0, %c0_i32 : i32, i32
  }
}

module attributes {stable_mosaic.version = 11 : i64} {
  func.func @_matmul_bias_act_kernel(%arg0: i32, %arg1: memref<576x128xbf16, #tpu.memory_space<vmem>>, %arg2: memref<128x128xbf16, #tpu.memory_space<vmem>>, %arg3: memref<1x128xf32, #tpu.memory_space<vmem>>, %arg4: memref<576x128xbf16, #tpu.memory_space<vmem>>) attributes {dimension_semantics = [#tpu.dimension_semantics<parallel>], iteration_bounds = array<i64: 2>, scalar_prefetch = 0 : i64, scratch_operands = 0 : i64, tpu.core_type = #tpu.core_type<tc>, window_params = [{transform_indices = @transform_0, window_bounds = array<i64: 576, 128>}, {pipeline_mode = #tpu.pipeline_mode<synchronous>, transform_indices = @transform_1, window_bounds = array<i64: 128, 128>}, {pipeline_mode = #tpu.pipeline_mode<synchronous>, transform_indices = @transform_2, window_bounds = array<i64: 1, 128>}, {transform_indices = @transform_3, window_bounds = array<i64: 576, 128>}]} {
    %c0 = arith.constant 0 : index
    %c0_0 = arith.constant 0 : index
    %0 = vector.load %arg1[%c0, %c0_0] : memref<576x128xbf16, #tpu.memory_space<vmem>>, vector<576x128xbf16>
    %c0_1 = arith.constant 0 : index
    %c0_2 = arith.constant 0 : index
    %1 = vector.load %arg2[%c0_1, %c0_2] : memref<128x128xbf16, #tpu.memory_space<vmem>>, vector<128x128xbf16>
    %cst = arith.constant dense<0.000000e+00> : vector<576x128xf32>
    %2 = tpu.matmul %0, %1, %cst {dimension_numbers = #tpu.dot_dimension_numbers<[1], [0], [0], [1], [0, 0, 1, 1], [], []>} : vector<576x128xbf16>, vector<128x128xbf16>, vector<576x128xf32> -> vector<576x128xf32>
    %c0_3 = arith.constant 0 : index
    %c0_4 = arith.constant 0 : index
    %3 = vector.load %arg3[%c0_3, %c0_4] : memref<1x128xf32, #tpu.memory_space<vmem>>, vector<1x128xf32>
    %4 = vector.broadcast %3 : vector<1x128xf32> to vector<576x128xf32>
    %5 = arith.addf %2, %4 : vector<576x128xf32>
    %cst_5 = arith.constant 0.000000e+00 : f32
    %6 = vector.broadcast %cst_5 : f32 to vector<576x128xf32>
    %7 = arith.maximumf %5, %6 : vector<576x128xf32>
    %8 = arith.truncf %7 : vector<576x128xf32> to vector<576x128xbf16>
    %c0_6 = arith.constant 0 : index
    %c0_7 = arith.constant 0 : index
    %9 = vector.load %arg4[%c0_6, %c0_7] : memref<576x128xbf16, #tpu.memory_space<vmem>>, vector<576x128xbf16>
    tpu.vector_store %arg4[%c0_6, %c0_7], %8 {strides = array<i32>} : memref<576x128xbf16, #tpu.memory_space<vmem>>, vector<576x128xbf16>,
    return
  }
  func.func @transform_0(%arg0: i32) -> (i32, i32) {
    %c0_i32 = arith.constant 0 : i32
    %c0_i32_0 = arith.constant 0 : i32
    return %arg0, %c0_i32 : i32, i32
  }
  func.func @transform_1(%arg0: i32) -> (i32, i32) {
    %c0_i32 = arith.constant 0 : i32
    %c0_i32_0 = arith.constant 0 : i32
    %c0_i32_1 = arith.constant 0 : i32
    return %c0_i32, %c0_i32_0 : i32, i32
  }
  func.func @transform_2(%arg0: i32) -> (i32, i32) {
    %c0_i32 = arith.constant 0 : i32
    %c0_i32_0 = arith.constant 0 : i32
    %c0_i32_1 = arith.constant 0 : i32
    return %c0_i32, %c0_i32_0 : i32, i32
  }
  func.func @transform_3(%arg0: i32) -> (i32, i32) {
    %c0_i32 = arith.constant 0 : i32
    %c0_i32_0 = arith.constant 0 : i32
    return %arg0, %c0_i32 : i32, i32
  }
}

module attributes {stable_mosaic.version = 11 : i64} {
  func.func @_maxpool_kernel(%arg0: i32, %arg1: memref<24x2x12x256xbf16, #tpu.memory_space<vmem>>, %arg2: memref<24x12x128xbf16, #tpu.memory_space<vmem>>) attributes {dimension_semantics = [#tpu.dimension_semantics<arbitrary>], iteration_bounds = array<i64: 1>, scalar_prefetch = 0 : i64, scratch_operands = 0 : i64, tpu.core_type = #tpu.core_type<tc>, window_params = [{pipeline_mode = #tpu.pipeline_mode<synchronous>, transform_indices = @transform_0, window_bounds = array<i64: 24, 2, 12, 256>}, {pipeline_mode = #tpu.pipeline_mode<synchronous>, transform_indices = @transform_1, window_bounds = array<i64: 24, 12, 128>}]} {
    %c0 = arith.constant 0 : index
    %c0_0 = arith.constant 0 : index
    %c0_1 = arith.constant 0 : index
    %c0_2 = arith.constant 0 : index
    %0 = vector.load %arg1[%c0, %c0_0, %c0_1, %c0_2] : memref<24x2x12x256xbf16, #tpu.memory_space<vmem>>, vector<24x2x12x256xbf16>
    %1 = vector.extract_strided_slice %0 {offsets = [0, 0, 0, 0], sizes = [24, 1, 12, 256], strides = [1, 1, 1, 1]} : vector<24x2x12x256xbf16> to vector<24x1x12x256xbf16>
    %2 = vector.shape_cast %1 : vector<24x1x12x256xbf16> to vector<24x12x256xbf16>
    %3 = vector.extract_strided_slice %0 {offsets = [0, 1, 0, 0], sizes = [24, 1, 12, 256], strides = [1, 1, 1, 1]} : vector<24x2x12x256xbf16> to vector<24x1x12x256xbf16>
    %4 = vector.shape_cast %3 : vector<24x1x12x256xbf16> to vector<24x12x256xbf16>
    %5 = arith.maximumf %2, %4 : vector<24x12x256xbf16>
    %6 = vector.extract_strided_slice %5 {offsets = [0, 0, 0], sizes = [24, 12, 128], strides = [1, 1, 1]} : vector<24x12x256xbf16> to vector<24x12x128xbf16>
    %7 = vector.extract_strided_slice %5 {offsets = [0, 0, 128], sizes = [24, 12, 128], strides = [1, 1, 1]} : vector<24x12x256xbf16> to vector<24x12x128xbf16>
    %8 = arith.maximumf %6, %7 : vector<24x12x128xbf16>
    %c0_3 = arith.constant 0 : index
    %c0_4 = arith.constant 0 : index
    %c0_5 = arith.constant 0 : index
    %9 = vector.load %arg2[%c0_3, %c0_4, %c0_5] : memref<24x12x128xbf16, #tpu.memory_space<vmem>>, vector<24x12x128xbf16>
    tpu.vector_store %arg2[%c0_3, %c0_4, %c0_5], %8 {strides = array<i32>} : memref<24x12x128xbf16, #tpu.memory_space<vmem>>, vector<24x12x128xbf16>,
    return
  }
  func.func @transform_0(%arg0: i32) -> (i32, i32, i32, i32) {
    %c0_i32 = arith.constant 0 : i32
    %c0_i32_0 = arith.constant 0 : i32
    %c0_i32_1 = arith.constant 0 : i32
    %c0_i32_2 = arith.constant 0 : i32
    %c0_i32_3 = arith.constant 0 : i32
    return %c0_i32, %c0_i32_0, %c0_i32_1, %c0_i32_2 : i32, i32, i32, i32
  }
  func.func @transform_1(%arg0: i32) -> (i32, i32, i32) {
    %c0_i32 = arith.constant 0 : i32
    %c0_i32_0 = arith.constant 0 : i32
    %c0_i32_1 = arith.constant 0 : i32
    %c0_i32_2 = arith.constant 0 : i32
    return %c0_i32, %c0_i32_0, %c0_i32_1 : i32, i32, i32
  }
}

module attributes {stable_mosaic.version = 11 : i64} {
  func.func @_matmul_bias_act_kernel(%arg0: i32, %arg1: memref<112x128xbf16, #tpu.memory_space<vmem>>, %arg2: memref<128x128xbf16, #tpu.memory_space<vmem>>, %arg3: memref<1x128xf32, #tpu.memory_space<vmem>>, %arg4: memref<112x128xbf16, #tpu.memory_space<vmem>>) attributes {dimension_semantics = [#tpu.dimension_semantics<parallel>], iteration_bounds = array<i64: 2>, scalar_prefetch = 0 : i64, scratch_operands = 0 : i64, tpu.core_type = #tpu.core_type<tc>, window_params = [{transform_indices = @transform_0, window_bounds = array<i64: 112, 128>}, {pipeline_mode = #tpu.pipeline_mode<synchronous>, transform_indices = @transform_1, window_bounds = array<i64: 128, 128>}, {pipeline_mode = #tpu.pipeline_mode<synchronous>, transform_indices = @transform_2, window_bounds = array<i64: 1, 128>}, {transform_indices = @transform_3, window_bounds = array<i64: 112, 128>}]} {
    %c0 = arith.constant 0 : index
    %c0_0 = arith.constant 0 : index
    %0 = vector.load %arg1[%c0, %c0_0] : memref<112x128xbf16, #tpu.memory_space<vmem>>, vector<112x128xbf16>
    %c0_1 = arith.constant 0 : index
    %c0_2 = arith.constant 0 : index
    %1 = vector.load %arg2[%c0_1, %c0_2] : memref<128x128xbf16, #tpu.memory_space<vmem>>, vector<128x128xbf16>
    %cst = arith.constant dense<0.000000e+00> : vector<112x128xf32>
    %2 = tpu.matmul %0, %1, %cst {dimension_numbers = #tpu.dot_dimension_numbers<[1], [0], [0], [1], [0, 0, 1, 1], [], []>} : vector<112x128xbf16>, vector<128x128xbf16>, vector<112x128xf32> -> vector<112x128xf32>
    %c0_3 = arith.constant 0 : index
    %c0_4 = arith.constant 0 : index
    %3 = vector.load %arg3[%c0_3, %c0_4] : memref<1x128xf32, #tpu.memory_space<vmem>>, vector<1x128xf32>
    %4 = vector.broadcast %3 : vector<1x128xf32> to vector<112x128xf32>
    %5 = arith.addf %2, %4 : vector<112x128xf32>
    %cst_5 = arith.constant 0.000000e+00 : f32
    %6 = vector.broadcast %cst_5 : f32 to vector<112x128xf32>
    %7 = arith.maximumf %5, %6 : vector<112x128xf32>
    %8 = arith.truncf %7 : vector<112x128xf32> to vector<112x128xbf16>
    %c0_6 = arith.constant 0 : index
    %c0_7 = arith.constant 0 : index
    %9 = vector.load %arg4[%c0_6, %c0_7] : memref<112x128xbf16, #tpu.memory_space<vmem>>, vector<112x128xbf16>
    tpu.vector_store %arg4[%c0_6, %c0_7], %8 {strides = array<i32>} : memref<112x128xbf16, #tpu.memory_space<vmem>>, vector<112x128xbf16>,
    return
  }
  func.func @transform_0(%arg0: i32) -> (i32, i32) {
    %c0_i32 = arith.constant 0 : i32
    %c0_i32_0 = arith.constant 0 : i32
    return %arg0, %c0_i32 : i32, i32
  }
  func.func @transform_1(%arg0: i32) -> (i32, i32) {
    %c0_i32 = arith.constant 0 : i32
    %c0_i32_0 = arith.constant 0 : i32
    %c0_i32_1 = arith.constant 0 : i32
    return %c0_i32, %c0_i32_0 : i32, i32
  }
  func.func @transform_2(%arg0: i32) -> (i32, i32) {
    %c0_i32 = arith.constant 0 : i32
    %c0_i32_0 = arith.constant 0 : i32
    %c0_i32_1 = arith.constant 0 : i32
    return %c0_i32, %c0_i32_0 : i32, i32
  }
  func.func @transform_3(%arg0: i32) -> (i32, i32) {
    %c0_i32 = arith.constant 0 : i32
    %c0_i32_0 = arith.constant 0 : i32
    return %arg0, %c0_i32 : i32, i32
  }
}

module attributes {stable_mosaic.version = 11 : i64} {
  func.func @_matmul_bias_act_kernel(%arg0: i32, %arg1: memref<64x384xbf16, #tpu.memory_space<vmem>>, %arg2: memref<384x128xbf16, #tpu.memory_space<vmem>>, %arg3: memref<1x128xf32, #tpu.memory_space<vmem>>, %arg4: memref<64x128xbf16, #tpu.memory_space<vmem>>) attributes {dimension_semantics = [#tpu.dimension_semantics<parallel>], iteration_bounds = array<i64: 2>, scalar_prefetch = 0 : i64, scratch_operands = 0 : i64, tpu.core_type = #tpu.core_type<tc>, window_params = [{transform_indices = @transform_0, window_bounds = array<i64: 64, 384>}, {pipeline_mode = #tpu.pipeline_mode<synchronous>, transform_indices = @transform_1, window_bounds = array<i64: 384, 128>}, {pipeline_mode = #tpu.pipeline_mode<synchronous>, transform_indices = @transform_2, window_bounds = array<i64: 1, 128>}, {transform_indices = @transform_3, window_bounds = array<i64: 64, 128>}]} {
    %c0 = arith.constant 0 : index
    %c0_0 = arith.constant 0 : index
    %0 = vector.load %arg1[%c0, %c0_0] : memref<64x384xbf16, #tpu.memory_space<vmem>>, vector<64x384xbf16>
    %c0_1 = arith.constant 0 : index
    %c0_2 = arith.constant 0 : index
    %1 = vector.load %arg2[%c0_1, %c0_2] : memref<384x128xbf16, #tpu.memory_space<vmem>>, vector<384x128xbf16>
    %cst = arith.constant dense<0.000000e+00> : vector<64x128xf32>
    %2 = tpu.matmul %0, %1, %cst {dimension_numbers = #tpu.dot_dimension_numbers<[1], [0], [0], [1], [0, 0, 1, 1], [], []>} : vector<64x384xbf16>, vector<384x128xbf16>, vector<64x128xf32> -> vector<64x128xf32>
    %c0_3 = arith.constant 0 : index
    %c0_4 = arith.constant 0 : index
    %3 = vector.load %arg3[%c0_3, %c0_4] : memref<1x128xf32, #tpu.memory_space<vmem>>, vector<1x128xf32>
    %4 = vector.broadcast %3 : vector<1x128xf32> to vector<64x128xf32>
    %5 = arith.addf %2, %4 : vector<64x128xf32>
    %cst_5 = arith.constant 0.000000e+00 : f32
    %6 = vector.broadcast %cst_5 : f32 to vector<64x128xf32>
    %7 = arith.maximumf %5, %6 : vector<64x128xf32>
    %8 = arith.truncf %7 : vector<64x128xf32> to vector<64x128xbf16>
    %c0_6 = arith.constant 0 : index
    %c0_7 = arith.constant 0 : index
    %9 = vector.load %arg4[%c0_6, %c0_7] : memref<64x128xbf16, #tpu.memory_space<vmem>>, vector<64x128xbf16>
    tpu.vector_store %arg4[%c0_6, %c0_7], %8 {strides = array<i32>} : memref<64x128xbf16, #tpu.memory_space<vmem>>, vector<64x128xbf16>,
    return
  }
  func.func @transform_0(%arg0: i32) -> (i32, i32) {
    %c0_i32 = arith.constant 0 : i32
    %c0_i32_0 = arith.constant 0 : i32
    return %arg0, %c0_i32 : i32, i32
  }
  func.func @transform_1(%arg0: i32) -> (i32, i32) {
    %c0_i32 = arith.constant 0 : i32
    %c0_i32_0 = arith.constant 0 : i32
    %c0_i32_1 = arith.constant 0 : i32
    return %c0_i32, %c0_i32_0 : i32, i32
  }
  func.func @transform_2(%arg0: i32) -> (i32, i32) {
    %c0_i32 = arith.constant 0 : i32
    %c0_i32_0 = arith.constant 0 : i32
    %c0_i32_1 = arith.constant 0 : i32
    return %c0_i32, %c0_i32_0 : i32, i32
  }
  func.func @transform_3(%arg0: i32) -> (i32, i32) {
    %c0_i32 = arith.constant 0 : i32
    %c0_i32_0 = arith.constant 0 : i32
    return %arg0, %c0_i32 : i32, i32
  }
}

module attributes {stable_mosaic.version = 11 : i64} {
  func.func @_maxpool_kernel(%arg0: i32, %arg1: memref<8x2x4x256xbf16, #tpu.memory_space<vmem>>, %arg2: memref<8x4x128xbf16, #tpu.memory_space<vmem>>) attributes {dimension_semantics = [#tpu.dimension_semantics<arbitrary>], iteration_bounds = array<i64: 1>, scalar_prefetch = 0 : i64, scratch_operands = 0 : i64, tpu.core_type = #tpu.core_type<tc>, window_params = [{pipeline_mode = #tpu.pipeline_mode<synchronous>, transform_indices = @transform_0, window_bounds = array<i64: 8, 2, 4, 256>}, {pipeline_mode = #tpu.pipeline_mode<synchronous>, transform_indices = @transform_1, window_bounds = array<i64: 8, 4, 128>}]} {
    %c0 = arith.constant 0 : index
    %c0_0 = arith.constant 0 : index
    %c0_1 = arith.constant 0 : index
    %c0_2 = arith.constant 0 : index
    %0 = vector.load %arg1[%c0, %c0_0, %c0_1, %c0_2] : memref<8x2x4x256xbf16, #tpu.memory_space<vmem>>, vector<8x2x4x256xbf16>
    %1 = vector.extract_strided_slice %0 {offsets = [0, 0, 0, 0], sizes = [8, 1, 4, 256], strides = [1, 1, 1, 1]} : vector<8x2x4x256xbf16> to vector<8x1x4x256xbf16>
    %2 = vector.shape_cast %1 : vector<8x1x4x256xbf16> to vector<8x4x256xbf16>
    %3 = vector.extract_strided_slice %0 {offsets = [0, 1, 0, 0], sizes = [8, 1, 4, 256], strides = [1, 1, 1, 1]} : vector<8x2x4x256xbf16> to vector<8x1x4x256xbf16>
    %4 = vector.shape_cast %3 : vector<8x1x4x256xbf16> to vector<8x4x256xbf16>
    %5 = arith.maximumf %2, %4 : vector<8x4x256xbf16>
    %6 = vector.extract_strided_slice %5 {offsets = [0, 0, 0], sizes = [8, 4, 128], strides = [1, 1, 1]} : vector<8x4x256xbf16> to vector<8x4x128xbf16>
    %7 = vector.extract_strided_slice %5 {offsets = [0, 0, 128], sizes = [8, 4, 128], strides = [1, 1, 1]} : vector<8x4x256xbf16> to vector<8x4x128xbf16>
    %8 = arith.maximumf %6, %7 : vector<8x4x128xbf16>
    %c0_3 = arith.constant 0 : index
    %c0_4 = arith.constant 0 : index
    %c0_5 = arith.constant 0 : index
    %9 = vector.load %arg2[%c0_3, %c0_4, %c0_5] : memref<8x4x128xbf16, #tpu.memory_space<vmem>>, vector<8x4x128xbf16>
    tpu.vector_store %arg2[%c0_3, %c0_4, %c0_5], %8 {strides = array<i32>} : memref<8x4x128xbf16, #tpu.memory_space<vmem>>, vector<8x4x128xbf16>,
    return
  }
  func.func @transform_0(%arg0: i32) -> (i32, i32, i32, i32) {
    %c0_i32 = arith.constant 0 : i32
    %c0_i32_0 = arith.constant 0 : i32
    %c0_i32_1 = arith.constant 0 : i32
    %c0_i32_2 = arith.constant 0 : i32
    %c0_i32_3 = arith.constant 0 : i32
    return %c0_i32, %c0_i32_0, %c0_i32_1, %c0_i32_2 : i32, i32, i32, i32
  }
  func.func @transform_1(%arg0: i32) -> (i32, i32, i32) {
    %c0_i32 = arith.constant 0 : i32
    %c0_i32_0 = arith.constant 0 : i32
    %c0_i32_1 = arith.constant 0 : i32
    %c0_i32_2 = arith.constant 0 : i32
    return %c0_i32, %c0_i32_0, %c0_i32_1 : i32, i32, i32
  }
}

module attributes {stable_mosaic.version = 11 : i64} {
  func.func @_fc_stack_kernel(%arg0: i32, %arg1: memref<16x512xbf16, #tpu.memory_space<vmem>>, %arg2: memref<512x128xbf16, #tpu.memory_space<vmem>>, %arg3: memref<1x128xf32, #tpu.memory_space<vmem>>, %arg4: memref<128x128xbf16, #tpu.memory_space<vmem>>, %arg5: memref<1x128xf32, #tpu.memory_space<vmem>>, %arg6: memref<128x128xbf16, #tpu.memory_space<vmem>>, %arg7: memref<1x128xf32, #tpu.memory_space<vmem>>, %arg8: memref<16x128xf32, #tpu.memory_space<vmem>>) attributes {dimension_semantics = [#tpu.dimension_semantics<parallel>], iteration_bounds = array<i64: 1>, scalar_prefetch = 0 : i64, scratch_operands = 0 : i64, tpu.core_type = #tpu.core_type<tc>, window_params = [{transform_indices = @transform_0, window_bounds = array<i64: 16, 512>}, {pipeline_mode = #tpu.pipeline_mode<synchronous>, transform_indices = @transform_1, window_bounds = array<i64: 512, 128>}, {pipeline_mode = #tpu.pipeline_mode<synchronous>, transform_indices = @transform_2, window_bounds = array<i64: 1, 128>}, {pipeline_mode = #tpu.pipeline_mode<synchronous>, transform_indices = @transform_3, window_bounds = array<i64: 128, 128>}, {pipeline_mode = #tpu.pipeline_mode<synchronous>, transform_indices = @transform_4, window_bounds = array<i64: 1, 128>}, {pipeline_mode = #tpu.pipeline_mode<synchronous>, transform_indices = @transform_5, window_bounds = array<i64: 128, 128>}, {pipeline_mode = #tpu.pipeline_mode<synchronous>, transform_indices = @transform_6, window_bounds = array<i64: 1, 128>}, {transform_indices = @transform_7, window_bounds = array<i64: 16, 128>}]} {
    %c0 = arith.constant 0 : index
    %c0_0 = arith.constant 0 : index
    %0 = vector.load %arg1[%c0, %c0_0] : memref<16x512xbf16, #tpu.memory_space<vmem>>, vector<16x512xbf16>
    %c0_1 = arith.constant 0 : index
    %c0_2 = arith.constant 0 : index
    %1 = vector.load %arg2[%c0_1, %c0_2] : memref<512x128xbf16, #tpu.memory_space<vmem>>, vector<512x128xbf16>
    %cst = arith.constant dense<0.000000e+00> : vector<16x128xf32>
    %2 = tpu.matmul %0, %1, %cst {dimension_numbers = #tpu.dot_dimension_numbers<[1], [0], [0], [1], [0, 0, 1, 1], [], []>} : vector<16x512xbf16>, vector<512x128xbf16>, vector<16x128xf32> -> vector<16x128xf32>
    %c0_3 = arith.constant 0 : index
    %c0_4 = arith.constant 0 : index
    %3 = vector.load %arg3[%c0_3, %c0_4] : memref<1x128xf32, #tpu.memory_space<vmem>>, vector<1x128xf32>
    %4 = vector.broadcast %3 : vector<1x128xf32> to vector<16x128xf32>
    %5 = arith.addf %2, %4 : vector<16x128xf32>
    %cst_5 = arith.constant 0.000000e+00 : f32
    %6 = vector.broadcast %cst_5 : f32 to vector<16x128xf32>
    %7 = arith.maximumf %5, %6 : vector<16x128xf32>
    %8 = arith.truncf %7 : vector<16x128xf32> to vector<16x128xbf16>
    %c0_6 = arith.constant 0 : index
    %c0_7 = arith.constant 0 : index
    %9 = vector.load %arg4[%c0_6, %c0_7] : memref<128x128xbf16, #tpu.memory_space<vmem>>, vector<128x128xbf16>
    %cst_8 = arith.constant dense<0.000000e+00> : vector<16x128xf32>
    %10 = tpu.matmul %8, %9, %cst_8 {dimension_numbers = #tpu.dot_dimension_numbers<[1], [0], [0], [1], [0, 0, 1, 1], [], []>} : vector<16x128xbf16>, vector<128x128xbf16>, vector<16x128xf32> -> vector<16x128xf32>
    %c0_9 = arith.constant 0 : index
    %c0_10 = arith.constant 0 : index
    %11 = vector.load %arg5[%c0_9, %c0_10] : memref<1x128xf32, #tpu.memory_space<vmem>>, vector<1x128xf32>
    %12 = vector.broadcast %11 : vector<1x128xf32> to vector<16x128xf32>
    %13 = arith.addf %10, %12 : vector<16x128xf32>
    %cst_11 = arith.constant 0.000000e+00 : f32
    %14 = vector.broadcast %cst_11 : f32 to vector<16x128xf32>
    %15 = arith.maximumf %13, %14 : vector<16x128xf32>
    %16 = arith.truncf %15 : vector<16x128xf32> to vector<16x128xbf16>
    %c0_12 = arith.constant 0 : index
    %c0_13 = arith.constant 0 : index
    %17 = vector.load %arg6[%c0_12, %c0_13] : memref<128x128xbf16, #tpu.memory_space<vmem>>, vector<128x128xbf16>
    %cst_14 = arith.constant dense<0.000000e+00> : vector<16x128xf32>
    %18 = tpu.matmul %16, %17, %cst_14 {dimension_numbers = #tpu.dot_dimension_numbers<[1], [0], [0], [1], [0, 0, 1, 1], [], []>} : vector<16x128xbf16>, vector<128x128xbf16>, vector<16x128xf32> -> vector<16x128xf32>
    %c0_15 = arith.constant 0 : index
    %c0_16 = arith.constant 0 : index
    %19 = vector.load %arg7[%c0_15, %c0_16] : memref<1x128xf32, #tpu.memory_space<vmem>>, vector<1x128xf32>
    %20 = vector.broadcast %19 : vector<1x128xf32> to vector<16x128xf32>
    %21 = arith.addf %18, %20 : vector<16x128xf32>
    %c0_17 = arith.constant 0 : index
    %c0_18 = arith.constant 0 : index
    %22 = vector.load %arg8[%c0_17, %c0_18] : memref<16x128xf32, #tpu.memory_space<vmem>>, vector<16x128xf32>
    tpu.vector_store %arg8[%c0_17, %c0_18], %21 {strides = array<i32>} : memref<16x128xf32, #tpu.memory_space<vmem>>, vector<16x128xf32>,
    return
  }
  func.func @transform_0(%arg0: i32) -> (i32, i32) {
    %c0_i32 = arith.constant 0 : i32
    %c0_i32_0 = arith.constant 0 : i32
    return %arg0, %c0_i32 : i32, i32
  }
  func.func @transform_1(%arg0: i32) -> (i32, i32) {
    %c0_i32 = arith.constant 0 : i32
    %c0_i32_0 = arith.constant 0 : i32
    %c0_i32_1 = arith.constant 0 : i32
    return %c0_i32, %c0_i32_0 : i32, i32
  }
  func.func @transform_2(%arg0: i32) -> (i32, i32) {
    %c0_i32 = arith.constant 0 : i32
    %c0_i32_0 = arith.constant 0 : i32
    %c0_i32_1 = arith.constant 0 : i32
    return %c0_i32, %c0_i32_0 : i32, i32
  }
  func.func @transform_3(%arg0: i32) -> (i32, i32) {
    %c0_i32 = arith.constant 0 : i32
    %c0_i32_0 = arith.constant 0 : i32
    %c0_i32_1 = arith.constant 0 : i32
    return %c0_i32, %c0_i32_0 : i32, i32
  }
  func.func @transform_4(%arg0: i32) -> (i32, i32) {
    %c0_i32 = arith.constant 0 : i32
    %c0_i32_0 = arith.constant 0 : i32
    %c0_i32_1 = arith.constant 0 : i32
    return %c0_i32, %c0_i32_0 : i32, i32
  }
  func.func @transform_5(%arg0: i32) -> (i32, i32) {
    %c0_i32 = arith.constant 0 : i32
    %c0_i32_0 = arith.constant 0 : i32
    %c0_i32_1 = arith.constant 0 : i32
    return %c0_i32, %c0_i32_0 : i32, i32
  }
  func.func @transform_6(%arg0: i32) -> (i32, i32) {
    %c0_i32 = arith.constant 0 : i32
    %c0_i32_0 = arith.constant 0 : i32
    %c0_i32_1 = arith.constant 0 : i32
    return %c0_i32, %c0_i32_0 : i32, i32
  }
  func.func @transform_7(%arg0: i32) -> (i32, i32) {
    %c0_i32 = arith.constant 0 : i32
    %c0_i32_0 = arith.constant 0 : i32
    return %arg0, %c0_i32 : i32, i32
  }
}

</mosaic_0001>

<llo_original>
// kernel: cnn_forward.8
$region0: #{cnn_forward.8}
  #allocation0 [shape = 'u32[]', space=smem, size = 0x4, offset = 0x4, fixed_abs, tag = 'smem constant byte address 0x4 - core index']
  #allocation1 [shape = 'u32[144,128]{1,0:T(1,128)}', space=vmem, size = 0x12000, scoped, tag = 'internal scratch']
  %s0 = inlined_call_operand.vmem [shape: bf16[1376,128], index: 0, kind: input, shape index: {}]
  %s1 = inlined_call_operand.vmem [shape: bf16[128,128], index: 1, kind: input, shape index: {}]
  %s2 = inlined_call_operand.vmem [shape: f32[1,128], index: 2, kind: input, shape index: {}]
  %s3 = inlined_call_operand.vmem [shape: bf16[1376,128], index: 3, kind: output, shape index: {}]
  %s4 = sld [smem:[#allocation0]]
  $region45: #{cnn_forward.8} parent=0
    _
  %s6 = ssub.s32 1, %s4
  %s7 = scalar_select 0, %s6, %s4
  loop: start=0, step=1, limit=4
  $region2: #{cnn_forward.8} parent=0 // loop_pre_header
    _
  $region3: #{cnn_forward.8} parent=0 // loop_header
    %s9 = sphi 0, %s13
    %p10 = scmp.ge.s32.totalorder %s9, 4
    %s19 = sphi 0, %s21
    %s22 = sphi 0, %s19
    %s23 = sphi 0, %s22
    %s39 = sphi 0, %s23
    %s43 = sphi 0, %s43
    %s45 = sphi 0, %s43
    %s46 = sphi 0, %s45
    %s60 = sphi 0, %s46
    %s64 = sphi 0, %s64
    %s66 = sphi 0, %s64
    %s67 = sphi 0, %s66
    %s81 = sphi 0, %s67
    %s87 = sphi 0, %s89
    %s90 = sphi 0, %s87
    %s91 = sphi 0, %s90
    %s107 = sphi 0, %s91
  $region4: #{cnn_forward.8} parent=0 // loop_header_branch
    %12 = sbr.rel (%p10) target = $region8
  $region5: #{cnn_forward.8} parent=0 // loop_body
    %s14 = ssub.s32 %s9, 1
    %s15 = ssub.s32 %s9, 2
    %s16 = sadd.s32 %s9, 1
    %s17 = ssub.s32 %s9, %s16
    %p18 = scmp.eq.s32.totalorder %s17, 0
    %s20 = sadd.s32 %s19, 1
    %s21 = scalar_select %p18, %s19, %s20
    %p24 = pneg %p18
    %p25 = scmp.eq.s32.totalorder %s9, 1
    %p26 = por %p24, %p25
    %p27 = scmp.ne.s32.totalorder %s19, %s22
    %p28 = scmp.eq.s32.totalorder %s9, 0
    %p29 = por %p27, %p28
    %p30 = scmp.ne.s32.totalorder %s19, %s22
    %p31 = scmp.eq.s32.totalorder %s14, 1
    %p32 = por %p30, %p31
    %p33 = scmp.ne.s32.totalorder %s22, %s23
    %p34 = scmp.eq.s32.totalorder %s14, 0
    %p35 = por %p33, %p34
    %p36 = scmp.ne.s32.totalorder %s22, %s23
    %p37 = scmp.eq.s32.totalorder %s15, 1
    %p38 = por %p36, %p37
    %p40 = scmp.ne.s32.totalorder %s23, %s39
    %p41 = scmp.eq.s32.totalorder %s15, 0
    %p42 = por %p40, %p41
    %s44 = sadd.s32 %s43, 1
    %p47 = scmp.eq.s32.totalorder %s9, 1
    %p48 = scmp.ne.s32.totalorder %s43, %s45
    %p49 = scmp.eq.s32.totalorder %s9, 0
    %p50 = por %p48, %p49
    %p51 = scmp.ne.s32.totalorder %s43, %s45
    %p52 = scmp.eq.s32.totalorder %s14, 1
    %p53 = por %p51, %p52
    %p54 = scmp.ne.s32.totalorder %s45, %s46
    %p55 = scmp.eq.s32.totalorder %s14, 0
    %p56 = por %p54, %p55
    %p57 = scmp.ne.s32.totalorder %s45, %s46
    %p58 = scmp.eq.s32.totalorder %s15, 1
    %p59 = por %p57, %p58
    %p61 = scmp.ne.s32.totalorder %s46, %s60
    %p62 = scmp.eq.s32.totalorder %s15, 0
    %p63 = por %p61, %p62
    %s65 = sadd.s32 %s64, 1
    %p68 = scmp.eq.s32.totalorder %s9, 1
    %p69 = scmp.ne.s32.totalorder %s64, %s66
    %p70 = scmp.eq.s32.totalorder %s9, 0
    %p71 = por %p69, %p70
    %p72 = scmp.ne.s32.totalorder %s64, %s66
    %p73 = scmp.eq.s32.totalorder %s14, 1
    %p74 = por %p72, %p73
    %p75 = scmp.ne.s32.totalorder %s66, %s67
    %p76 = scmp.eq.s32.totalorder %s14, 0
    %p77 = por %p75, %p76
    %p78 = scmp.ne.s32.totalorder %s66, %s67
    %p79 = scmp.eq.s32.totalorder %s15, 1
    %p80 = por %p78, %p79
    %p82 = scmp.ne.s32.totalorder %s67, %s81
    %p83 = scmp.eq.s32.totalorder %s15, 0
    %p84 = por %p82, %p83
    %s85 = ssub.s32 %s9, %s16
    %p86 = scmp.eq.s32.totalorder %s85, 0
    %s88 = sadd.s32 %s87, 1
    %s89 = scalar_select %p86, %s87, %s88
    %p92 = pneg %p86
    %p93 = scmp.eq.s32.totalorder %s9, 1
    %p94 = por %p92, %p93
    %p95 = scmp.ne.s32.totalorder %s87, %s90
    %p96 = scmp.eq.s32.totalorder %s9, 0
    %p97 = por %p95, %p96
    %p98 = scmp.ne.s32.totalorder %s87, %s90
    %p99 = scmp.eq.s32.totalorder %s14, 1
    %p100 = por %p98, %p99
    %p101 = scmp.ne.s32.totalorder %s90, %s91
    %p102 = scmp.eq.s32.totalorder %s14, 0
    %p103 = por %p101, %p102
    %p104 = scmp.ne.s32.totalorder %s90, %s91
    %p105 = scmp.eq.s32.totalorder %s15, 1
    %p106 = por %p104, %p105
    %p108 = scmp.ne.s32.totalorder %s91, %s107
    %p109 = scmp.eq.s32.totalorder %s15, 0
    %p110 = por %p108, %p109
    %p111 = scmp.le.s32.totalorder 1, %s9
    %p112 = scmp.lt.s32.totalorder %s9, 3
    %p113 = pnand %p111, %p112
    %p114 = pneg %p113
    // Predicated region
    $region9: #{cnn_forward.8} parent=5 // pred_check
      _
    $region10: #{cnn_forward.8} parent=5 // pred_check_branch
      %116 = sbr.rel (%p113) target = $region12
    $region11: #{cnn_forward.8} parent=5 // pred_region
      %s117 = ssub.s32 %s9, 1
      // Predicated region
      $region13: #{cnn_forward.8} parent=11 // pred_check
        %p118 = pneg %p56
      $region14: #{cnn_forward.8} parent=11 // pred_check_branch
        %120 = sbr.rel (%p118) target = $region16
      $region15: #{cnn_forward.8} parent=11 // pred_region
        _
      $region16: #{cnn_forward.8} parent=11 // pred_fallthru
        _
      // Predicated region
      $region17: #{cnn_forward.8} parent=11 // pred_check
        %p121 = pneg %p77
      $region18: #{cnn_forward.8} parent=11 // pred_check_branch
        %123 = sbr.rel (%p121) target = $region20
      $region19: #{cnn_forward.8} parent=11 // pred_region
        _
      $region20: #{cnn_forward.8} parent=11 // pred_fallthru
        _
    $region12: #{cnn_forward.8} parent=5 // pred_fallthru
      _
    %p124 = scmp.lt.s32.totalorder %s9, 2
    // Predicated region
    $region21: #{cnn_forward.8} parent=5 // pred_check
      %p125 = pneg %p124
    $region22: #{cnn_forward.8} parent=5 // pred_check_branch
      %127 = sbr.rel (%p125) target = $region24
    $region23: #{cnn_forward.8} parent=5 // pred_region
      // Predicated region
      $region25: #{cnn_forward.8} parent=23 // pred_check
        %p128 = pneg %p29
      $region26: #{cnn_forward.8} parent=23 // pred_check_branch
        %130 = sbr.rel (%p128) target = $region28
      $region27: #{cnn_forward.8} parent=23 // pred_region
        %s131 = smul.u32 86, %s9
        %p132 = scmp.lt.s32.totalorder %s131, 171
        %s133 = scalar_select %p132, %s131, 171
        %s134 = smul.addr %s133, 4
        %s135 = scalar_lea.vmem %s0, %s134
        %s136 = smul.u32 86, %s9
      $region28: #{cnn_forward.8} parent=23 // pred_fallthru
        _
    $region24: #{cnn_forward.8} parent=5 // pred_fallthru
      _
    %p137 = scmp.le.s32.totalorder 1, %s9
    %p138 = scmp.lt.s32.totalorder %s9, 3
    %p139 = pnand %p137, %p138
    %p140 = pneg %p139
    // Predicated region
    $region29: #{cnn_forward.8} parent=5 // pred_check
      _
    $region30: #{cnn_forward.8} parent=5 // pred_check_branch
      %142 = sbr.rel (%p139) target = $region32
    $region31: #{cnn_forward.8} parent=5 // pred_region
      %s143 = ssub.s32 %s9, 1
      %s144 = smul.u32 86, %s14
      %p145 = scmp.lt.s32.totalorder %s144, 171
      %s146 = scalar_select %p145, %s144, 171
      %s147 = smul.addr %s146, 4
      %s148 = scalar_lea.vmem %s0, %s147
      %p149 = pneg %p35
      %p150 = pneg %p32
      %p151 = pneg %p56
      %p152 = pneg %p53
      %p153 = pneg %p77
      %p154 = pneg %p74
      %p155 = pneg %p103
      %p156 = pneg %p100
      %s157 = smul.u32 86, %s14
      %p158 = scmp.lt.s32.totalorder %s157, 171
      %s159 = scalar_select %p158, %s157, 171
      %s160 = smul.addr %s159, 4
      %s161 = scalar_lea.vmem %s3, %s160
      %s162 = smul.u32 86, %s14
      %p163 = scmp.lt.s32.totalorder %s162, 171
      %s164 = scalar_select %p163, %s162, 171
      %s165 = smul.addr %s164, 4
      %s166 = scalar_lea.vmem %s0, %s165
      %s167 = smul.u32 86, %s14
      %s168 = smul.u32 86, %s14
      %p169 = scmp.lt.s32.totalorder %s168, 171
      %s170 = scalar_select %p169, %s168, 171
      %s171 = smul.addr %s170, 4
      %s172 = scalar_lea.vmem %s3, %s171
      %s173 = smul.u32 86, %s14
      %v175 = vld [vmem:[%s166] sm:$0xf]
      %v176 = vld [vmem:[%s166 + $0x4] sm:$0xf]
      %v177 = vld [vmem:[%s166 + $0x8] sm:$0xf]
      %v178 = vld [vmem:[%s166 + $0xc] sm:$0xf]
      %v179 = vld [vmem:[%s166 + $0x10] sm:$0xf]
      %v180 = vld [vmem:[%s166 + $0x14] sm:$0xf]
      %v181 = vld [vmem:[%s166 + $0x18] sm:$0xf]
      %v182 = vld [vmem:[%s166 + $0x1c] sm:$0xf]
      %v183 = vld [vmem:[%s166 + $0x20] sm:$0xf]
      %v184 = vld [vmem:[%s166 + $0x24] sm:$0xf]
      %v185 = vld [vmem:[%s166 + $0x28] sm:$0xf]
      %v186 = vld [vmem:[%s166 + $0x2c] sm:$0xf]
      %v187 = vld [vmem:[%s166 + $0x30] sm:$0xf]
      %v188 = vld [vmem:[%s166 + $0x34] sm:$0xf]
      %v189 = vld [vmem:[%s166 + $0x38] sm:$0xf]
      %v190 = vld [vmem:[%s166 + $0x3c] sm:$0xf]
      %v191 = vld [vmem:[%s166 + $0x40] sm:$0xf]
      %v192 = vld [vmem:[%s166 + $0x44] sm:$0xf]
      %v193 = vld [vmem:[%s166 + $0x48] sm:$0xf]
      %v194 = vld [vmem:[%s166 + $0x4c] sm:$0xf]
      %v195 = vld [vmem:[%s166 + $0x50] sm:$0xf]
      %v196 = vld [vmem:[%s166 + $0x54] sm:$0xf]
      %v197 = vld [vmem:[%s166 + $0x58] sm:$0xf]
      %v198 = vld [vmem:[%s166 + $0x5c] sm:$0xf]
      %v199 = vld [vmem:[%s166 + $0x60] sm:$0xf]
      %v200 = vld [vmem:[%s166 + $0x64] sm:$0xf]
      %v201 = vld [vmem:[%s166 + $0x68] sm:$0xf]
      %v202 = vld [vmem:[%s166 + $0x6c] sm:$0xf]
      %v203 = vld [vmem:[%s166 + $0x70] sm:$0xf]
      %v204 = vld [vmem:[%s166 + $0x74] sm:$0xf]
      %v205 = vld [vmem:[%s166 + $0x78] sm:$0xf]
      %v206 = vld [vmem:[%s166 + $0x7c] sm:$0xf]
      %v207 = vld [vmem:[%s166 + $0x80] sm:$0xf]
      %v208 = vld [vmem:[%s166 + $0x84] sm:$0xf]
      %v209 = vld [vmem:[%s166 + $0x88] sm:$0xf]
      %v210 = vld [vmem:[%s166 + $0x8c] sm:$0xf]
      %v211 = vld [vmem:[%s166 + $0x90] sm:$0xf]
      %v212 = vld [vmem:[%s166 + $0x94] sm:$0xf]
      %v213 = vld [vmem:[%s166 + $0x98] sm:$0xf]
      %v214 = vld [vmem:[%s166 + $0x9c] sm:$0xf]
      %v215 = vld [vmem:[%s166 + $0xa0] sm:$0xf]
      %v216 = vld [vmem:[%s166 + $0xa4] sm:$0xf]
      %v217 = vld [vmem:[%s166 + $0xa8] sm:$0xf]
      %v218 = vld [vmem:[%s166 + $0xac] sm:$0xf]
      %v219 = vld [vmem:[%s166 + $0xb0] sm:$0xf]
      %v220 = vld [vmem:[%s166 + $0xb4] sm:$0xf]
      %v221 = vld [vmem:[%s166 + $0xb8] sm:$0xf]
      %v222 = vld [vmem:[%s166 + $0xbc] sm:$0xf]
      %v223 = vld [vmem:[%s166 + $0xc0] sm:$0xf]
      %v224 = vld [vmem:[%s166 + $0xc4] sm:$0xf]
      %v225 = vld [vmem:[%s166 + $0xc8] sm:$0xf]
      %v226 = vld [vmem:[%s166 + $0xcc] sm:$0xf]
      %v227 = vld [vmem:[%s166 + $0xd0] sm:$0xf]
      %v228 = vld [vmem:[%s166 + $0xd4] sm:$0xf]
      %v229 = vld [vmem:[%s166 + $0xd8] sm:$0xf]
      %v230 = vld [vmem:[%s166 + $0xdc] sm:$0xf]
      %v231 = vld [vmem:[%s166 + $0xe0] sm:$0xf]
      %v232 = vld [vmem:[%s166 + $0xe4] sm:$0xf]
      %v233 = vld [vmem:[%s166 + $0xe8] sm:$0xf]
      %v234 = vld [vmem:[%s166 + $0xec] sm:$0xf]
      %v235 = vld [vmem:[%s166 + $0xf0] sm:$0xf]
      %v236 = vld [vmem:[%s166 + $0xf4] sm:$0xf]
      %v237 = vld [vmem:[%s166 + $0xf8] sm:$0xf]
      %v238 = vld [vmem:[%s166 + $0xfc] sm:$0xf]
      %v239 = vld [vmem:[%s166 + $0x100] sm:$0xf]
      %v240 = vld [vmem:[%s166 + $0x104] sm:$0xf]
      %v241 = vld [vmem:[%s166 + $0x108] sm:$0xf]
      %v242 = vld [vmem:[%s166 + $0x10c] sm:$0xf]
      %v243 = vld [vmem:[%s166 + $0x110] sm:$0xf]
      %v244 = vld [vmem:[%s166 + $0x114] sm:$0xf]
      %v245 = vld [vmem:[%s166 + $0x118] sm:$0xf]
      %v246 = vld [vmem:[%s166 + $0x11c] sm:$0xf]
      %v247 = vld [vmem:[%s166 + $0x120] sm:$0xf]
      %v248 = vld [vmem:[%s166 + $0x124] sm:$0xf]
      %v249 = vld [vmem:[%s166 + $0x128] sm:$0xf]
      %v250 = vld [vmem:[%s166 + $0x12c] sm:$0xf]
      %v251 = vld [vmem:[%s166 + $0x130] sm:$0xf]
      %v252 = vld [vmem:[%s166 + $0x134] sm:$0xf]
      %v253 = vld [vmem:[%s166 + $0x138] sm:$0xf]
      %v254 = vld [vmem:[%s166 + $0x13c] sm:$0xf]
      %v255 = vld [vmem:[%s166 + $0x140] sm:$0xf]
      %v256 = vld [vmem:[%s166 + $0x144] sm:$0xf]
      %v257 = vld [vmem:[%s166 + $0x148] sm:$0xf]
      %v258 = vld [vmem:[%s166 + $0x14c] sm:$0xf]
      %v259 = vld [vmem:[%s166 + $0x150] sm:$0xf]
      %v260 = vld [vmem:[%s166 + $0x154] sm:$0xf]
      %v261 = vld [vmem:[%s1] sm:$0xf]
      %v262 = vld [vmem:[%s1 + $0x4] sm:$0xf]
      %v263 = vld [vmem:[%s1 + $0x8] sm:$0xf]
      %v264 = vld [vmem:[%s1 + $0xc] sm:$0xf]
      %v265 = vld [vmem:[%s1 + $0x10] sm:$0xf]
      %v266 = vld [vmem:[%s1 + $0x14] sm:$0xf]
      %v267 = vld [vmem:[%s1 + $0x18] sm:$0xf]
      %v268 = vld [vmem:[%s1 + $0x1c] sm:$0xf]
      %v269 = vld [vmem:[%s1 + $0x20] sm:$0xf]
      %v270 = vld [vmem:[%s1 + $0x24] sm:$0xf]
      %v271 = vld [vmem:[%s1 + $0x28] sm:$0xf]
      %v272 = vld [vmem:[%s1 + $0x2c] sm:$0xf]
      %v273 = vld [vmem:[%s1 + $0x30] sm:$0xf]
      %v274 = vld [vmem:[%s1 + $0x34] sm:$0xf]
      %v275 = vld [vmem:[%s1 + $0x38] sm:$0xf]
      %v276 = vld [vmem:[%s1 + $0x3c] sm:$0xf]
      %v277 = vld [vmem:[%s2] sm:$0x1]
      %v279 = vlaneseq
      %v280 = vshrl.u32 %v279, 7
      %v281 = vsub.s32 0, %v280
      %v282 = vrot.slane %v277, %v281
      %v370 = vunpack.c.l.b16 %v175
      %v371 = vunpack.c.l.b16 %v176
      %v372 = vunpack.c.l.b16 %v177
      %v373 = vunpack.c.l.b16 %v178
      %v374 = vunpack.c.l.b16 %v179
      %v375 = vunpack.c.l.b16 %v180
      %v376 = vunpack.c.l.b16 %v181
      %v377 = vunpack.c.l.b16 %v182
      %v378 = vunpack.c.l.b16 %v183
      %v379 = vunpack.c.l.b16 %v184
      %v380 = vunpack.c.l.b16 %v185
      %v381 = vunpack.c.l.b16 %v186
      %v382 = vunpack.c.l.b16 %v187
      %v383 = vunpack.c.l.b16 %v188
      %v384 = vunpack.c.l.b16 %v189
      %v385 = vunpack.c.l.b16 %v190
      %v386 = vunpack.c.l.b16 %v191
      %v387 = vunpack.c.l.b16 %v192
      %v388 = vunpack.c.l.b16 %v193
      %v389 = vunpack.c.l.b16 %v194
      %v390 = vunpack.c.l.b16 %v195
      %v391 = vunpack.c.l.b16 %v196
      %v392 = vunpack.c.l.b16 %v197
      %v393 = vunpack.c.l.b16 %v198
      %v394 = vunpack.c.l.b16 %v199
      %v395 = vunpack.c.l.b16 %v200
      %v396 = vunpack.c.l.b16 %v201
      %v397 = vunpack.c.l.b16 %v202
      %v398 = vunpack.c.l.b16 %v203
      %v399 = vunpack.c.l.b16 %v204
      %v400 = vunpack.c.l.b16 %v205
      %v401 = vunpack.c.l.b16 %v206
      %v402 = vunpack.c.l.b16 %v207
      %v403 = vunpack.c.l.b16 %v208
      %v404 = vunpack.c.l.b16 %v209
      %v405 = vunpack.c.l.b16 %v210
      %v406 = vunpack.c.l.b16 %v211
      %v407 = vunpack.c.l.b16 %v212
      %v408 = vunpack.c.l.b16 %v213
      %v409 = vunpack.c.l.b16 %v214
      %v410 = vunpack.c.l.b16 %v215
      %v411 = vunpack.c.l.b16 %v216
      %v412 = vunpack.c.l.b16 %v217
      %v413 = vunpack.c.l.b16 %v218
      %v414 = vunpack.c.l.b16 %v219
      %v415 = vunpack.c.l.b16 %v220
      %v416 = vunpack.c.l.b16 %v221
      %v417 = vunpack.c.l.b16 %v222
      %v418 = vunpack.c.l.b16 %v223
      %v419 = vunpack.c.l.b16 %v224
      %v420 = vunpack.c.l.b16 %v225
      %v421 = vunpack.c.l.b16 %v226
      %v422 = vunpack.c.l.b16 %v227
      %v423 = vunpack.c.l.b16 %v228
      %v424 = vunpack.c.l.b16 %v229
      %v425 = vunpack.c.l.b16 %v230
      %v426 = vunpack.c.l.b16 %v231
      %v427 = vunpack.c.l.b16 %v232
      %v428 = vunpack.c.l.b16 %v233
      %v429 = vunpack.c.l.b16 %v234
      %v430 = vunpack.c.l.b16 %v235
      %v431 = vunpack.c.l.b16 %v236
      %v432 = vunpack.c.l.b16 %v237
      %v433 = vunpack.c.l.b16 %v238
      %v434 = vunpack.c.l.b16 %v239
      %v435 = vunpack.c.l.b16 %v240
      %v436 = vunpack.c.l.b16 %v241
      %v437 = vunpack.c.l.b16 %v242
      %v438 = vunpack.c.l.b16 %v243
      %v439 = vunpack.c.l.b16 %v244
      %v440 = vunpack.c.l.b16 %v245
      %v441 = vunpack.c.l.b16 %v246
      %v442 = vunpack.c.l.b16 %v247
      %v443 = vunpack.c.l.b16 %v248
      %v444 = vunpack.c.l.b16 %v249
      %v445 = vunpack.c.l.b16 %v250
      %v446 = vunpack.c.l.b16 %v251
      %v447 = vunpack.c.l.b16 %v252
      %v448 = vunpack.c.l.b16 %v253
      %v449 = vunpack.c.l.b16 %v254
      %v450 = vunpack.c.l.b16 %v255
      %v451 = vunpack.c.l.b16 %v256
      %v452 = vunpack.c.l.b16 %v257
      %v453 = vunpack.c.l.b16 %v258
      %v454 = vunpack.c.l.b16 %v259
      %v455 = vunpack.c.l.b16 %v260
      %v456 = vpack.c.b16 %v371, %v370
      %v457 = vpack.c.b16 %v373, %v372
      %v458 = vpack.c.b16 %v375, %v374
      %v459 = vpack.c.b16 %v377, %v376
      %v460 = vpack.c.b16 %v379, %v378
      %v461 = vpack.c.b16 %v381, %v380
      %v462 = vpack.c.b16 %v383, %v382
      %v463 = vpack.c.b16 %v385, %v384
      %v464 = vpack.c.b16 %v387, %v386
      %v465 = vpack.c.b16 %v389, %v388
      %v466 = vpack.c.b16 %v391, %v390
      %v467 = vpack.c.b16 %v393, %v392
      %v468 = vpack.c.b16 %v395, %v394
      %v469 = vpack.c.b16 %v397, %v396
      %v470 = vpack.c.b16 %v399, %v398
      %v471 = vpack.c.b16 %v401, %v400
      %v472 = vpack.c.b16 %v403, %v402
      %v473 = vpack.c.b16 %v405, %v404
      %v474 = vpack.c.b16 %v407, %v406
      %v475 = vpack.c.b16 %v409, %v408
      %v476 = vpack.c.b16 %v411, %v410
      %v477 = vpack.c.b16 %v413, %v412
      %v478 = vpack.c.b16 %v415, %v414
      %v479 = vpack.c.b16 %v417, %v416
      %v480 = vpack.c.b16 %v419, %v418
      %v481 = vpack.c.b16 %v421, %v420
      %v482 = vpack.c.b16 %v423, %v422
      %v483 = vpack.c.b16 %v425, %v424
      %v484 = vpack.c.b16 %v427, %v426
      %v485 = vpack.c.b16 %v429, %v428
      %v486 = vpack.c.b16 %v431, %v430
      %v487 = vpack.c.b16 %v433, %v432
      %v488 = vpack.c.b16 %v435, %v434
      %v489 = vpack.c.b16 %v437, %v436
      %v490 = vpack.c.b16 %v439, %v438
      %v491 = vpack.c.b16 %v441, %v440
      %v492 = vpack.c.b16 %v443, %v442
      %v493 = vpack.c.b16 %v445, %v444
      %v494 = vpack.c.b16 %v447, %v446
      %v495 = vpack.c.b16 %v449, %v448
      %v496 = vpack.c.b16 %v451, %v450
      %v497 = vpack.c.b16 %v453, %v452
      %v498 = vpack.c.b16 %v455, %v454
      %v558 = vunpack.c.l.b16 %v261
      %v559 = vunpack.c.l.b16 %v262
      %v560 = vunpack.c.l.b16 %v263
      %v561 = vunpack.c.l.b16 %v264
      %v562 = vunpack.c.l.b16 %v265
      %v563 = vunpack.c.l.b16 %v266
      %v564 = vunpack.c.l.b16 %v267
      %v565 = vunpack.c.l.b16 %v268
      %v566 = vunpack.c.l.b16 %v269
      %v567 = vunpack.c.l.b16 %v270
      %v568 = vunpack.c.l.b16 %v271
      %v569 = vunpack.c.l.b16 %v272
      %v570 = vunpack.c.l.b16 %v273
      %v571 = vunpack.c.l.b16 %v274
      %v572 = vunpack.c.l.b16 %v275
      %v573 = vunpack.c.l.b16 %v276
      %v574 = vpack.c.b16 %v559, %v558
      %v575 = vpack.c.b16 %v561, %v560
      %v576 = vpack.c.b16 %v563, %v562
      %v577 = vpack.c.b16 %v565, %v564
      %v578 = vpack.c.b16 %v567, %v566
      %v579 = vpack.c.b16 %v569, %v568
      %v580 = vpack.c.b16 %v571, %v570
      %v581 = vpack.c.b16 %v573, %v572
      %590 = vmatprep.subr.bf16.mxu0 0
      %591 = vmatpush1.bf16.msra.mxu0 %v574
      %592 = vmatprep.subr.bf16.mxu0 0
      %593 = vmatpush1.bf16.msra.mxu0 %v575
      %594 = vmatprep.subr.bf16.mxu0 0
      %595 = vmatpush1.bf16.msra.mxu0 %v576
      %596 = vmatprep.subr.bf16.mxu0 0
      %597 = vmatpush1.bf16.msra.mxu0 %v577
      %598 = vmatprep.subr.bf16.mxu0 0
      %599 = vmatpush1.bf16.msra.mxu0 %v578
      %600 = vmatprep.subr.bf16.mxu0 0
      %601 = vmatpush1.bf16.msra.mxu0 %v579
      %602 = vmatprep.subr.bf16.mxu0 0
      %603 = vmatpush1.bf16.msra.mxu0 %v580
      %604 = vmatprep.subr.bf16.mxu0 0
      %605 = vmatpush1.bf16.msra.mxu0 %v581
      %606 = vmatprep.subr.bf16.mxu0 0
      %607 = vmatpush1.bf16.msra.mxu0 0
      %608 = vmatprep.subr.bf16.mxu0 0
      %609 = vmatpush1.bf16.msra.mxu0 0
      %610 = vmatprep.subr.bf16.mxu0 0
      %611 = vmatpush1.bf16.msra.mxu0 0
      %612 = vmatprep.subr.bf16.mxu0 0
      %613 = vmatpush1.bf16.msra.mxu0 0
      %614 = vmatprep.subr.bf16.mxu0 0
      %615 = vmatpush1.bf16.msra.mxu0 0
      %616 = vmatprep.subr.bf16.mxu0 0
      %617 = vmatpush1.bf16.msra.mxu0 0
      %618 = vmatprep.subr.bf16.mxu0 0
      %619 = vmatpush1.bf16.msra.mxu0 0
      %620 = vmatprep.subr.bf16.mxu0 0
      %621 = vmatpush1.bf16.msra.mxu0 0
      %622 = vmatprep.mubr.bf16.mxu0 0
      %623 = vmatmul.mubr.bf16.gmra.mrb[0].mxu0 %v456
      %v624 = vpop.f32.mrb[0].mxu0
      %v625 = vadd.f32 %v282, %v624
      %v626 = vpop.f32.mrb[0].mxu0
      %v627 = vpop.f32.mrb[0].mxu0
      %v628 = vadd.f32 %v282, %v627
      %v629 = vpop.f32.mrb[0].mxu0
      %630 = vmatprep.mubr.bf16.mxu0 0
      %631 = vmatmul.mubr.bf16.gmra.mrb[0].mxu0 %v457
      %v632 = vpop.f32.mrb[0].mxu0
      %v633 = vadd.f32 %v282, %v632
      %v634 = vpop.f32.mrb[0].mxu0
      %v635 = vpop.f32.mrb[0].mxu0
      %v636 = vadd.f32 %v282, %v635
      %v637 = vpop.f32.mrb[0].mxu0
      %638 = vmatprep.mubr.bf16.mxu0 0
      %639 = vmatmul.mubr.bf16.gmra.mrb[0].mxu0 %v458
      %v640 = vpop.f32.mrb[0].mxu0
      %v641 = vadd.f32 %v282, %v640
      %v642 = vpop.f32.mrb[0].mxu0
      %v643 = vpop.f32.mrb[0].mxu0
      %v644 = vadd.f32 %v282, %v643
      %v645 = vpop.f32.mrb[0].mxu0
      %646 = vmatprep.mubr.bf16.mxu0 0
      %647 = vmatmul.mubr.bf16.gmra.mrb[0].mxu0 %v459
      %v648 = vpop.f32.mrb[0].mxu0
      %v649 = vadd.f32 %v282, %v648
      %v650 = vpop.f32.mrb[0].mxu0
      %v651 = vpop.f32.mrb[0].mxu0
      %v652 = vadd.f32 %v282, %v651
      %v653 = vpop.f32.mrb[0].mxu0
      %654 = vmatprep.mubr.bf16.mxu0 0
      %655 = vmatmul.mubr.bf16.gmra.mrb[0].mxu0 %v460
      %v656 = vpop.f32.mrb[0].mxu0
      %v657 = vadd.f32 %v282, %v656
      %v658 = vpop.f32.mrb[0].mxu0
      %v659 = vpop.f32.mrb[0].mxu0
      %v660 = vadd.f32 %v282, %v659
      %v661 = vpop.f32.mrb[0].mxu0
      %662 = vmatprep.mubr.bf16.mxu0 0
      %663 = vmatmul.mubr.bf16.gmra.mrb[0].mxu0 %v461
      %v664 = vpop.f32.mrb[0].mxu0
      %v665 = vadd.f32 %v282, %v664
      %v666 = vpop.f32.mrb[0].mxu0
      %v667 = vpop.f32.mrb[0].mxu0
      %v668 = vadd.f32 %v282, %v667
      %v669 = vpop.f32.mrb[0].mxu0
      %670 = vmatprep.mubr.bf16.mxu0 0
      %671 = vmatmul.mubr.bf16.gmra.mrb[0].mxu0 %v462
      %v672 = vpop.f32.mrb[0].mxu0
      %v673 = vadd.f32 %v282, %v672
      %v674 = vpop.f32.mrb[0].mxu0
      %v675 = vpop.f32.mrb[0].mxu0
      %v676 = vadd.f32 %v282, %v675
      %v677 = vpop.f32.mrb[0].mxu0
      %678 = vmatprep.mubr.bf16.mxu0 0
      %679 = vmatmul.mubr.bf16.gmra.mrb[0].mxu0 %v463
      %v680 = vpop.f32.mrb[0].mxu0
      %v681 = vadd.f32 %v282, %v680
      %v682 = vpop.f32.mrb[0].mxu0
      %v683 = vpop.f32.mrb[0].mxu0
      %v684 = vadd.f32 %v282, %v683
      %v685 = vpop.f32.mrb[0].mxu0
      %686 = vmatprep.mubr.bf16.mxu0 0
      %687 = vmatmul.mubr.bf16.gmra.mrb[0].mxu0 %v464
      %v688 = vpop.f32.mrb[0].mxu0
      %v689 = vadd.f32 %v282, %v688
      %v690 = vpop.f32.mrb[0].mxu0
      %v691 = vpop.f32.mrb[0].mxu0
      %v692 = vadd.f32 %v282, %v691
      %v693 = vpop.f32.mrb[0].mxu0
      %694 = vmatprep.mubr.bf16.mxu0 0
      %695 = vmatmul.mubr.bf16.gmra.mrb[0].mxu0 %v465
      %v696 = vpop.f32.mrb[0].mxu0
      %v697 = vadd.f32 %v282, %v696
      %v698 = vpop.f32.mrb[0].mxu0
      %v699 = vpop.f32.mrb[0].mxu0
      %v700 = vadd.f32 %v282, %v699
      %v701 = vpop.f32.mrb[0].mxu0
      %702 = vmatprep.mubr.bf16.mxu0 0
      %703 = vmatmul.mubr.bf16.gmra.mrb[0].mxu0 %v466
      %v704 = vpop.f32.mrb[0].mxu0
      %v705 = vadd.f32 %v282, %v704
      %v706 = vpop.f32.mrb[0].mxu0
      %v707 = vpop.f32.mrb[0].mxu0
      %v708 = vadd.f32 %v282, %v707
      %v709 = vpop.f32.mrb[0].mxu0
      %710 = vmatprep.mubr.bf16.mxu0 0
      %711 = vmatmul.mubr.bf16.gmra.mrb[0].mxu0 %v467
      %v712 = vpop.f32.mrb[0].mxu0
      %v713 = vadd.f32 %v282, %v712
      %v714 = vpop.f32.mrb[0].mxu0
      %v715 = vpop.f32.mrb[0].mxu0
      %v716 = vadd.f32 %v282, %v715
      %v717 = vpop.f32.mrb[0].mxu0
      %718 = vmatprep.mubr.bf16.mxu0 0
      %719 = vmatmul.mubr.bf16.gmra.mrb[0].mxu0 %v468
      %v720 = vpop.f32.mrb[0].mxu0
      %v721 = vadd.f32 %v282, %v720
      %v722 = vpop.f32.mrb[0].mxu0
      %v723 = vpop.f32.mrb[0].mxu0
      %v724 = vadd.f32 %v282, %v723
      %v725 = vpop.f32.mrb[0].mxu0
      %726 = vmatprep.mubr.bf16.mxu0 0
      %727 = vmatmul.mubr.bf16.gmra.mrb[0].mxu0 %v469
      %v728 = vpop.f32.mrb[0].mxu0
      %v729 = vadd.f32 %v282, %v728
      %v730 = vpop.f32.mrb[0].mxu0
      %v731 = vpop.f32.mrb[0].mxu0
      %v732 = vadd.f32 %v282, %v731
      %v733 = vpop.f32.mrb[0].mxu0
      %734 = vmatprep.mubr.bf16.mxu0 0
      %735 = vmatmul.mubr.bf16.gmra.mrb[0].mxu0 %v470
      %v736 = vpop.f32.mrb[0].mxu0
      %v737 = vadd.f32 %v282, %v736
      %v738 = vpop.f32.mrb[0].mxu0
      %v739 = vpop.f32.mrb[0].mxu0
      %v740 = vadd.f32 %v282, %v739
      %v741 = vpop.f32.mrb[0].mxu0
      %742 = vmatprep.mubr.bf16.mxu0 0
      %743 = vmatmul.mubr.bf16.gmra.mrb[0].mxu0 %v471
      %v744 = vpop.f32.mrb[0].mxu0
      %v745 = vadd.f32 %v282, %v744
      %v746 = vpop.f32.mrb[0].mxu0
      %v747 = vpop.f32.mrb[0].mxu0
      %v748 = vadd.f32 %v282, %v747
      %v749 = vpop.f32.mrb[0].mxu0
      %750 = vmatprep.mubr.bf16.mxu0 0
      %751 = vmatmul.mubr.bf16.gmra.mrb[0].mxu0 %v472
      %v752 = vpop.f32.mrb[0].mxu0
      %v753 = vadd.f32 %v282, %v752
      %v754 = vpop.f32.mrb[0].mxu0
      %v755 = vpop.f32.mrb[0].mxu0
      %v756 = vadd.f32 %v282, %v755
      %v757 = vpop.f32.mrb[0].mxu0
      %758 = vmatprep.mubr.bf16.mxu0 0
      %759 = vmatmul.mubr.bf16.gmra.mrb[0].mxu0 %v473
      %v760 = vpop.f32.mrb[0].mxu0
      %v761 = vadd.f32 %v282, %v760
      %v762 = vpop.f32.mrb[0].mxu0
      %v763 = vpop.f32.mrb[0].mxu0
      %v764 = vadd.f32 %v282, %v763
      %v765 = vpop.f32.mrb[0].mxu0
      %766 = vmatprep.mubr.bf16.mxu0 0
      %767 = vmatmul.mubr.bf16.gmra.mrb[0].mxu0 %v474
      %v768 = vpop.f32.mrb[0].mxu0
      %v769 = vadd.f32 %v282, %v768
      %v770 = vpop.f32.mrb[0].mxu0
      %v771 = vpop.f32.mrb[0].mxu0
      %v772 = vadd.f32 %v282, %v771
      %v773 = vpop.f32.mrb[0].mxu0
      %774 = vmatprep.mubr.bf16.mxu0 0
      %775 = vmatmul.mubr.bf16.gmra.mrb[0].mxu0 %v475
      %v776 = vpop.f32.mrb[0].mxu0
      %v777 = vadd.f32 %v282, %v776
      %v778 = vpop.f32.mrb[0].mxu0
      %v779 = vpop.f32.mrb[0].mxu0
      %v780 = vadd.f32 %v282, %v779
      %v781 = vpop.f32.mrb[0].mxu0
      %782 = vmatprep.mubr.bf16.mxu0 0
      %783 = vmatmul.mubr.bf16.gmra.mrb[0].mxu0 %v476
      %v784 = vpop.f32.mrb[0].mxu0
      %v785 = vadd.f32 %v282, %v784
      %v786 = vpop.f32.mrb[0].mxu0
      %v787 = vpop.f32.mrb[0].mxu0
      %v788 = vadd.f32 %v282, %v787
      %v789 = vpop.f32.mrb[0].mxu0
      %790 = vmatprep.mubr.bf16.mxu0 0
      %791 = vmatmul.mubr.bf16.gmra.mrb[0].mxu0 %v477
      %v792 = vpop.f32.mrb[0].mxu0
      %v793 = vadd.f32 %v282, %v792
      %v794 = vpop.f32.mrb[0].mxu0
      %v795 = vpop.f32.mrb[0].mxu0
      %v796 = vadd.f32 %v282, %v795
      %v797 = vpop.f32.mrb[0].mxu0
      %798 = vmatprep.mubr.bf16.mxu0 0
      %799 = vmatmul.mubr.bf16.gmra.mrb[0].mxu0 %v478
      %v800 = vpop.f32.mrb[0].mxu0
      %v801 = vadd.f32 %v282, %v800
      %v802 = vpop.f32.mrb[0].mxu0
      %v803 = vpop.f32.mrb[0].mxu0
      %v804 = vadd.f32 %v282, %v803
      %v805 = vpop.f32.mrb[0].mxu0
      %806 = vmatprep.mubr.bf16.mxu0 0
      %807 = vmatmul.mubr.bf16.gmra.mrb[0].mxu0 %v479
      %v808 = vpop.f32.mrb[0].mxu0
      %v809 = vadd.f32 %v282, %v808
      %v810 = vpop.f32.mrb[0].mxu0
      %v811 = vpop.f32.mrb[0].mxu0
      %v812 = vadd.f32 %v282, %v811
      %v813 = vpop.f32.mrb[0].mxu0
      %814 = vmatprep.mubr.bf16.mxu0 0
      %815 = vmatmul.mubr.bf16.gmra.mrb[0].mxu0 %v480
      %v816 = vpop.f32.mrb[0].mxu0
      %v817 = vadd.f32 %v282, %v816
      %v818 = vpop.f32.mrb[0].mxu0
      %v819 = vpop.f32.mrb[0].mxu0
      %v820 = vadd.f32 %v282, %v819
      %v821 = vpop.f32.mrb[0].mxu0
      %822 = vmatprep.mubr.bf16.mxu0 0
      %823 = vmatmul.mubr.bf16.gmra.mrb[0].mxu0 %v481
      %v824 = vpop.f32.mrb[0].mxu0
      %v825 = vadd.f32 %v282, %v824
      %v826 = vpop.f32.mrb[0].mxu0
      %v827 = vpop.f32.mrb[0].mxu0
      %v828 = vadd.f32 %v282, %v827
      %v829 = vpop.f32.mrb[0].mxu0
      %830 = vmatprep.mubr.bf16.mxu0 0
      %831 = vmatmul.mubr.bf16.gmra.mrb[0].mxu0 %v482
      %v832 = vpop.f32.mrb[0].mxu0
      %v833 = vadd.f32 %v282, %v832
      %v834 = vpop.f32.mrb[0].mxu0
      %v835 = vpop.f32.mrb[0].mxu0
      %v836 = vadd.f32 %v282, %v835
      %v837 = vpop.f32.mrb[0].mxu0
      %838 = vmatprep.mubr.bf16.mxu0 0
      %839 = vmatmul.mubr.bf16.gmra.mrb[0].mxu0 %v483
      %v840 = vpop.f32.mrb[0].mxu0
      %v841 = vadd.f32 %v282, %v840
      %v842 = vpop.f32.mrb[0].mxu0
      %v843 = vpop.f32.mrb[0].mxu0
      %v844 = vadd.f32 %v282, %v843
      %v845 = vpop.f32.mrb[0].mxu0
      %846 = vmatprep.mubr.bf16.mxu0 0
      %847 = vmatmul.mubr.bf16.gmra.mrb[0].mxu0 %v484
      %v848 = vpop.f32.mrb[0].mxu0
      %v849 = vadd.f32 %v282, %v848
      %v850 = vpop.f32.mrb[0].mxu0
      %v851 = vpop.f32.mrb[0].mxu0
      %v852 = vadd.f32 %v282, %v851
      %v853 = vpop.f32.mrb[0].mxu0
      %854 = vmatprep.mubr.bf16.mxu0 0
      %855 = vmatmul.mubr.bf16.gmra.mrb[0].mxu0 %v485
      %v856 = vpop.f32.mrb[0].mxu0
      %v857 = vadd.f32 %v282, %v856
      %v858 = vpop.f32.mrb[0].mxu0
      %v859 = vpop.f32.mrb[0].mxu0
      %v860 = vadd.f32 %v282, %v859
      %v861 = vpop.f32.mrb[0].mxu0
      %862 = vmatprep.mubr.bf16.mxu0 0
      %863 = vmatmul.mubr.bf16.gmra.mrb[0].mxu0 %v486
      %v864 = vpop.f32.mrb[0].mxu0
      %v865 = vadd.f32 %v282, %v864
      %v866 = vpop.f32.mrb[0].mxu0
      %v867 = vpop.f32.mrb[0].mxu0
      %v868 = vadd.f32 %v282, %v867
      %v869 = vpop.f32.mrb[0].mxu0
      %870 = vmatprep.mubr.bf16.mxu0 0
      %871 = vmatmul.mubr.bf16.gmra.mrb[0].mxu0 %v487
      %v872 = vpop.f32.mrb[0].mxu0
      %v873 = vadd.f32 %v282, %v872
      %v874 = vpop.f32.mrb[0].mxu0
      %v875 = vpop.f32.mrb[0].mxu0
      %v876 = vadd.f32 %v282, %v875
      %v877 = vpop.f32.mrb[0].mxu0
      %878 = vmatprep.mubr.bf16.mxu0 0
      %879 = vmatmul.mubr.bf16.gmra.mrb[0].mxu0 %v488
      %v880 = vpop.f32.mrb[0].mxu0
      %v881 = vadd.f32 %v282, %v880
      %v882 = vpop.f32.mrb[0].mxu0
      %v883 = vpop.f32.mrb[0].mxu0
      %v884 = vadd.f32 %v282, %v883
      %v885 = vpop.f32.mrb[0].mxu0
      %886 = vmatprep.mubr.bf16.mxu0 0
      %887 = vmatmul.mubr.bf16.gmra.mrb[0].mxu0 %v489
      %v888 = vpop.f32.mrb[0].mxu0
      %v889 = vadd.f32 %v282, %v888
      %v890 = vpop.f32.mrb[0].mxu0
      %v891 = vpop.f32.mrb[0].mxu0
      %v892 = vadd.f32 %v282, %v891
      %v893 = vpop.f32.mrb[0].mxu0
      %894 = vmatprep.mubr.bf16.mxu0 0
      %895 = vmatmul.mubr.bf16.gmra.mrb[0].mxu0 %v490
      %v896 = vpop.f32.mrb[0].mxu0
      %v897 = vadd.f32 %v282, %v896
      %v898 = vpop.f32.mrb[0].mxu0
      %v899 = vpop.f32.mrb[0].mxu0
      %v900 = vadd.f32 %v282, %v899
      %v901 = vpop.f32.mrb[0].mxu0
      %902 = vmatprep.mubr.bf16.mxu0 0
      %903 = vmatmul.mubr.bf16.gmra.mrb[0].mxu0 %v491
      %v904 = vpop.f32.mrb[0].mxu0
      %v905 = vadd.f32 %v282, %v904
      %v906 = vpop.f32.mrb[0].mxu0
      %v907 = vpop.f32.mrb[0].mxu0
      %v908 = vadd.f32 %v282, %v907
      %v909 = vpop.f32.mrb[0].mxu0
      %910 = vmatprep.mubr.bf16.mxu0 0
      %911 = vmatmul.mubr.bf16.gmra.mrb[0].mxu0 %v492
      %v912 = vpop.f32.mrb[0].mxu0
      %v913 = vadd.f32 %v282, %v912
      %v914 = vpop.f32.mrb[0].mxu0
      %v915 = vpop.f32.mrb[0].mxu0
      %v916 = vadd.f32 %v282, %v915
      %v917 = vpop.f32.mrb[0].mxu0
      %918 = vmatprep.mubr.bf16.mxu0 0
      %919 = vmatmul.mubr.bf16.gmra.mrb[0].mxu0 %v493
      %v920 = vpop.f32.mrb[0].mxu0
      %v921 = vadd.f32 %v282, %v920
      %v922 = vpop.f32.mrb[0].mxu0
      %v923 = vpop.f32.mrb[0].mxu0
      %v924 = vadd.f32 %v282, %v923
      %v925 = vpop.f32.mrb[0].mxu0
      %926 = vmatprep.mubr.bf16.mxu0 0
      %927 = vmatmul.mubr.bf16.gmra.mrb[0].mxu0 %v494
      %v928 = vpop.f32.mrb[0].mxu0
      %v929 = vadd.f32 %v282, %v928
      %v930 = vpop.f32.mrb[0].mxu0
      %v931 = vpop.f32.mrb[0].mxu0
      %v932 = vadd.f32 %v282, %v931
      %v933 = vpop.f32.mrb[0].mxu0
      %934 = vmatprep.mubr.bf16.mxu0 0
      %935 = vmatmul.mubr.bf16.gmra.mrb[0].mxu0 %v495
      %v936 = vpop.f32.mrb[0].mxu0
      %v937 = vadd.f32 %v282, %v936
      %v938 = vpop.f32.mrb[0].mxu0
      %v939 = vpop.f32.mrb[0].mxu0
      %v940 = vadd.f32 %v282, %v939
      %v941 = vpop.f32.mrb[0].mxu0
      %942 = vmatprep.mubr.bf16.mxu0 0
      %943 = vmatmul.mubr.bf16.gmra.mrb[0].mxu0 %v496
      %v944 = vpop.f32.mrb[0].mxu0
      %v945 = vadd.f32 %v282, %v944
      %v946 = vpop.f32.mrb[0].mxu0
      %v947 = vpop.f32.mrb[0].mxu0
      %v948 = vadd.f32 %v282, %v947
      %v949 = vpop.f32.mrb[0].mxu0
      %950 = vmatprep.mubr.bf16.mxu0 0
      %951 = vmatmul.mubr.bf16.gmra.mrb[0].mxu0 %v497
      %v952 = vpop.f32.mrb[0].mxu0
      %v953 = vadd.f32 %v282, %v952
      %v954 = vpop.f32.mrb[0].mxu0
      %v955 = vpop.f32.mrb[0].mxu0
      %v956 = vadd.f32 %v282, %v955
      %v957 = vpop.f32.mrb[0].mxu0
      %958 = vmatprep.mubr.bf16.mxu0 0
      %959 = vmatmul.mubr.bf16.gmra.mrb[0].mxu0 %v498
      %v960 = vpop.f32.mrb[0].mxu0
      %v961 = vadd.f32 %v282, %v960
      %v962 = vpop.f32.mrb[0].mxu0
      %v963 = vpop.f32.mrb[0].mxu0
      %v964 = vadd.f32 %v282, %v963
      %v965 = vpop.f32.mrb[0].mxu0
      %966 = vdwg.mxu0
      %v967 = vmax.f32 %v625, 0.0
      %v968 = vmax.f32 %v628, 0.0
      %v969 = vmax.f32 %v633, 0.0
      %v970 = vmax.f32 %v636, 0.0
      %v971 = vmax.f32 %v641, 0.0
      %v972 = vmax.f32 %v644, 0.0
      %v973 = vmax.f32 %v649, 0.0
      %v974 = vmax.f32 %v652, 0.0
      %v975 = vmax.f32 %v657, 0.0
      %v976 = vmax.f32 %v660, 0.0
      %v977 = vmax.f32 %v665, 0.0
      %v978 = vmax.f32 %v668, 0.0
      %v979 = vmax.f32 %v673, 0.0
      %v980 = vmax.f32 %v676, 0.0
      %v981 = vmax.f32 %v681, 0.0
      %v982 = vmax.f32 %v684, 0.0
      %v983 = vmax.f32 %v689, 0.0
      %v984 = vmax.f32 %v692, 0.0
      %v985 = vmax.f32 %v697, 0.0
      %v986 = vmax.f32 %v700, 0.0
      %v987 = vmax.f32 %v705, 0.0
      %v988 = vmax.f32 %v708, 0.0
      %v989 = vmax.f32 %v713, 0.0
      %v990 = vmax.f32 %v716, 0.0
      %v991 = vmax.f32 %v721, 0.0
      %v992 = vmax.f32 %v724, 0.0
      %v993 = vmax.f32 %v729, 0.0
      %v994 = vmax.f32 %v732, 0.0
      %v995 = vmax.f32 %v737, 0.0
      %v996 = vmax.f32 %v740, 0.0
      %v997 = vmax.f32 %v745, 0.0
      %v998 = vmax.f32 %v748, 0.0
      %v999 = vmax.f32 %v753, 0.0
      %v1000 = vmax.f32 %v756, 0.0
      %v1001 = vmax.f32 %v761, 0.0
      %v1002 = vmax.f32 %v764, 0.0
      %v1003 = vmax.f32 %v769, 0.0
      %v1004 = vmax.f32 %v772, 0.0
      %v1005 = vmax.f32 %v777, 0.0
      %v1006 = vmax.f32 %v780, 0.0
      %v1007 = vmax.f32 %v785, 0.0
      %v1008 = vmax.f32 %v788, 0.0
      %v1009 = vmax.f32 %v793, 0.0
      %v1010 = vmax.f32 %v796, 0.0
      %v1011 = vmax.f32 %v801, 0.0
      %v1012 = vmax.f32 %v804, 0.0
      %v1013 = vmax.f32 %v809, 0.0
      %v1014 = vmax.f32 %v812, 0.0
      %v1015 = vmax.f32 %v817, 0.0
      %v1016 = vmax.f32 %v820, 0.0
      %v1017 = vmax.f32 %v825, 0.0
      %v1018 = vmax.f32 %v828, 0.0
      %v1019 = vmax.f32 %v833, 0.0
      %v1020 = vmax.f32 %v836, 0.0
      %v1021 = vmax.f32 %v841, 0.0
      %v1022 = vmax.f32 %v844, 0.0
      %v1023 = vmax.f32 %v849, 0.0
      %v1024 = vmax.f32 %v852, 0.0
      %v1025 = vmax.f32 %v857, 0.0
      %v1026 = vmax.f32 %v860, 0.0
      %v1027 = vmax.f32 %v865, 0.0
      %v1028 = vmax.f32 %v868, 0.0
      %v1029 = vmax.f32 %v873, 0.0
      %v1030 = vmax.f32 %v876, 0.0
      %v1031 = vmax.f32 %v881, 0.0
      %v1032 = vmax.f32 %v884, 0.0
      %v1033 = vmax.f32 %v889, 0.0
      %v1034 = vmax.f32 %v892, 0.0
      %v1035 = vmax.f32 %v897, 0.0
      %v1036 = vmax.f32 %v900, 0.0
      %v1037 = vmax.f32 %v905, 0.0
      %v1038 = vmax.f32 %v908, 0.0
      %v1039 = vmax.f32 %v913, 0.0
      %v1040 = vmax.f32 %v916, 0.0
      %v1041 = vmax.f32 %v921, 0.0
      %v1042 = vmax.f32 %v924, 0.0
      %v1043 = vmax.f32 %v929, 0.0
      %v1044 = vmax.f32 %v932, 0.0
      %v1045 = vmax.f32 %v937, 0.0
      %v1046 = vmax.f32 %v940, 0.0
      %v1047 = vmax.f32 %v945, 0.0
      %v1048 = vmax.f32 %v948, 0.0
      %v1049 = vmax.f32 %v953, 0.0
      %v1050 = vmax.f32 %v956, 0.0
      %v1051 = vmax.f32 %v961, 0.0
      %v1052 = vmax.f32 %v964, 0.0
      %v1053 = vpack.c.bf16 %v968, %v967
      %v1054 = vpack.c.bf16 %v970, %v969
      %v1055 = vpack.c.bf16 %v972, %v971
      %v1056 = vpack.c.bf16 %v974, %v973
      %v1057 = vpack.c.bf16 %v976, %v975
      %v1058 = vpack.c.bf16 %v978, %v977
      %v1059 = vpack.c.bf16 %v980, %v979
      %v1060 = vpack.c.bf16 %v982, %v981
      %v1061 = vpack.c.bf16 %v984, %v983
      %v1062 = vpack.c.bf16 %v986, %v985
      %v1063 = vpack.c.bf16 %v988, %v987
      %v1064 = vpack.c.bf16 %v990, %v989
      %v1065 = vpack.c.bf16 %v992, %v991
      %v1066 = vpack.c.bf16 %v994, %v993
      %v1067 = vpack.c.bf16 %v996, %v995
      %v1068 = vpack.c.bf16 %v998, %v997
      %v1069 = vpack.c.bf16 %v1000, %v999
      %v1070 = vpack.c.bf16 %v1002, %v1001
      %v1071 = vpack.c.bf16 %v1004, %v1003
      %v1072 = vpack.c.bf16 %v1006, %v1005
      %v1073 = vpack.c.bf16 %v1008, %v1007
      %v1074 = vpack.c.bf16 %v1010, %v1009
      %v1075 = vpack.c.bf16 %v1012, %v1011
      %v1076 = vpack.c.bf16 %v1014, %v1013
      %v1077 = vpack.c.bf16 %v1016, %v1015
      %v1078 = vpack.c.bf16 %v1018, %v1017
      %v1079 = vpack.c.bf16 %v1020, %v1019
      %v1080 = vpack.c.bf16 %v1022, %v1021
      %v1081 = vpack.c.bf16 %v1024, %v1023
      %v1082 = vpack.c.bf16 %v1026, %v1025
      %v1083 = vpack.c.bf16 %v1028, %v1027
      %v1084 = vpack.c.bf16 %v1030, %v1029
      %v1085 = vpack.c.bf16 %v1032, %v1031
      %v1086 = vpack.c.bf16 %v1034, %v1033
      %v1087 = vpack.c.bf16 %v1036, %v1035
      %v1088 = vpack.c.bf16 %v1038, %v1037
      %v1089 = vpack.c.bf16 %v1040, %v1039
      %v1090 = vpack.c.bf16 %v1042, %v1041
      %v1091 = vpack.c.bf16 %v1044, %v1043
      %v1092 = vpack.c.bf16 %v1046, %v1045
      %v1093 = vpack.c.bf16 %v1048, %v1047
      %v1094 = vpack.c.bf16 %v1050, %v1049
      %v1095 = vpack.c.bf16 %v1052, %v1051
      %v1139 = vunpack.c.l.b16 %v1053
      %v1140 = vunpack.c.h.b16 %v1053
      %v1141 = vunpack.c.l.b16 %v1054
      %v1142 = vunpack.c.h.b16 %v1054
      %v1143 = vunpack.c.l.b16 %v1055
      %v1144 = vunpack.c.h.b16 %v1055
      %v1145 = vunpack.c.l.b16 %v1056
      %v1146 = vunpack.c.h.b16 %v1056
      %v1147 = vunpack.c.l.b16 %v1057
      %v1148 = vunpack.c.h.b16 %v1057
      %v1149 = vunpack.c.l.b16 %v1058
      %v1150 = vunpack.c.h.b16 %v1058
      %v1151 = vunpack.c.l.b16 %v1059
      %v1152 = vunpack.c.h.b16 %v1059
      %v1153 = vunpack.c.l.b16 %v1060
      %v1154 = vunpack.c.h.b16 %v1060
      %v1155 = vunpack.c.l.b16 %v1061
      %v1156 = vunpack.c.h.b16 %v1061
      %v1157 = vunpack.c.l.b16 %v1062
      %v1158 = vunpack.c.h.b16 %v1062
      %v1159 = vunpack.c.l.b16 %v1063
      %v1160 = vunpack.c.h.b16 %v1063
      %v1161 = vunpack.c.l.b16 %v1064
      %v1162 = vunpack.c.h.b16 %v1064
      %v1163 = vunpack.c.l.b16 %v1065
      %v1164 = vunpack.c.h.b16 %v1065
      %v1165 = vunpack.c.l.b16 %v1066
      %v1166 = vunpack.c.h.b16 %v1066
      %v1167 = vunpack.c.l.b16 %v1067
      %v1168 = vunpack.c.h.b16 %v1067
      %v1169 = vunpack.c.l.b16 %v1068
      %v1170 = vunpack.c.h.b16 %v1068
      %v1171 = vunpack.c.l.b16 %v1069
      %v1172 = vunpack.c.h.b16 %v1069
      %v1173 = vunpack.c.l.b16 %v1070
      %v1174 = vunpack.c.h.b16 %v1070
      %v1175 = vunpack.c.l.b16 %v1071
      %v1176 = vunpack.c.h.b16 %v1071
      %v1177 = vunpack.c.l.b16 %v1072
      %v1178 = vunpack.c.h.b16 %v1072
      %v1179 = vunpack.c.l.b16 %v1073
      %v1180 = vunpack.c.h.b16 %v1073
      %v1181 = vunpack.c.l.b16 %v1074
      %v1182 = vunpack.c.h.b16 %v1074
      %v1183 = vunpack.c.l.b16 %v1075
      %v1184 = vunpack.c.h.b16 %v1075
      %v1185 = vunpack.c.l.b16 %v1076
      %v1186 = vunpack.c.h.b16 %v1076
      %v1187 = vunpack.c.l.b16 %v1077
      %v1188 = vunpack.c.h.b16 %v1077
      %v1189 = vunpack.c.l.b16 %v1078
      %v1190 = vunpack.c.h.b16 %v1078
      %v1191 = vunpack.c.l.b16 %v1079
      %v1192 = vunpack.c.h.b16 %v1079
      %v1193 = vunpack.c.l.b16 %v1080
      %v1194 = vunpack.c.h.b16 %v1080
      %v1195 = vunpack.c.l.b16 %v1081
      %v1196 = vunpack.c.h.b16 %v1081
      %v1197 = vunpack.c.l.b16 %v1082
      %v1198 = vunpack.c.h.b16 %v1082
      %v1199 = vunpack.c.l.b16 %v1083
      %v1200 = vunpack.c.h.b16 %v1083
      %v1201 = vunpack.c.l.b16 %v1084
      %v1202 = vunpack.c.h.b16 %v1084
      %v1203 = vunpack.c.l.b16 %v1085
      %v1204 = vunpack.c.h.b16 %v1085
      %v1205 = vunpack.c.l.b16 %v1086
      %v1206 = vunpack.c.h.b16 %v1086
      %v1207 = vunpack.c.l.b16 %v1087
      %v1208 = vunpack.c.h.b16 %v1087
      %v1209 = vunpack.c.l.b16 %v1088
      %v1210 = vunpack.c.h.b16 %v1088
      %v1211 = vunpack.c.l.b16 %v1089
      %v1212 = vunpack.c.h.b16 %v1089
      %v1213 = vunpack.c.l.b16 %v1090
      %v1214 = vunpack.c.h.b16 %v1090
      %v1215 = vunpack.c.l.b16 %v1091
      %v1216 = vunpack.c.h.b16 %v1091
      %v1217 = vunpack.c.l.b16 %v1092
      %v1218 = vunpack.c.h.b16 %v1092
      %v1219 = vunpack.c.l.b16 %v1093
      %v1220 = vunpack.c.h.b16 %v1093
      %v1221 = vunpack.c.l.b16 %v1094
      %v1222 = vunpack.c.h.b16 %v1094
      %v1223 = vunpack.c.l.b16 %v1095
      %v1224 = vunpack.c.h.b16 %v1095
      %v1225 = vpack.c.b16 %v1139, %v1139
      %v1226 = vpack.c.b16 %v1140, %v1140
      %v1227 = vpack.c.b16 %v1141, %v1141
      %v1228 = vpack.c.b16 %v1142, %v1142
      %v1229 = vpack.c.b16 %v1143, %v1143
      %v1230 = vpack.c.b16 %v1144, %v1144
      %v1231 = vpack.c.b16 %v1145, %v1145
      %v1232 = vpack.c.b16 %v1146, %v1146
      %v1233 = vpack.c.b16 %v1147, %v1147
      %v1234 = vpack.c.b16 %v1148, %v1148
      %v1235 = vpack.c.b16 %v1149, %v1149
      %v1236 = vpack.c.b16 %v1150, %v1150
      %v1237 = vpack.c.b16 %v1151, %v1151
      %v1238 = vpack.c.b16 %v1152, %v1152
      %v1239 = vpack.c.b16 %v1153, %v1153
      %v1240 = vpack.c.b16 %v1154, %v1154
      %v1241 = vpack.c.b16 %v1155, %v1155
      %v1242 = vpack.c.b16 %v1156, %v1156
      %v1243 = vpack.c.b16 %v1157, %v1157
      %v1244 = vpack.c.b16 %v1158, %v1158
      %v1245 = vpack.c.b16 %v1159, %v1159
      %v1246 = vpack.c.b16 %v1160, %v1160
      %v1247 = vpack.c.b16 %v1161, %v1161
      %v1248 = vpack.c.b16 %v1162, %v1162
      %v1249 = vpack.c.b16 %v1163, %v1163
      %v1250 = vpack.c.b16 %v1164, %v1164
      %v1251 = vpack.c.b16 %v1165, %v1165
      %v1252 = vpack.c.b16 %v1166, %v1166
      %v1253 = vpack.c.b16 %v1167, %v1167
      %v1254 = vpack.c.b16 %v1168, %v1168
      %v1255 = vpack.c.b16 %v1169, %v1169
      %v1256 = vpack.c.b16 %v1170, %v1170
      %v1257 = vpack.c.b16 %v1171, %v1171
      %v1258 = vpack.c.b16 %v1172, %v1172
      %v1259 = vpack.c.b16 %v1173, %v1173
      %v1260 = vpack.c.b16 %v1174, %v1174
      %v1261 = vpack.c.b16 %v1175, %v1175
      %v1262 = vpack.c.b16 %v1176, %v1176
      %v1263 = vpack.c.b16 %v1177, %v1177
      %v1264 = vpack.c.b16 %v1178, %v1178
      %v1265 = vpack.c.b16 %v1179, %v1179
      %v1266 = vpack.c.b16 %v1180, %v1180
      %v1267 = vpack.c.b16 %v1181, %v1181
      %v1268 = vpack.c.b16 %v1182, %v1182
      %v1269 = vpack.c.b16 %v1183, %v1183
      %v1270 = vpack.c.b16 %v1184, %v1184
      %v1271 = vpack.c.b16 %v1185, %v1185
      %v1272 = vpack.c.b16 %v1186, %v1186
      %v1273 = vpack.c.b16 %v1187, %v1187
      %v1274 = vpack.c.b16 %v1188, %v1188
      %v1275 = vpack.c.b16 %v1189, %v1189
      %v1276 = vpack.c.b16 %v1190, %v1190
      %v1277 = vpack.c.b16 %v1191, %v1191
      %v1278 = vpack.c.b16 %v1192, %v1192
      %v1279 = vpack.c.b16 %v1193, %v1193
      %v1280 = vpack.c.b16 %v1194, %v1194
      %v1281 = vpack.c.b16 %v1195, %v1195
      %v1282 = vpack.c.b16 %v1196, %v1196
      %v1283 = vpack.c.b16 %v1197, %v1197
      %v1284 = vpack.c.b16 %v1198, %v1198
      %v1285 = vpack.c.b16 %v1199, %v1199
      %v1286 = vpack.c.b16 %v1200, %v1200
      %v1287 = vpack.c.b16 %v1201, %v1201
      %v1288 = vpack.c.b16 %v1202, %v1202
      %v1289 = vpack.c.b16 %v1203, %v1203
      %v1290 = vpack.c.b16 %v1204, %v1204
      %v1291 = vpack.c.b16 %v1205, %v1205
      %v1292 = vpack.c.b16 %v1206, %v1206
      %v1293 = vpack.c.b16 %v1207, %v1207
      %v1294 = vpack.c.b16 %v1208, %v1208
      %v1295 = vpack.c.b16 %v1209, %v1209
      %v1296 = vpack.c.b16 %v1210, %v1210
      %v1297 = vpack.c.b16 %v1211, %v1211
      %v1298 = vpack.c.b16 %v1212, %v1212
      %v1299 = vpack.c.b16 %v1213, %v1213
      %v1300 = vpack.c.b16 %v1214, %v1214
      %v1301 = vpack.c.b16 %v1215, %v1215
      %v1302 = vpack.c.b16 %v1216, %v1216
      %v1303 = vpack.c.b16 %v1217, %v1217
      %v1304 = vpack.c.b16 %v1218, %v1218
      %v1305 = vpack.c.b16 %v1219, %v1219
      %v1306 = vpack.c.b16 %v1220, %v1220
      %v1307 = vpack.c.b16 %v1221, %v1221
      %v1308 = vpack.c.b16 %v1222, %v1222
      %v1309 = vpack.c.b16 %v1223, %v1223
      %v1310 = vpack.c.b16 %v1224, %v1224
      %1397 = vst [vmem:[%s172] sm:$0xf] %v1225
      %1398 = vst [vmem:[%s172 + $0x4] sm:$0xf] %v1226
      %1399 = vst [vmem:[%s172 + $0x8] sm:$0xf] %v1227
      %1400 = vst [vmem:[%s172 + $0xc] sm:$0xf] %v1228
      %1401 = vst [vmem:[%s172 + $0x10] sm:$0xf] %v1229
      %1402 = vst [vmem:[%s172 + $0x14] sm:$0xf] %v1230
      %1403 = vst [vmem:[%s172 + $0x18] sm:$0xf] %v1231
      %1404 = vst [vmem:[%s172 + $0x1c] sm:$0xf] %v1232
      %1405 = vst [vmem:[%s172 + $0x20] sm:$0xf] %v1233
      %1406 = vst [vmem:[%s172 + $0x24] sm:$0xf] %v1234
      %1407 = vst [vmem:[%s172 + $0x28] sm:$0xf] %v1235
      %1408 = vst [vmem:[%s172 + $0x2c] sm:$0xf] %v1236
      %1409 = vst [vmem:[%s172 + $0x30] sm:$0xf] %v1237
      %1410 = vst [vmem:[%s172 + $0x34] sm:$0xf] %v1238
      %1411 = vst [vmem:[%s172 + $0x38] sm:$0xf] %v1239
      %1412 = vst [vmem:[%s172 + $0x3c] sm:$0xf] %v1240
      %1413 = vst [vmem:[%s172 + $0x40] sm:$0xf] %v1241
      %1414 = vst [vmem:[%s172 + $0x44] sm:$0xf] %v1242
      %1415 = vst [vmem:[%s172 + $0x48] sm:$0xf] %v1243
      %1416 = vst [vmem:[%s172 + $0x4c] sm:$0xf] %v1244
      %1417 = vst [vmem:[%s172 + $0x50] sm:$0xf] %v1245
      %1418 = vst [vmem:[%s172 + $0x54] sm:$0xf] %v1246
      %1419 = vst [vmem:[%s172 + $0x58] sm:$0xf] %v1247
      %1420 = vst [vmem:[%s172 + $0x5c] sm:$0xf] %v1248
      %1421 = vst [vmem:[%s172 + $0x60] sm:$0xf] %v1249
      %1422 = vst [vmem:[%s172 + $0x64] sm:$0xf] %v1250
      %1423 = vst [vmem:[%s172 + $0x68] sm:$0xf] %v1251
      %1424 = vst [vmem:[%s172 + $0x6c] sm:$0xf] %v1252
      %1425 = vst [vmem:[%s172 + $0x70] sm:$0xf] %v1253
      %1426 = vst [vmem:[%s172 + $0x74] sm:$0xf] %v1254
      %1427 = vst [vmem:[%s172 + $0x78] sm:$0xf] %v1255
      %1428 = vst [vmem:[%s172 + $0x7c] sm:$0xf] %v1256
      %1429 = vst [vmem:[%s172 + $0x80] sm:$0xf] %v1257
      %1430 = vst [vmem:[%s172 + $0x84] sm:$0xf] %v1258
      %1431 = vst [vmem:[%s172 + $0x88] sm:$0xf] %v1259
      %1432 = vst [vmem:[%s172 + $0x8c] sm:$0xf] %v1260
      %1433 = vst [vmem:[%s172 + $0x90] sm:$0xf] %v1261
      %1434 = vst [vmem:[%s172 + $0x94] sm:$0xf] %v1262
      %1435 = vst [vmem:[%s172 + $0x98] sm:$0xf] %v1263
      %1436 = vst [vmem:[%s172 + $0x9c] sm:$0xf] %v1264
      %1437 = vst [vmem:[%s172 + $0xa0] sm:$0xf] %v1265
      %1438 = vst [vmem:[%s172 + $0xa4] sm:$0xf] %v1266
      %1439 = vst [vmem:[%s172 + $0xa8] sm:$0xf] %v1267
      %1440 = vst [vmem:[%s172 + $0xac] sm:$0xf] %v1268
      %1441 = vst [vmem:[%s172 + $0xb0] sm:$0xf] %v1269
      %1442 = vst [vmem:[%s172 + $0xb4] sm:$0xf] %v1270
      %1443 = vst [vmem:[%s172 + $0xb8] sm:$0xf] %v1271
      %1444 = vst [vmem:[%s172 + $0xbc] sm:$0xf] %v1272
      %1445 = vst [vmem:[%s172 + $0xc0] sm:$0xf] %v1273
      %1446 = vst [vmem:[%s172 + $0xc4] sm:$0xf] %v1274
      %1447 = vst [vmem:[%s172 + $0xc8] sm:$0xf] %v1275
      %1448 = vst [vmem:[%s172 + $0xcc] sm:$0xf] %v1276
      %1449 = vst [vmem:[%s172 + $0xd0] sm:$0xf] %v1277
      %1450 = vst [vmem:[%s172 + $0xd4] sm:$0xf] %v1278
      %1451 = vst [vmem:[%s172 + $0xd8] sm:$0xf] %v1279
      %1452 = vst [vmem:[%s172 + $0xdc] sm:$0xf] %v1280
      %1453 = vst [vmem:[%s172 + $0xe0] sm:$0xf] %v1281
      %1454 = vst [vmem:[%s172 + $0xe4] sm:$0xf] %v1282
      %1455 = vst [vmem:[%s172 + $0xe8] sm:$0xf] %v1283
      %1456 = vst [vmem:[%s172 + $0xec] sm:$0xf] %v1284
      %1457 = vst [vmem:[%s172 + $0xf0] sm:$0xf] %v1285
      %1458 = vst [vmem:[%s172 + $0xf4] sm:$0xf] %v1286
      %1459 = vst [vmem:[%s172 + $0xf8] sm:$0xf] %v1287
      %1460 = vst [vmem:[%s172 + $0xfc] sm:$0xf] %v1288
      %1461 = vst [vmem:[%s172 + $0x100] sm:$0xf] %v1289
      %1462 = vst [vmem:[%s172 + $0x104] sm:$0xf] %v1290
      %1463 = vst [vmem:[%s172 + $0x108] sm:$0xf] %v1291
      %1464 = vst [vmem:[%s172 + $0x10c] sm:$0xf] %v1292
      %1465 = vst [vmem:[%s172 + $0x110] sm:$0xf] %v1293
      %1466 = vst [vmem:[%s172 + $0x114] sm:$0xf] %v1294
      %1467 = vst [vmem:[%s172 + $0x118] sm:$0xf] %v1295
      %1468 = vst [vmem:[%s172 + $0x11c] sm:$0xf] %v1296
      %1469 = vst [vmem:[%s172 + $0x120] sm:$0xf] %v1297
      %1470 = vst [vmem:[%s172 + $0x124] sm:$0xf] %v1298
      %1471 = vst [vmem:[%s172 + $0x128] sm:$0xf] %v1299
      %1472 = vst [vmem:[%s172 + $0x12c] sm:$0xf] %v1300
      %1473 = vst [vmem:[%s172 + $0x130] sm:$0xf] %v1301
      %1474 = vst [vmem:[%s172 + $0x134] sm:$0xf] %v1302
      %1475 = vst [vmem:[%s172 + $0x138] sm:$0xf] %v1303
      %1476 = vst [vmem:[%s172 + $0x13c] sm:$0xf] %v1304
      %1477 = vst [vmem:[%s172 + $0x140] sm:$0xf] %v1305
      %1478 = vst [vmem:[%s172 + $0x144] sm:$0xf] %v1306
      %1479 = vst [vmem:[%s172 + $0x148] sm:$0xf] %v1307
      %1480 = vst [vmem:[%s172 + $0x14c] sm:$0xf] %v1308
      %1481 = vst [vmem:[%s172 + $0x150] sm:$0xf] %v1309
      %1482 = vst [vmem:[%s172 + $0x154] sm:$0xf] %v1310
      %s1483 = smul.u32 86, %s14
      %p1484 = scmp.lt.s32.totalorder %s1483, 171
      %s1485 = scalar_select %p1484, %s1483, 171
      %s1486 = smul.addr %s1485, 4
      %s1487 = scalar_lea.vmem %s3, %s1486
      // Predicated region
      $region33: #{cnn_forward.8} parent=31 // pred_check
        %p1488 = pneg %p100
      $region34: #{cnn_forward.8} parent=31 // pred_check_branch
        %1490 = sbr.rel (%p1488) target = $region36
      $region35: #{cnn_forward.8} parent=31 // pred_region
        %s1491 = smul.u32 86, %s14
      $region36: #{cnn_forward.8} parent=31 // pred_fallthru
        _
    $region32: #{cnn_forward.8} parent=5 // pred_fallthru
      _
    %p1492 = scmp.le.s32.totalorder 2, %s9
    // Predicated region
    $region37: #{cnn_forward.8} parent=5 // pred_check
      %p1493 = pneg %p1492
    $region38: #{cnn_forward.8} parent=5 // pred_check_branch
      %1495 = sbr.rel (%p1493) target = $region40
    $region39: #{cnn_forward.8} parent=5 // pred_region
      %s1496 = ssub.s32 %s9, 2
      // Predicated region
      $region41: #{cnn_forward.8} parent=39 // pred_check
        %p1497 = pneg %p106
      $region42: #{cnn_forward.8} parent=39 // pred_check_branch
        %1499 = sbr.rel (%p1497) target = $region44
      $region43: #{cnn_forward.8} parent=39 // pred_region
        %s1500 = smul.u32 86, %s15
        %p1501 = scmp.lt.s32.totalorder %s1500, 171
        %s1502 = scalar_select %p1501, %s1500, 171
        %s1503 = smul.addr %s1502, 4
        %s1504 = scalar_lea.vmem %s3, %s1503
      $region44: #{cnn_forward.8} parent=39 // pred_fallthru
        _
    $region40: #{cnn_forward.8} parent=5 // pred_fallthru
      _
  $region6: #{cnn_forward.8} parent=0 // loop_footer
    %s13 = sadd.s32 1, %s9
  $region7: #{cnn_forward.8} parent=0 // loop_footer_branch
    %8 = sbr.rel target = $region3
  $region8: #{cnn_forward.8} parent=0 // loop_exit
    _

// kernel: cnn_forward.9
$region0: #{cnn_forward.9}
  #allocation0 [shape = 'u32[]', space=smem, size = 0x4, offset = 0x4, fixed_abs, tag = 'smem constant byte address 0x4 - core index']
  #allocation1 [shape = 'u32[144,128]{1,0:T(1,128)}', space=vmem, size = 0x12000, scoped, tag = 'internal scratch']
  %s0 = inlined_call_operand.vmem [shape: bf16[1152,128], index: 0, kind: input, shape index: {}]
  %s1 = inlined_call_operand.vmem [shape: bf16[128,128], index: 1, kind: input, shape index: {}]
  %s2 = inlined_call_operand.vmem [shape: f32[1,128], index: 2, kind: input, shape index: {}]
  %s3 = inlined_call_operand.vmem [shape: bf16[1152,128], index: 3, kind: output, shape index: {}]
  %s4 = sld [smem:[#allocation0]]
  $region45: #{cnn_forward.9} parent=0
    _
  %s6 = ssub.s32 1, %s4
  %s7 = scalar_select 0, %s6, %s4
  loop: start=0, step=1, limit=4
  $region2: #{cnn_forward.9} parent=0 // loop_pre_header
    _
  $region3: #{cnn_forward.9} parent=0 // loop_header
    %s9 = sphi 0, %s13
    %p10 = scmp.ge.s32.totalorder %s9, 4
    %s19 = sphi 0, %s21
    %s22 = sphi 0, %s19
    %s23 = sphi 0, %s22
    %s39 = sphi 0, %s23
    %s43 = sphi 0, %s43
    %s45 = sphi 0, %s43
    %s46 = sphi 0, %s45
    %s60 = sphi 0, %s46
    %s64 = sphi 0, %s64
    %s66 = sphi 0, %s64
    %s67 = sphi 0, %s66
    %s81 = sphi 0, %s67
    %s87 = sphi 0, %s89
    %s90 = sphi 0, %s87
    %s91 = sphi 0, %s90
    %s107 = sphi 0, %s91
  $region4: #{cnn_forward.9} parent=0 // loop_header_branch
    %12 = sbr.rel (%p10) target = $region8
  $region5: #{cnn_forward.9} parent=0 // loop_body
    %s14 = ssub.s32 %s9, 1
    %s15 = ssub.s32 %s9, 2
    %s16 = sadd.s32 %s9, 1
    %s17 = ssub.s32 %s9, %s16
    %p18 = scmp.eq.s32.totalorder %s17, 0
    %s20 = sadd.s32 %s19, 1
    %s21 = scalar_select %p18, %s19, %s20
    %p24 = pneg %p18
    %p25 = scmp.eq.s32.totalorder %s9, 1
    %p26 = por %p24, %p25
    %p27 = scmp.ne.s32.totalorder %s19, %s22
    %p28 = scmp.eq.s32.totalorder %s9, 0
    %p29 = por %p27, %p28
    %p30 = scmp.ne.s32.totalorder %s19, %s22
    %p31 = scmp.eq.s32.totalorder %s14, 1
    %p32 = por %p30, %p31
    %p33 = scmp.ne.s32.totalorder %s22, %s23
    %p34 = scmp.eq.s32.totalorder %s14, 0
    %p35 = por %p33, %p34
    %p36 = scmp.ne.s32.totalorder %s22, %s23
    %p37 = scmp.eq.s32.totalorder %s15, 1
    %p38 = por %p36, %p37
    %p40 = scmp.ne.s32.totalorder %s23, %s39
    %p41 = scmp.eq.s32.totalorder %s15, 0
    %p42 = por %p40, %p41
    %s44 = sadd.s32 %s43, 1
    %p47 = scmp.eq.s32.totalorder %s9, 1
    %p48 = scmp.ne.s32.totalorder %s43, %s45
    %p49 = scmp.eq.s32.totalorder %s9, 0
    %p50 = por %p48, %p49
    %p51 = scmp.ne.s32.totalorder %s43, %s45
    %p52 = scmp.eq.s32.totalorder %s14, 1
    %p53 = por %p51, %p52
    %p54 = scmp.ne.s32.totalorder %s45, %s46
    %p55 = scmp.eq.s32.totalorder %s14, 0
    %p56 = por %p54, %p55
    %p57 = scmp.ne.s32.totalorder %s45, %s46
    %p58 = scmp.eq.s32.totalorder %s15, 1
    %p59 = por %p57, %p58
    %p61 = scmp.ne.s32.totalorder %s46, %s60
    %p62 = scmp.eq.s32.totalorder %s15, 0
    %p63 = por %p61, %p62
    %s65 = sadd.s32 %s64, 1
    %p68 = scmp.eq.s32.totalorder %s9, 1
    %p69 = scmp.ne.s32.totalorder %s64, %s66
    %p70 = scmp.eq.s32.totalorder %s9, 0
    %p71 = por %p69, %p70
    %p72 = scmp.ne.s32.totalorder %s64, %s66
    %p73 = scmp.eq.s32.totalorder %s14, 1
    %p74 = por %p72, %p73
    %p75 = scmp.ne.s32.totalorder %s66, %s67
    %p76 = scmp.eq.s32.totalorder %s14, 0
    %p77 = por %p75, %p76
    %p78 = scmp.ne.s32.totalorder %s66, %s67
    %p79 = scmp.eq.s32.totalorder %s15, 1
    %p80 = por %p78, %p79
    %p82 = scmp.ne.s32.totalorder %s67, %s81
    %p83 = scmp.eq.s32.totalorder %s15, 0
    %p84 = por %p82, %p83
    %s85 = ssub.s32 %s9, %s16
    %p86 = scmp.eq.s32.totalorder %s85, 0
    %s88 = sadd.s32 %s87, 1
    %s89 = scalar_select %p86, %s87, %s88
    %p92 = pneg %p86
    %p93 = scmp.eq.s32.totalorder %s9, 1
    %p94 = por %p92, %p93
    %p95 = scmp.ne.s32.totalorder %s87, %s90
    %p96 = scmp.eq.s32.totalorder %s9, 0
    %p97 = por %p95, %p96
    %p98 = scmp.ne.s32.totalorder %s87, %s90
    %p99 = scmp.eq.s32.totalorder %s14, 1
    %p100 = por %p98, %p99
    %p101 = scmp.ne.s32.totalorder %s90, %s91
    %p102 = scmp.eq.s32.totalorder %s14, 0
    %p103 = por %p101, %p102
    %p104 = scmp.ne.s32.totalorder %s90, %s91
    %p105 = scmp.eq.s32.totalorder %s15, 1
    %p106 = por %p104, %p105
    %p108 = scmp.ne.s32.totalorder %s91, %s107
    %p109 = scmp.eq.s32.totalorder %s15, 0
    %p110 = por %p108, %p109
    %p111 = scmp.le.s32.totalorder 1, %s9
    %p112 = scmp.lt.s32.totalorder %s9, 3
    %p113 = pnand %p111, %p112
    %p114 = pneg %p113
    // Predicated region
    $region9: #{cnn_forward.9} parent=5 // pred_check
      _
    $region10: #{cnn_forward.9} parent=5 // pred_check_branch
      %116 = sbr.rel (%p113) target = $region12
    $region11: #{cnn_forward.9} parent=5 // pred_region
      %s117 = ssub.s32 %s9, 1
      // Predicated region
      $region13: #{cnn_forward.9} parent=11 // pred_check
        %p118 = pneg %p56
      $region14: #{cnn_forward.9} parent=11 // pred_check_branch
        %120 = sbr.rel (%p118) target = $region16
      $region15: #{cnn_forward.9} parent=11 // pred_region
        _
      $region16: #{cnn_forward.9} parent=11 // pred_fallthru
        _
      // Predicated region
      $region17: #{cnn_forward.9} parent=11 // pred_check
        %p121 = pneg %p77
      $region18: #{cnn_forward.9} parent=11 // pred_check_branch
        %123 = sbr.rel (%p121) target = $region20
      $region19: #{cnn_forward.9} parent=11 // pred_region
        _
      $region20: #{cnn_forward.9} parent=11 // pred_fallthru
        _
    $region12: #{cnn_forward.9} parent=5 // pred_fallthru
      _
    %p124 = scmp.lt.s32.totalorder %s9, 2
    // Predicated region
    $region21: #{cnn_forward.9} parent=5 // pred_check
      %p125 = pneg %p124
    $region22: #{cnn_forward.9} parent=5 // pred_check_branch
      %127 = sbr.rel (%p125) target = $region24
    $region23: #{cnn_forward.9} parent=5 // pred_region
      // Predicated region
      $region25: #{cnn_forward.9} parent=23 // pred_check
        %p128 = pneg %p29
      $region26: #{cnn_forward.9} parent=23 // pred_check_branch
        %130 = sbr.rel (%p128) target = $region28
      $region27: #{cnn_forward.9} parent=23 // pred_region
        %s131 = smul.u32 72, %s9
        %p132 = scmp.lt.s32.totalorder %s131, 143
        %s133 = scalar_select %p132, %s131, 143
        %s134 = smul.addr %s133, 4
        %s135 = scalar_lea.vmem %s0, %s134
        %s136 = smul.u32 72, %s9
      $region28: #{cnn_forward.9} parent=23 // pred_fallthru
        _
    $region24: #{cnn_forward.9} parent=5 // pred_fallthru
      _
    %p137 = scmp.le.s32.totalorder 1, %s9
    %p138 = scmp.lt.s32.totalorder %s9, 3
    %p139 = pnand %p137, %p138
    %p140 = pneg %p139
    // Predicated region
    $region29: #{cnn_forward.9} parent=5 // pred_check
      _
    $region30: #{cnn_forward.9} parent=5 // pred_check_branch
      %142 = sbr.rel (%p139) target = $region32
    $region31: #{cnn_forward.9} parent=5 // pred_region
      %s143 = ssub.s32 %s9, 1
      %s144 = smul.u32 72, %s14
      %p145 = scmp.lt.s32.totalorder %s144, 143
      %s146 = scalar_select %p145, %s144, 143
      %s147 = smul.addr %s146, 4
      %s148 = scalar_lea.vmem %s0, %s147
      %p149 = pneg %p35
      %p150 = pneg %p32
      %p151 = pneg %p56
      %p152 = pneg %p53
      %p153 = pneg %p77
      %p154 = pneg %p74
      %p155 = pneg %p103
      %p156 = pneg %p100
      %s157 = smul.u32 72, %s14
      %p158 = scmp.lt.s32.totalorder %s157, 143
      %s159 = scalar_select %p158, %s157, 143
      %s160 = smul.addr %s159, 4
      %s161 = scalar_lea.vmem %s3, %s160
      %s162 = smul.u32 72, %s14
      %p163 = scmp.lt.s32.totalorder %s162, 143
      %s164 = scalar_select %p163, %s162, 143
      %s165 = smul.addr %s164, 4
      %s166 = scalar_lea.vmem %s0, %s165
      %s167 = smul.u32 72, %s14
      %s168 = smul.u32 72, %s14
      %p169 = scmp.lt.s32.totalorder %s168, 143
      %s170 = scalar_select %p169, %s168, 143
      %s171 = smul.addr %s170, 4
      %s172 = scalar_lea.vmem %s3, %s171
      %s173 = smul.u32 72, %s14
      %v175 = vld [vmem:[%s166] sm:$0xf]
      %v176 = vld [vmem:[%s166 + $0x4] sm:$0xf]
      %v177 = vld [vmem:[%s166 + $0x8] sm:$0xf]
      %v178 = vld [vmem:[%s166 + $0xc] sm:$0xf]
      %v179 = vld [vmem:[%s166 + $0x10] sm:$0xf]
      %v180 = vld [vmem:[%s166 + $0x14] sm:$0xf]
      %v181 = vld [vmem:[%s166 + $0x18] sm:$0xf]
      %v182 = vld [vmem:[%s166 + $0x1c] sm:$0xf]
      %v183 = vld [vmem:[%s166 + $0x20] sm:$0xf]
      %v184 = vld [vmem:[%s166 + $0x24] sm:$0xf]
      %v185 = vld [vmem:[%s166 + $0x28] sm:$0xf]
      %v186 = vld [vmem:[%s166 + $0x2c] sm:$0xf]
      %v187 = vld [vmem:[%s166 + $0x30] sm:$0xf]
      %v188 = vld [vmem:[%s166 + $0x34] sm:$0xf]
      %v189 = vld [vmem:[%s166 + $0x38] sm:$0xf]
      %v190 = vld [vmem:[%s166 + $0x3c] sm:$0xf]
      %v191 = vld [vmem:[%s166 + $0x40] sm:$0xf]
      %v192 = vld [vmem:[%s166 + $0x44] sm:$0xf]
      %v193 = vld [vmem:[%s166 + $0x48] sm:$0xf]
      %v194 = vld [vmem:[%s166 + $0x4c] sm:$0xf]
      %v195 = vld [vmem:[%s166 + $0x50] sm:$0xf]
      %v196 = vld [vmem:[%s166 + $0x54] sm:$0xf]
      %v197 = vld [vmem:[%s166 + $0x58] sm:$0xf]
      %v198 = vld [vmem:[%s166 + $0x5c] sm:$0xf]
      %v199 = vld [vmem:[%s166 + $0x60] sm:$0xf]
      %v200 = vld [vmem:[%s166 + $0x64] sm:$0xf]
      %v201 = vld [vmem:[%s166 + $0x68] sm:$0xf]
      %v202 = vld [vmem:[%s166 + $0x6c] sm:$0xf]
      %v203 = vld [vmem:[%s166 + $0x70] sm:$0xf]
      %v204 = vld [vmem:[%s166 + $0x74] sm:$0xf]
      %v205 = vld [vmem:[%s166 + $0x78] sm:$0xf]
      %v206 = vld [vmem:[%s166 + $0x7c] sm:$0xf]
      %v207 = vld [vmem:[%s166 + $0x80] sm:$0xf]
      %v208 = vld [vmem:[%s166 + $0x84] sm:$0xf]
      %v209 = vld [vmem:[%s166 + $0x88] sm:$0xf]
      %v210 = vld [vmem:[%s166 + $0x8c] sm:$0xf]
      %v211 = vld [vmem:[%s166 + $0x90] sm:$0xf]
      %v212 = vld [vmem:[%s166 + $0x94] sm:$0xf]
      %v213 = vld [vmem:[%s166 + $0x98] sm:$0xf]
      %v214 = vld [vmem:[%s166 + $0x9c] sm:$0xf]
      %v215 = vld [vmem:[%s166 + $0xa0] sm:$0xf]
      %v216 = vld [vmem:[%s166 + $0xa4] sm:$0xf]
      %v217 = vld [vmem:[%s166 + $0xa8] sm:$0xf]
      %v218 = vld [vmem:[%s166 + $0xac] sm:$0xf]
      %v219 = vld [vmem:[%s166 + $0xb0] sm:$0xf]
      %v220 = vld [vmem:[%s166 + $0xb4] sm:$0xf]
      %v221 = vld [vmem:[%s166 + $0xb8] sm:$0xf]
      %v222 = vld [vmem:[%s166 + $0xbc] sm:$0xf]
      %v223 = vld [vmem:[%s166 + $0xc0] sm:$0xf]
      %v224 = vld [vmem:[%s166 + $0xc4] sm:$0xf]
      %v225 = vld [vmem:[%s166 + $0xc8] sm:$0xf]
      %v226 = vld [vmem:[%s166 + $0xcc] sm:$0xf]
      %v227 = vld [vmem:[%s166 + $0xd0] sm:$0xf]
      %v228 = vld [vmem:[%s166 + $0xd4] sm:$0xf]
      %v229 = vld [vmem:[%s166 + $0xd8] sm:$0xf]
      %v230 = vld [vmem:[%s166 + $0xdc] sm:$0xf]
      %v231 = vld [vmem:[%s166 + $0xe0] sm:$0xf]
      %v232 = vld [vmem:[%s166 + $0xe4] sm:$0xf]
      %v233 = vld [vmem:[%s166 + $0xe8] sm:$0xf]
      %v234 = vld [vmem:[%s166 + $0xec] sm:$0xf]
      %v235 = vld [vmem:[%s166 + $0xf0] sm:$0xf]
      %v236 = vld [vmem:[%s166 + $0xf4] sm:$0xf]
      %v237 = vld [vmem:[%s166 + $0xf8] sm:$0xf]
      %v238 = vld [vmem:[%s166 + $0xfc] sm:$0xf]
      %v239 = vld [vmem:[%s166 + $0x100] sm:$0xf]
      %v240 = vld [vmem:[%s166 + $0x104] sm:$0xf]
      %v241 = vld [vmem:[%s166 + $0x108] sm:$0xf]
      %v242 = vld [vmem:[%s166 + $0x10c] sm:$0xf]
      %v243 = vld [vmem:[%s166 + $0x110] sm:$0xf]
      %v244 = vld [vmem:[%s166 + $0x114] sm:$0xf]
      %v245 = vld [vmem:[%s166 + $0x118] sm:$0xf]
      %v246 = vld [vmem:[%s166 + $0x11c] sm:$0xf]
      %v247 = vld [vmem:[%s1] sm:$0xf]
      %v248 = vld [vmem:[%s1 + $0x4] sm:$0xf]
      %v249 = vld [vmem:[%s1 + $0x8] sm:$0xf]
      %v250 = vld [vmem:[%s1 + $0xc] sm:$0xf]
      %v251 = vld [vmem:[%s1 + $0x10] sm:$0xf]
      %v252 = vld [vmem:[%s1 + $0x14] sm:$0xf]
      %v253 = vld [vmem:[%s1 + $0x18] sm:$0xf]
      %v254 = vld [vmem:[%s1 + $0x1c] sm:$0xf]
      %v255 = vld [vmem:[%s1 + $0x20] sm:$0xf]
      %v256 = vld [vmem:[%s1 + $0x24] sm:$0xf]
      %v257 = vld [vmem:[%s1 + $0x28] sm:$0xf]
      %v258 = vld [vmem:[%s1 + $0x2c] sm:$0xf]
      %v259 = vld [vmem:[%s1 + $0x30] sm:$0xf]
      %v260 = vld [vmem:[%s1 + $0x34] sm:$0xf]
      %v261 = vld [vmem:[%s1 + $0x38] sm:$0xf]
      %v262 = vld [vmem:[%s1 + $0x3c] sm:$0xf]
      %v263 = vld [vmem:[%s2] sm:$0x1]
      %v265 = vlaneseq
      %v266 = vshrl.u32 %v265, 7
      %v267 = vsub.s32 0, %v266
      %v268 = vrot.slane %v263, %v267
      %v342 = vunpack.c.l.b16 %v175
      %v343 = vunpack.c.l.b16 %v176
      %v344 = vunpack.c.l.b16 %v177
      %v345 = vunpack.c.l.b16 %v178
      %v346 = vunpack.c.l.b16 %v179
      %v347 = vunpack.c.l.b16 %v180
      %v348 = vunpack.c.l.b16 %v181
      %v349 = vunpack.c.l.b16 %v182
      %v350 = vunpack.c.l.b16 %v183
      %v351 = vunpack.c.l.b16 %v184
      %v352 = vunpack.c.l.b16 %v185
      %v353 = vunpack.c.l.b16 %v186
      %v354 = vunpack.c.l.b16 %v187
      %v355 = vunpack.c.l.b16 %v188
      %v356 = vunpack.c.l.b16 %v189
      %v357 = vunpack.c.l.b16 %v190
      %v358 = vunpack.c.l.b16 %v191
      %v359 = vunpack.c.l.b16 %v192
      %v360 = vunpack.c.l.b16 %v193
      %v361 = vunpack.c.l.b16 %v194
      %v362 = vunpack.c.l.b16 %v195
      %v363 = vunpack.c.l.b16 %v196
      %v364 = vunpack.c.l.b16 %v197
      %v365 = vunpack.c.l.b16 %v198
      %v366 = vunpack.c.l.b16 %v199
      %v367 = vunpack.c.l.b16 %v200
      %v368 = vunpack.c.l.b16 %v201
      %v369 = vunpack.c.l.b16 %v202
      %v370 = vunpack.c.l.b16 %v203
      %v371 = vunpack.c.l.b16 %v204
      %v372 = vunpack.c.l.b16 %v205
      %v373 = vunpack.c.l.b16 %v206
      %v374 = vunpack.c.l.b16 %v207
      %v375 = vunpack.c.l.b16 %v208
      %v376 = vunpack.c.l.b16 %v209
      %v377 = vunpack.c.l.b16 %v210
      %v378 = vunpack.c.l.b16 %v211
      %v379 = vunpack.c.l.b16 %v212
      %v380 = vunpack.c.l.b16 %v213
      %v381 = vunpack.c.l.b16 %v214
      %v382 = vunpack.c.l.b16 %v215
      %v383 = vunpack.c.l.b16 %v216
      %v384 = vunpack.c.l.b16 %v217
      %v385 = vunpack.c.l.b16 %v218
      %v386 = vunpack.c.l.b16 %v219
      %v387 = vunpack.c.l.b16 %v220
      %v388 = vunpack.c.l.b16 %v221
      %v389 = vunpack.c.l.b16 %v222
      %v390 = vunpack.c.l.b16 %v223
      %v391 = vunpack.c.l.b16 %v224
      %v392 = vunpack.c.l.b16 %v225
      %v393 = vunpack.c.l.b16 %v226
      %v394 = vunpack.c.l.b16 %v227
      %v395 = vunpack.c.l.b16 %v228
      %v396 = vunpack.c.l.b16 %v229
      %v397 = vunpack.c.l.b16 %v230
      %v398 = vunpack.c.l.b16 %v231
      %v399 = vunpack.c.l.b16 %v232
      %v400 = vunpack.c.l.b16 %v233
      %v401 = vunpack.c.l.b16 %v234
      %v402 = vunpack.c.l.b16 %v235
      %v403 = vunpack.c.l.b16 %v236
      %v404 = vunpack.c.l.b16 %v237
      %v405 = vunpack.c.l.b16 %v238
      %v406 = vunpack.c.l.b16 %v239
      %v407 = vunpack.c.l.b16 %v240
      %v408 = vunpack.c.l.b16 %v241
      %v409 = vunpack.c.l.b16 %v242
      %v410 = vunpack.c.l.b16 %v243
      %v411 = vunpack.c.l.b16 %v244
      %v412 = vunpack.c.l.b16 %v245
      %v413 = vunpack.c.l.b16 %v246
      %v414 = vpack.c.b16 %v343, %v342
      %v415 = vpack.c.b16 %v345, %v344
      %v416 = vpack.c.b16 %v347, %v346
      %v417 = vpack.c.b16 %v349, %v348
      %v418 = vpack.c.b16 %v351, %v350
      %v419 = vpack.c.b16 %v353, %v352
      %v420 = vpack.c.b16 %v355, %v354
      %v421 = vpack.c.b16 %v357, %v356
      %v422 = vpack.c.b16 %v359, %v358
      %v423 = vpack.c.b16 %v361, %v360
      %v424 = vpack.c.b16 %v363, %v362
      %v425 = vpack.c.b16 %v365, %v364
      %v426 = vpack.c.b16 %v367, %v366
      %v427 = vpack.c.b16 %v369, %v368
      %v428 = vpack.c.b16 %v371, %v370
      %v429 = vpack.c.b16 %v373, %v372
      %v430 = vpack.c.b16 %v375, %v374
      %v431 = vpack.c.b16 %v377, %v376
      %v432 = vpack.c.b16 %v379, %v378
      %v433 = vpack.c.b16 %v381, %v380
      %v434 = vpack.c.b16 %v383, %v382
      %v435 = vpack.c.b16 %v385, %v384
      %v436 = vpack.c.b16 %v387, %v386
      %v437 = vpack.c.b16 %v389, %v388
      %v438 = vpack.c.b16 %v391, %v390
      %v439 = vpack.c.b16 %v393, %v392
      %v440 = vpack.c.b16 %v395, %v394
      %v441 = vpack.c.b16 %v397, %v396
      %v442 = vpack.c.b16 %v399, %v398
      %v443 = vpack.c.b16 %v401, %v400
      %v444 = vpack.c.b16 %v403, %v402
      %v445 = vpack.c.b16 %v405, %v404
      %v446 = vpack.c.b16 %v407, %v406
      %v447 = vpack.c.b16 %v409, %v408
      %v448 = vpack.c.b16 %v411, %v410
      %v449 = vpack.c.b16 %v413, %v412
      %v502 = vunpack.c.l.b16 %v247
      %v503 = vunpack.c.l.b16 %v248
      %v504 = vunpack.c.l.b16 %v249
      %v505 = vunpack.c.l.b16 %v250
      %v506 = vunpack.c.l.b16 %v251
      %v507 = vunpack.c.l.b16 %v252
      %v508 = vunpack.c.l.b16 %v253
      %v509 = vunpack.c.l.b16 %v254
      %v510 = vunpack.c.l.b16 %v255
      %v511 = vunpack.c.l.b16 %v256
      %v512 = vunpack.c.l.b16 %v257
      %v513 = vunpack.c.l.b16 %v258
      %v514 = vunpack.c.l.b16 %v259
      %v515 = vunpack.c.l.b16 %v260
      %v516 = vunpack.c.l.b16 %v261
      %v517 = vunpack.c.l.b16 %v262
      %v518 = vpack.c.b16 %v503, %v502
      %v519 = vpack.c.b16 %v505, %v504
      %v520 = vpack.c.b16 %v507, %v506
      %v521 = vpack.c.b16 %v509, %v508
      %v522 = vpack.c.b16 %v511, %v510
      %v523 = vpack.c.b16 %v513, %v512
      %v524 = vpack.c.b16 %v515, %v514
      %v525 = vpack.c.b16 %v517, %v516
      %534 = vmatprep.subr.bf16.mxu0 0
      %535 = vmatpush1.bf16.msra.mxu0 %v518
      %536 = vmatprep.subr.bf16.mxu0 0
      %537 = vmatpush1.bf16.msra.mxu0 %v519
      %538 = vmatprep.subr.bf16.mxu0 0
      %539 = vmatpush1.bf16.msra.mxu0 %v520
      %540 = vmatprep.subr.bf16.mxu0 0
      %541 = vmatpush1.bf16.msra.mxu0 %v521
      %542 = vmatprep.subr.bf16.mxu0 0
      %543 = vmatpush1.bf16.msra.mxu0 %v522
      %544 = vmatprep.subr.bf16.mxu0 0
      %545 = vmatpush1.bf16.msra.mxu0 %v523
      %546 = vmatprep.subr.bf16.mxu0 0
      %547 = vmatpush1.bf16.msra.mxu0 %v524
      %548 = vmatprep.subr.bf16.mxu0 0
      %549 = vmatpush1.bf16.msra.mxu0 %v525
      %550 = vmatprep.subr.bf16.mxu0 0
      %551 = vmatpush1.bf16.msra.mxu0 0
      %552 = vmatprep.subr.bf16.mxu0 0
      %553 = vmatpush1.bf16.msra.mxu0 0
      %554 = vmatprep.subr.bf16.mxu0 0
      %555 = vmatpush1.bf16.msra.mxu0 0
      %556 = vmatprep.subr.bf16.mxu0 0
      %557 = vmatpush1.bf16.msra.mxu0 0
      %558 = vmatprep.subr.bf16.mxu0 0
      %559 = vmatpush1.bf16.msra.mxu0 0
      %560 = vmatprep.subr.bf16.mxu0 0
      %561 = vmatpush1.bf16.msra.mxu0 0
      %562 = vmatprep.subr.bf16.mxu0 0
      %563 = vmatpush1.bf16.msra.mxu0 0
      %564 = vmatprep.subr.bf16.mxu0 0
      %565 = vmatpush1.bf16.msra.mxu0 0
      %566 = vmatprep.mubr.bf16.mxu0 0
      %567 = vmatmul.mubr.bf16.gmra.mrb[0].mxu0 %v414
      %v568 = vpop.f32.mrb[0].mxu0
      %v569 = vadd.f32 %v268, %v568
      %v570 = vpop.f32.mrb[0].mxu0
      %v571 = vpop.f32.mrb[0].mxu0
      %v572 = vadd.f32 %v268, %v571
      %v573 = vpop.f32.mrb[0].mxu0
      %574 = vmatprep.mubr.bf16.mxu0 0
      %575 = vmatmul.mubr.bf16.gmra.mrb[0].mxu0 %v415
      %v576 = vpop.f32.mrb[0].mxu0
      %v577 = vadd.f32 %v268, %v576
      %v578 = vpop.f32.mrb[0].mxu0
      %v579 = vpop.f32.mrb[0].mxu0
      %v580 = vadd.f32 %v268, %v579
      %v581 = vpop.f32.mrb[0].mxu0
      %582 = vmatprep.mubr.bf16.mxu0 0
      %583 = vmatmul.mubr.bf16.gmra.mrb[0].mxu0 %v416
      %v584 = vpop.f32.mrb[0].mxu0
      %v585 = vadd.f32 %v268, %v584
      %v586 = vpop.f32.mrb[0].mxu0
      %v587 = vpop.f32.mrb[0].mxu0
      %v588 = vadd.f32 %v268, %v587
      %v589 = vpop.f32.mrb[0].mxu0
      %590 = vmatprep.mubr.bf16.mxu0 0
      %591 = vmatmul.mubr.bf16.gmra.mrb[0].mxu0 %v417
      %v592 = vpop.f32.mrb[0].mxu0
      %v593 = vadd.f32 %v268, %v592
      %v594 = vpop.f32.mrb[0].mxu0
      %v595 = vpop.f32.mrb[0].mxu0
      %v596 = vadd.f32 %v268, %v595
      %v597 = vpop.f32.mrb[0].mxu0
      %598 = vmatprep.mubr.bf16.mxu0 0
      %599 = vmatmul.mubr.bf16.gmra.mrb[0].mxu0 %v418
      %v600 = vpop.f32.mrb[0].mxu0
      %v601 = vadd.f32 %v268, %v600
      %v602 = vpop.f32.mrb[0].mxu0
      %v603 = vpop.f32.mrb[0].mxu0
      %v604 = vadd.f32 %v268, %v603
      %v605 = vpop.f32.mrb[0].mxu0
      %606 = vmatprep.mubr.bf16.mxu0 0
      %607 = vmatmul.mubr.bf16.gmra.mrb[0].mxu0 %v419
      %v608 = vpop.f32.mrb[0].mxu0
      %v609 = vadd.f32 %v268, %v608
      %v610 = vpop.f32.mrb[0].mxu0
      %v611 = vpop.f32.mrb[0].mxu0
      %v612 = vadd.f32 %v268, %v611
      %v613 = vpop.f32.mrb[0].mxu0
      %614 = vmatprep.mubr.bf16.mxu0 0
      %615 = vmatmul.mubr.bf16.gmra.mrb[0].mxu0 %v420
      %v616 = vpop.f32.mrb[0].mxu0
      %v617 = vadd.f32 %v268, %v616
      %v618 = vpop.f32.mrb[0].mxu0
      %v619 = vpop.f32.mrb[0].mxu0
      %v620 = vadd.f32 %v268, %v619
      %v621 = vpop.f32.mrb[0].mxu0
      %622 = vmatprep.mubr.bf16.mxu0 0
      %623 = vmatmul.mubr.bf16.gmra.mrb[0].mxu0 %v421
      %v624 = vpop.f32.mrb[0].mxu0
      %v625 = vadd.f32 %v268, %v624
      %v626 = vpop.f32.mrb[0].mxu0
      %v627 = vpop.f32.mrb[0].mxu0
      %v628 = vadd.f32 %v268, %v627
      %v629 = vpop.f32.mrb[0].mxu0
      %630 = vmatprep.mubr.bf16.mxu0 0
      %631 = vmatmul.mubr.bf16.gmra.mrb[0].mxu0 %v422
      %v632 = vpop.f32.mrb[0].mxu0
      %v633 = vadd.f32 %v268, %v632
      %v634 = vpop.f32.mrb[0].mxu0
      %v635 = vpop.f32.mrb[0].mxu0
      %v636 = vadd.f32 %v268, %v635
      %v637 = vpop.f32.mrb[0].mxu0
      %638 = vmatprep.mubr.bf16.mxu0 0
      %639 = vmatmul.mubr.bf16.gmra.mrb[0].mxu0 %v423
      %v640 = vpop.f32.mrb[0].mxu0
      %v641 = vadd.f32 %v268, %v640
      %v642 = vpop.f32.mrb[0].mxu0
      %v643 = vpop.f32.mrb[0].mxu0
      %v644 = vadd.f32 %v268, %v643
      %v645 = vpop.f32.mrb[0].mxu0
      %646 = vmatprep.mubr.bf16.mxu0 0
      %647 = vmatmul.mubr.bf16.gmra.mrb[0].mxu0 %v424
      %v648 = vpop.f32.mrb[0].mxu0
      %v649 = vadd.f32 %v268, %v648
      %v650 = vpop.f32.mrb[0].mxu0
      %v651 = vpop.f32.mrb[0].mxu0
      %v652 = vadd.f32 %v268, %v651
      %v653 = vpop.f32.mrb[0].mxu0
      %654 = vmatprep.mubr.bf16.mxu0 0
      %655 = vmatmul.mubr.bf16.gmra.mrb[0].mxu0 %v425
      %v656 = vpop.f32.mrb[0].mxu0
      %v657 = vadd.f32 %v268, %v656
      %v658 = vpop.f32.mrb[0].mxu0
      %v659 = vpop.f32.mrb[0].mxu0
      %v660 = vadd.f32 %v268, %v659
      %v661 = vpop.f32.mrb[0].mxu0
      %662 = vmatprep.mubr.bf16.mxu0 0
      %663 = vmatmul.mubr.bf16.gmra.mrb[0].mxu0 %v426
      %v664 = vpop.f32.mrb[0].mxu0
      %v665 = vadd.f32 %v268, %v664
      %v666 = vpop.f32.mrb[0].mxu0
      %v667 = vpop.f32.mrb[0].mxu0
      %v668 = vadd.f32 %v268, %v667
      %v669 = vpop.f32.mrb[0].mxu0
      %670 = vmatprep.mubr.bf16.mxu0 0
      %671 = vmatmul.mubr.bf16.gmra.mrb[0].mxu0 %v427
      %v672 = vpop.f32.mrb[0].mxu0
      %v673 = vadd.f32 %v268, %v672
      %v674 = vpop.f32.mrb[0].mxu0
      %v675 = vpop.f32.mrb[0].mxu0
      %v676 = vadd.f32 %v268, %v675
      %v677 = vpop.f32.mrb[0].mxu0
      %678 = vmatprep.mubr.bf16.mxu0 0
      %679 = vmatmul.mubr.bf16.gmra.mrb[0].mxu0 %v428
      %v680 = vpop.f32.mrb[0].mxu0
      %v681 = vadd.f32 %v268, %v680
      %v682 = vpop.f32.mrb[0].mxu0
      %v683 = vpop.f32.mrb[0].mxu0
      %v684 = vadd.f32 %v268, %v683
      %v685 = vpop.f32.mrb[0].mxu0
      %686 = vmatprep.mubr.bf16.mxu0 0
      %687 = vmatmul.mubr.bf16.gmra.mrb[0].mxu0 %v429
      %v688 = vpop.f32.mrb[0].mxu0
      %v689 = vadd.f32 %v268, %v688
      %v690 = vpop.f32.mrb[0].mxu0
      %v691 = vpop.f32.mrb[0].mxu0
      %v692 = vadd.f32 %v268, %v691
      %v693 = vpop.f32.mrb[0].mxu0
      %694 = vmatprep.mubr.bf16.mxu0 0
      %695 = vmatmul.mubr.bf16.gmra.mrb[0].mxu0 %v430
      %v696 = vpop.f32.mrb[0].mxu0
      %v697 = vadd.f32 %v268, %v696
      %v698 = vpop.f32.mrb[0].mxu0
      %v699 = vpop.f32.mrb[0].mxu0
      %v700 = vadd.f32 %v268, %v699
      %v701 = vpop.f32.mrb[0].mxu0
      %702 = vmatprep.mubr.bf16.mxu0 0
      %703 = vmatmul.mubr.bf16.gmra.mrb[0].mxu0 %v431
      %v704 = vpop.f32.mrb[0].mxu0
      %v705 = vadd.f32 %v268, %v704
      %v706 = vpop.f32.mrb[0].mxu0
      %v707 = vpop.f32.mrb[0].mxu0
      %v708 = vadd.f32 %v268, %v707
      %v709 = vpop.f32.mrb[0].mxu0
      %710 = vmatprep.mubr.bf16.mxu0 0
      %711 = vmatmul.mubr.bf16.gmra.mrb[0].mxu0 %v432
      %v712 = vpop.f32.mrb[0].mxu0
      %v713 = vadd.f32 %v268, %v712
      %v714 = vpop.f32.mrb[0].mxu0
      %v715 = vpop.f32.mrb[0].mxu0
      %v716 = vadd.f32 %v268, %v715
      %v717 = vpop.f32.mrb[0].mxu0
      %718 = vmatprep.mubr.bf16.mxu0 0
      %719 = vmatmul.mubr.bf16.gmra.mrb[0].mxu0 %v433
      %v720 = vpop.f32.mrb[0].mxu0
      %v721 = vadd.f32 %v268, %v720
      %v722 = vpop.f32.mrb[0].mxu0
      %v723 = vpop.f32.mrb[0].mxu0
      %v724 = vadd.f32 %v268, %v723
      %v725 = vpop.f32.mrb[0].mxu0
      %726 = vmatprep.mubr.bf16.mxu0 0
      %727 = vmatmul.mubr.bf16.gmra.mrb[0].mxu0 %v434
      %v728 = vpop.f32.mrb[0].mxu0
      %v729 = vadd.f32 %v268, %v728
      %v730 = vpop.f32.mrb[0].mxu0
      %v731 = vpop.f32.mrb[0].mxu0
      %v732 = vadd.f32 %v268, %v731
      %v733 = vpop.f32.mrb[0].mxu0
      %734 = vmatprep.mubr.bf16.mxu0 0
      %735 = vmatmul.mubr.bf16.gmra.mrb[0].mxu0 %v435
      %v736 = vpop.f32.mrb[0].mxu0
      %v737 = vadd.f32 %v268, %v736
      %v738 = vpop.f32.mrb[0].mxu0
      %v739 = vpop.f32.mrb[0].mxu0
      %v740 = vadd.f32 %v268, %v739
      %v741 = vpop.f32.mrb[0].mxu0
      %742 = vmatprep.mubr.bf16.mxu0 0
      %743 = vmatmul.mubr.bf16.gmra.mrb[0].mxu0 %v436
      %v744 = vpop.f32.mrb[0].mxu0
      %v745 = vadd.f32 %v268, %v744
      %v746 = vpop.f32.mrb[0].mxu0
      %v747 = vpop.f32.mrb[0].mxu0
      %v748 = vadd.f32 %v268, %v747
      %v749 = vpop.f32.mrb[0].mxu0
      %750 = vmatprep.mubr.bf16.mxu0 0
      %751 = vmatmul.mubr.bf16.gmra.mrb[0].mxu0 %v437
      %v752 = vpop.f32.mrb[0].mxu0
      %v753 = vadd.f32 %v268, %v752
      %v754 = vpop.f32.mrb[0].mxu0
      %v755 = vpop.f32.mrb[0].mxu0
      %v756 = vadd.f32 %v268, %v755
      %v757 = vpop.f32.mrb[0].mxu0
      %758 = vmatprep.mubr.bf16.mxu0 0
      %759 = vmatmul.mubr.bf16.gmra.mrb[0].mxu0 %v438
      %v760 = vpop.f32.mrb[0].mxu0
      %v761 = vadd.f32 %v268, %v760
      %v762 = vpop.f32.mrb[0].mxu0
      %v763 = vpop.f32.mrb[0].mxu0
      %v764 = vadd.f32 %v268, %v763
      %v765 = vpop.f32.mrb[0].mxu0
      %766 = vmatprep.mubr.bf16.mxu0 0
      %767 = vmatmul.mubr.bf16.gmra.mrb[0].mxu0 %v439
      %v768 = vpop.f32.mrb[0].mxu0
      %v769 = vadd.f32 %v268, %v768
      %v770 = vpop.f32.mrb[0].mxu0
      %v771 = vpop.f32.mrb[0].mxu0
      %v772 = vadd.f32 %v268, %v771
      %v773 = vpop.f32.mrb[0].mxu0
      %774 = vmatprep.mubr.bf16.mxu0 0
      %775 = vmatmul.mubr.bf16.gmra.mrb[0].mxu0 %v440
      %v776 = vpop.f32.mrb[0].mxu0
      %v777 = vadd.f32 %v268, %v776
      %v778 = vpop.f32.mrb[0].mxu0
      %v779 = vpop.f32.mrb[0].mxu0
      %v780 = vadd.f32 %v268, %v779
      %v781 = vpop.f32.mrb[0].mxu0
      %782 = vmatprep.mubr.bf16.mxu0 0
      %783 = vmatmul.mubr.bf16.gmra.mrb[0].mxu0 %v441
      %v784 = vpop.f32.mrb[0].mxu0
      %v785 = vadd.f32 %v268, %v784
      %v786 = vpop.f32.mrb[0].mxu0
      %v787 = vpop.f32.mrb[0].mxu0
      %v788 = vadd.f32 %v268, %v787
      %v789 = vpop.f32.mrb[0].mxu0
      %790 = vmatprep.mubr.bf16.mxu0 0
      %791 = vmatmul.mubr.bf16.gmra.mrb[0].mxu0 %v442
      %v792 = vpop.f32.mrb[0].mxu0
      %v793 = vadd.f32 %v268, %v792
      %v794 = vpop.f32.mrb[0].mxu0
      %v795 = vpop.f32.mrb[0].mxu0
      %v796 = vadd.f32 %v268, %v795
      %v797 = vpop.f32.mrb[0].mxu0
      %798 = vmatprep.mubr.bf16.mxu0 0
      %799 = vmatmul.mubr.bf16.gmra.mrb[0].mxu0 %v443
      %v800 = vpop.f32.mrb[0].mxu0
      %v801 = vadd.f32 %v268, %v800
      %v802 = vpop.f32.mrb[0].mxu0
      %v803 = vpop.f32.mrb[0].mxu0
      %v804 = vadd.f32 %v268, %v803
      %v805 = vpop.f32.mrb[0].mxu0
      %806 = vmatprep.mubr.bf16.mxu0 0
      %807 = vmatmul.mubr.bf16.gmra.mrb[0].mxu0 %v444
      %v808 = vpop.f32.mrb[0].mxu0
      %v809 = vadd.f32 %v268, %v808
      %v810 = vpop.f32.mrb[0].mxu0
      %v811 = vpop.f32.mrb[0].mxu0
      %v812 = vadd.f32 %v268, %v811
      %v813 = vpop.f32.mrb[0].mxu0
      %814 = vmatprep.mubr.bf16.mxu0 0
      %815 = vmatmul.mubr.bf16.gmra.mrb[0].mxu0 %v445
      %v816 = vpop.f32.mrb[0].mxu0
      %v817 = vadd.f32 %v268, %v816
      %v818 = vpop.f32.mrb[0].mxu0
      %v819 = vpop.f32.mrb[0].mxu0
      %v820 = vadd.f32 %v268, %v819
      %v821 = vpop.f32.mrb[0].mxu0
      %822 = vmatprep.mubr.bf16.mxu0 0
      %823 = vmatmul.mubr.bf16.gmra.mrb[0].mxu0 %v446
      %v824 = vpop.f32.mrb[0].mxu0
      %v825 = vadd.f32 %v268, %v824
      %v826 = vpop.f32.mrb[0].mxu0
      %v827 = vpop.f32.mrb[0].mxu0
      %v828 = vadd.f32 %v268, %v827
      %v829 = vpop.f32.mrb[0].mxu0
      %830 = vmatprep.mubr.bf16.mxu0 0
      %831 = vmatmul.mubr.bf16.gmra.mrb[0].mxu0 %v447
      %v832 = vpop.f32.mrb[0].mxu0
      %v833 = vadd.f32 %v268, %v832
      %v834 = vpop.f32.mrb[0].mxu0
      %v835 = vpop.f32.mrb[0].mxu0
      %v836 = vadd.f32 %v268, %v835
      %v837 = vpop.f32.mrb[0].mxu0
      %838 = vmatprep.mubr.bf16.mxu0 0
      %839 = vmatmul.mubr.bf16.gmra.mrb[0].mxu0 %v448
      %v840 = vpop.f32.mrb[0].mxu0
      %v841 = vadd.f32 %v268, %v840
      %v842 = vpop.f32.mrb[0].mxu0
      %v843 = vpop.f32.mrb[0].mxu0
      %v844 = vadd.f32 %v268, %v843
      %v845 = vpop.f32.mrb[0].mxu0
      %846 = vmatprep.mubr.bf16.mxu0 0
      %847 = vmatmul.mubr.bf16.gmra.mrb[0].mxu0 %v449
      %v848 = vpop.f32.mrb[0].mxu0
      %v849 = vadd.f32 %v268, %v848
      %v850 = vpop.f32.mrb[0].mxu0
      %v851 = vpop.f32.mrb[0].mxu0
      %v852 = vadd.f32 %v268, %v851
      %v853 = vpop.f32.mrb[0].mxu0
      %854 = vdwg.mxu0
      %v855 = vmax.f32 %v569, 0.0
      %v856 = vmax.f32 %v572, 0.0
      %v857 = vmax.f32 %v577, 0.0
      %v858 = vmax.f32 %v580, 0.0
      %v859 = vmax.f32 %v585, 0.0
      %v860 = vmax.f32 %v588, 0.0
      %v861 = vmax.f32 %v593, 0.0
      %v862 = vmax.f32 %v596, 0.0
      %v863 = vmax.f32 %v601, 0.0
      %v864 = vmax.f32 %v604, 0.0
      %v865 = vmax.f32 %v609, 0.0
      %v866 = vmax.f32 %v612, 0.0
      %v867 = vmax.f32 %v617, 0.0
      %v868 = vmax.f32 %v620, 0.0
      %v869 = vmax.f32 %v625, 0.0
      %v870 = vmax.f32 %v628, 0.0
      %v871 = vmax.f32 %v633, 0.0
      %v872 = vmax.f32 %v636, 0.0
      %v873 = vmax.f32 %v641, 0.0
      %v874 = vmax.f32 %v644, 0.0
      %v875 = vmax.f32 %v649, 0.0
      %v876 = vmax.f32 %v652, 0.0
      %v877 = vmax.f32 %v657, 0.0
      %v878 = vmax.f32 %v660, 0.0
      %v879 = vmax.f32 %v665, 0.0
      %v880 = vmax.f32 %v668, 0.0
      %v881 = vmax.f32 %v673, 0.0
      %v882 = vmax.f32 %v676, 0.0
      %v883 = vmax.f32 %v681, 0.0
      %v884 = vmax.f32 %v684, 0.0
      %v885 = vmax.f32 %v689, 0.0
      %v886 = vmax.f32 %v692, 0.0
      %v887 = vmax.f32 %v697, 0.0
      %v888 = vmax.f32 %v700, 0.0
      %v889 = vmax.f32 %v705, 0.0
      %v890 = vmax.f32 %v708, 0.0
      %v891 = vmax.f32 %v713, 0.0
      %v892 = vmax.f32 %v716, 0.0
      %v893 = vmax.f32 %v721, 0.0
      %v894 = vmax.f32 %v724, 0.0
      %v895 = vmax.f32 %v729, 0.0
      %v896 = vmax.f32 %v732, 0.0
      %v897 = vmax.f32 %v737, 0.0
      %v898 = vmax.f32 %v740, 0.0
      %v899 = vmax.f32 %v745, 0.0
      %v900 = vmax.f32 %v748, 0.0
      %v901 = vmax.f32 %v753, 0.0
      %v902 = vmax.f32 %v756, 0.0
      %v903 = vmax.f32 %v761, 0.0
      %v904 = vmax.f32 %v764, 0.0
      %v905 = vmax.f32 %v769, 0.0
      %v906 = vmax.f32 %v772, 0.0
      %v907 = vmax.f32 %v777, 0.0
      %v908 = vmax.f32 %v780, 0.0
      %v909 = vmax.f32 %v785, 0.0
      %v910 = vmax.f32 %v788, 0.0
      %v911 = vmax.f32 %v793, 0.0
      %v912 = vmax.f32 %v796, 0.0
      %v913 = vmax.f32 %v801, 0.0
      %v914 = vmax.f32 %v804, 0.0
      %v915 = vmax.f32 %v809, 0.0
      %v916 = vmax.f32 %v812, 0.0
      %v917 = vmax.f32 %v817, 0.0
      %v918 = vmax.f32 %v820, 0.0
      %v919 = vmax.f32 %v825, 0.0
      %v920 = vmax.f32 %v828, 0.0
      %v921 = vmax.f32 %v833, 0.0
      %v922 = vmax.f32 %v836, 0.0
      %v923 = vmax.f32 %v841, 0.0
      %v924 = vmax.f32 %v844, 0.0
      %v925 = vmax.f32 %v849, 0.0
      %v926 = vmax.f32 %v852, 0.0
      %v927 = vpack.c.bf16 %v856, %v855
      %v928 = vpack.c.bf16 %v858, %v857
      %v929 = vpack.c.bf16 %v860, %v859
      %v930 = vpack.c.bf16 %v862, %v861
      %v931 = vpack.c.bf16 %v864, %v863
      %v932 = vpack.c.bf16 %v866, %v865
      %v933 = vpack.c.bf16 %v868, %v867
      %v934 = vpack.c.bf16 %v870, %v869
      %v935 = vpack.c.bf16 %v872, %v871
      %v936 = vpack.c.bf16 %v874, %v873
      %v937 = vpack.c.bf16 %v876, %v875
      %v938 = vpack.c.bf16 %v878, %v877
      %v939 = vpack.c.bf16 %v880, %v879
      %v940 = vpack.c.bf16 %v882, %v881
      %v941 = vpack.c.bf16 %v884, %v883
      %v942 = vpack.c.bf16 %v886, %v885
      %v943 = vpack.c.bf16 %v888, %v887
      %v944 = vpack.c.bf16 %v890, %v889
      %v945 = vpack.c.bf16 %v892, %v891
      %v946 = vpack.c.bf16 %v894, %v893
      %v947 = vpack.c.bf16 %v896, %v895
      %v948 = vpack.c.bf16 %v898, %v897
      %v949 = vpack.c.bf16 %v900, %v899
      %v950 = vpack.c.bf16 %v902, %v901
      %v951 = vpack.c.bf16 %v904, %v903
      %v952 = vpack.c.bf16 %v906, %v905
      %v953 = vpack.c.bf16 %v908, %v907
      %v954 = vpack.c.bf16 %v910, %v909
      %v955 = vpack.c.bf16 %v912, %v911
      %v956 = vpack.c.bf16 %v914, %v913
      %v957 = vpack.c.bf16 %v916, %v915
      %v958 = vpack.c.bf16 %v918, %v917
      %v959 = vpack.c.bf16 %v920, %v919
      %v960 = vpack.c.bf16 %v922, %v921
      %v961 = vpack.c.bf16 %v924, %v923
      %v962 = vpack.c.bf16 %v926, %v925
      %v999 = vunpack.c.l.b16 %v927
      %v1000 = vunpack.c.h.b16 %v927
      %v1001 = vunpack.c.l.b16 %v928
      %v1002 = vunpack.c.h.b16 %v928
      %v1003 = vunpack.c.l.b16 %v929
      %v1004 = vunpack.c.h.b16 %v929
      %v1005 = vunpack.c.l.b16 %v930
      %v1006 = vunpack.c.h.b16 %v930
      %v1007 = vunpack.c.l.b16 %v931
      %v1008 = vunpack.c.h.b16 %v931
      %v1009 = vunpack.c.l.b16 %v932
      %v1010 = vunpack.c.h.b16 %v932
      %v1011 = vunpack.c.l.b16 %v933
      %v1012 = vunpack.c.h.b16 %v933
      %v1013 = vunpack.c.l.b16 %v934
      %v1014 = vunpack.c.h.b16 %v934
      %v1015 = vunpack.c.l.b16 %v935
      %v1016 = vunpack.c.h.b16 %v935
      %v1017 = vunpack.c.l.b16 %v936
      %v1018 = vunpack.c.h.b16 %v936
      %v1019 = vunpack.c.l.b16 %v937
      %v1020 = vunpack.c.h.b16 %v937
      %v1021 = vunpack.c.l.b16 %v938
      %v1022 = vunpack.c.h.b16 %v938
      %v1023 = vunpack.c.l.b16 %v939
      %v1024 = vunpack.c.h.b16 %v939
      %v1025 = vunpack.c.l.b16 %v940
      %v1026 = vunpack.c.h.b16 %v940
      %v1027 = vunpack.c.l.b16 %v941
      %v1028 = vunpack.c.h.b16 %v941
      %v1029 = vunpack.c.l.b16 %v942
      %v1030 = vunpack.c.h.b16 %v942
      %v1031 = vunpack.c.l.b16 %v943
      %v1032 = vunpack.c.h.b16 %v943
      %v1033 = vunpack.c.l.b16 %v944
      %v1034 = vunpack.c.h.b16 %v944
      %v1035 = vunpack.c.l.b16 %v945
      %v1036 = vunpack.c.h.b16 %v945
      %v1037 = vunpack.c.l.b16 %v946
      %v1038 = vunpack.c.h.b16 %v946
      %v1039 = vunpack.c.l.b16 %v947
      %v1040 = vunpack.c.h.b16 %v947
      %v1041 = vunpack.c.l.b16 %v948
      %v1042 = vunpack.c.h.b16 %v948
      %v1043 = vunpack.c.l.b16 %v949
      %v1044 = vunpack.c.h.b16 %v949
      %v1045 = vunpack.c.l.b16 %v950
      %v1046 = vunpack.c.h.b16 %v950
      %v1047 = vunpack.c.l.b16 %v951
      %v1048 = vunpack.c.h.b16 %v951
      %v1049 = vunpack.c.l.b16 %v952
      %v1050 = vunpack.c.h.b16 %v952
      %v1051 = vunpack.c.l.b16 %v953
      %v1052 = vunpack.c.h.b16 %v953
      %v1053 = vunpack.c.l.b16 %v954
      %v1054 = vunpack.c.h.b16 %v954
      %v1055 = vunpack.c.l.b16 %v955
      %v1056 = vunpack.c.h.b16 %v955
      %v1057 = vunpack.c.l.b16 %v956
      %v1058 = vunpack.c.h.b16 %v956
      %v1059 = vunpack.c.l.b16 %v957
      %v1060 = vunpack.c.h.b16 %v957
      %v1061 = vunpack.c.l.b16 %v958
      %v1062 = vunpack.c.h.b16 %v958
      %v1063 = vunpack.c.l.b16 %v959
      %v1064 = vunpack.c.h.b16 %v959
      %v1065 = vunpack.c.l.b16 %v960
      %v1066 = vunpack.c.h.b16 %v960
      %v1067 = vunpack.c.l.b16 %v961
      %v1068 = vunpack.c.h.b16 %v961
      %v1069 = vunpack.c.l.b16 %v962
      %v1070 = vunpack.c.h.b16 %v962
      %v1071 = vpack.c.b16 %v999, %v999
      %v1072 = vpack.c.b16 %v1000, %v1000
      %v1073 = vpack.c.b16 %v1001, %v1001
      %v1074 = vpack.c.b16 %v1002, %v1002
      %v1075 = vpack.c.b16 %v1003, %v1003
      %v1076 = vpack.c.b16 %v1004, %v1004
      %v1077 = vpack.c.b16 %v1005, %v1005
      %v1078 = vpack.c.b16 %v1006, %v1006
      %v1079 = vpack.c.b16 %v1007, %v1007
      %v1080 = vpack.c.b16 %v1008, %v1008
      %v1081 = vpack.c.b16 %v1009, %v1009
      %v1082 = vpack.c.b16 %v1010, %v1010
      %v1083 = vpack.c.b16 %v1011, %v1011
      %v1084 = vpack.c.b16 %v1012, %v1012
      %v1085 = vpack.c.b16 %v1013, %v1013
      %v1086 = vpack.c.b16 %v1014, %v1014
      %v1087 = vpack.c.b16 %v1015, %v1015
      %v1088 = vpack.c.b16 %v1016, %v1016
      %v1089 = vpack.c.b16 %v1017, %v1017
      %v1090 = vpack.c.b16 %v1018, %v1018
      %v1091 = vpack.c.b16 %v1019, %v1019
      %v1092 = vpack.c.b16 %v1020, %v1020
      %v1093 = vpack.c.b16 %v1021, %v1021
      %v1094 = vpack.c.b16 %v1022, %v1022
      %v1095 = vpack.c.b16 %v1023, %v1023
      %v1096 = vpack.c.b16 %v1024, %v1024
      %v1097 = vpack.c.b16 %v1025, %v1025
      %v1098 = vpack.c.b16 %v1026, %v1026
      %v1099 = vpack.c.b16 %v1027, %v1027
      %v1100 = vpack.c.b16 %v1028, %v1028
      %v1101 = vpack.c.b16 %v1029, %v1029
      %v1102 = vpack.c.b16 %v1030, %v1030
      %v1103 = vpack.c.b16 %v1031, %v1031
      %v1104 = vpack.c.b16 %v1032, %v1032
      %v1105 = vpack.c.b16 %v1033, %v1033
      %v1106 = vpack.c.b16 %v1034, %v1034
      %v1107 = vpack.c.b16 %v1035, %v1035
      %v1108 = vpack.c.b16 %v1036, %v1036
      %v1109 = vpack.c.b16 %v1037, %v1037
      %v1110 = vpack.c.b16 %v1038, %v1038
      %v1111 = vpack.c.b16 %v1039, %v1039
      %v1112 = vpack.c.b16 %v1040, %v1040
      %v1113 = vpack.c.b16 %v1041, %v1041
      %v1114 = vpack.c.b16 %v1042, %v1042
      %v1115 = vpack.c.b16 %v1043, %v1043
      %v1116 = vpack.c.b16 %v1044, %v1044
      %v1117 = vpack.c.b16 %v1045, %v1045
      %v1118 = vpack.c.b16 %v1046, %v1046
      %v1119 = vpack.c.b16 %v1047, %v1047
      %v1120 = vpack.c.b16 %v1048, %v1048
      %v1121 = vpack.c.b16 %v1049, %v1049
      %v1122 = vpack.c.b16 %v1050, %v1050
      %v1123 = vpack.c.b16 %v1051, %v1051
      %v1124 = vpack.c.b16 %v1052, %v1052
      %v1125 = vpack.c.b16 %v1053, %v1053
      %v1126 = vpack.c.b16 %v1054, %v1054
      %v1127 = vpack.c.b16 %v1055, %v1055
      %v1128 = vpack.c.b16 %v1056, %v1056
      %v1129 = vpack.c.b16 %v1057, %v1057
      %v1130 = vpack.c.b16 %v1058, %v1058
      %v1131 = vpack.c.b16 %v1059, %v1059
      %v1132 = vpack.c.b16 %v1060, %v1060
      %v1133 = vpack.c.b16 %v1061, %v1061
      %v1134 = vpack.c.b16 %v1062, %v1062
      %v1135 = vpack.c.b16 %v1063, %v1063
      %v1136 = vpack.c.b16 %v1064, %v1064
      %v1137 = vpack.c.b16 %v1065, %v1065
      %v1138 = vpack.c.b16 %v1066, %v1066
      %v1139 = vpack.c.b16 %v1067, %v1067
      %v1140 = vpack.c.b16 %v1068, %v1068
      %v1141 = vpack.c.b16 %v1069, %v1069
      %v1142 = vpack.c.b16 %v1070, %v1070
      %1215 = vst [vmem:[%s172] sm:$0xf] %v1071
      %1216 = vst [vmem:[%s172 + $0x4] sm:$0xf] %v1072
      %1217 = vst [vmem:[%s172 + $0x8] sm:$0xf] %v1073
      %1218 = vst [vmem:[%s172 + $0xc] sm:$0xf] %v1074
      %1219 = vst [vmem:[%s172 + $0x10] sm:$0xf] %v1075
      %1220 = vst [vmem:[%s172 + $0x14] sm:$0xf] %v1076
      %1221 = vst [vmem:[%s172 + $0x18] sm:$0xf] %v1077
      %1222 = vst [vmem:[%s172 + $0x1c] sm:$0xf] %v1078
      %1223 = vst [vmem:[%s172 + $0x20] sm:$0xf] %v1079
      %1224 = vst [vmem:[%s172 + $0x24] sm:$0xf] %v1080
      %1225 = vst [vmem:[%s172 + $0x28] sm:$0xf] %v1081
      %1226 = vst [vmem:[%s172 + $0x2c] sm:$0xf] %v1082
      %1227 = vst [vmem:[%s172 + $0x30] sm:$0xf] %v1083
      %1228 = vst [vmem:[%s172 + $0x34] sm:$0xf] %v1084
      %1229 = vst [vmem:[%s172 + $0x38] sm:$0xf] %v1085
      %1230 = vst [vmem:[%s172 + $0x3c] sm:$0xf] %v1086
      %1231 = vst [vmem:[%s172 + $0x40] sm:$0xf] %v1087
      %1232 = vst [vmem:[%s172 + $0x44] sm:$0xf] %v1088
      %1233 = vst [vmem:[%s172 + $0x48] sm:$0xf] %v1089
      %1234 = vst [vmem:[%s172 + $0x4c] sm:$0xf] %v1090
      %1235 = vst [vmem:[%s172 + $0x50] sm:$0xf] %v1091
      %1236 = vst [vmem:[%s172 + $0x54] sm:$0xf] %v1092
      %1237 = vst [vmem:[%s172 + $0x58] sm:$0xf] %v1093
      %1238 = vst [vmem:[%s172 + $0x5c] sm:$0xf] %v1094
      %1239 = vst [vmem:[%s172 + $0x60] sm:$0xf] %v1095
      %1240 = vst [vmem:[%s172 + $0x64] sm:$0xf] %v1096
      %1241 = vst [vmem:[%s172 + $0x68] sm:$0xf] %v1097
      %1242 = vst [vmem:[%s172 + $0x6c] sm:$0xf] %v1098
      %1243 = vst [vmem:[%s172 + $0x70] sm:$0xf] %v1099
      %1244 = vst [vmem:[%s172 + $0x74] sm:$0xf] %v1100
      %1245 = vst [vmem:[%s172 + $0x78] sm:$0xf] %v1101
      %1246 = vst [vmem:[%s172 + $0x7c] sm:$0xf] %v1102
      %1247 = vst [vmem:[%s172 + $0x80] sm:$0xf] %v1103
      %1248 = vst [vmem:[%s172 + $0x84] sm:$0xf] %v1104
      %1249 = vst [vmem:[%s172 + $0x88] sm:$0xf] %v1105
      %1250 = vst [vmem:[%s172 + $0x8c] sm:$0xf] %v1106
      %1251 = vst [vmem:[%s172 + $0x90] sm:$0xf] %v1107
      %1252 = vst [vmem:[%s172 + $0x94] sm:$0xf] %v1108
      %1253 = vst [vmem:[%s172 + $0x98] sm:$0xf] %v1109
      %1254 = vst [vmem:[%s172 + $0x9c] sm:$0xf] %v1110
      %1255 = vst [vmem:[%s172 + $0xa0] sm:$0xf] %v1111
      %1256 = vst [vmem:[%s172 + $0xa4] sm:$0xf] %v1112
      %1257 = vst [vmem:[%s172 + $0xa8] sm:$0xf] %v1113
      %1258 = vst [vmem:[%s172 + $0xac] sm:$0xf] %v1114
      %1259 = vst [vmem:[%s172 + $0xb0] sm:$0xf] %v1115
      %1260 = vst [vmem:[%s172 + $0xb4] sm:$0xf] %v1116
      %1261 = vst [vmem:[%s172 + $0xb8] sm:$0xf] %v1117
      %1262 = vst [vmem:[%s172 + $0xbc] sm:$0xf] %v1118
      %1263 = vst [vmem:[%s172 + $0xc0] sm:$0xf] %v1119
      %1264 = vst [vmem:[%s172 + $0xc4] sm:$0xf] %v1120
      %1265 = vst [vmem:[%s172 + $0xc8] sm:$0xf] %v1121
      %1266 = vst [vmem:[%s172 + $0xcc] sm:$0xf] %v1122
      %1267 = vst [vmem:[%s172 + $0xd0] sm:$0xf] %v1123
      %1268 = vst [vmem:[%s172 + $0xd4] sm:$0xf] %v1124
      %1269 = vst [vmem:[%s172 + $0xd8] sm:$0xf] %v1125
      %1270 = vst [vmem:[%s172 + $0xdc] sm:$0xf] %v1126
      %1271 = vst [vmem:[%s172 + $0xe0] sm:$0xf] %v1127
      %1272 = vst [vmem:[%s172 + $0xe4] sm:$0xf] %v1128
      %1273 = vst [vmem:[%s172 + $0xe8] sm:$0xf] %v1129
      %1274 = vst [vmem:[%s172 + $0xec] sm:$0xf] %v1130
      %1275 = vst [vmem:[%s172 + $0xf0] sm:$0xf] %v1131
      %1276 = vst [vmem:[%s172 + $0xf4] sm:$0xf] %v1132
      %1277 = vst [vmem:[%s172 + $0xf8] sm:$0xf] %v1133
      %1278 = vst [vmem:[%s172 + $0xfc] sm:$0xf] %v1134
      %1279 = vst [vmem:[%s172 + $0x100] sm:$0xf] %v1135
      %1280 = vst [vmem:[%s172 + $0x104] sm:$0xf] %v1136
      %1281 = vst [vmem:[%s172 + $0x108] sm:$0xf] %v1137
      %1282 = vst [vmem:[%s172 + $0x10c] sm:$0xf] %v1138
      %1283 = vst [vmem:[%s172 + $0x110] sm:$0xf] %v1139
      %1284 = vst [vmem:[%s172 + $0x114] sm:$0xf] %v1140
      %1285 = vst [vmem:[%s172 + $0x118] sm:$0xf] %v1141
      %1286 = vst [vmem:[%s172 + $0x11c] sm:$0xf] %v1142
      %s1287 = smul.u32 72, %s14
      %p1288 = scmp.lt.s32.totalorder %s1287, 143
      %s1289 = scalar_select %p1288, %s1287, 143
      %s1290 = smul.addr %s1289, 4
      %s1291 = scalar_lea.vmem %s3, %s1290
      // Predicated region
      $region33: #{cnn_forward.9} parent=31 // pred_check
        %p1292 = pneg %p100
      $region34: #{cnn_forward.9} parent=31 // pred_check_branch
        %1294 = sbr.rel (%p1292) target = $region36
      $region35: #{cnn_forward.9} parent=31 // pred_region
        %s1295 = smul.u32 72, %s14
      $region36: #{cnn_forward.9} parent=31 // pred_fallthru
        _
    $region32: #{cnn_forward.9} parent=5 // pred_fallthru
      _
    %p1296 = scmp.le.s32.totalorder 2, %s9
    // Predicated region
    $region37: #{cnn_forward.9} parent=5 // pred_check
      %p1297 = pneg %p1296
    $region38: #{cnn_forward.9} parent=5 // pred_check_branch
      %1299 = sbr.rel (%p1297) target = $region40
    $region39: #{cnn_forward.9} parent=5 // pred_region
      %s1300 = ssub.s32 %s9, 2
      // Predicated region
      $region41: #{cnn_forward.9} parent=39 // pred_check
        %p1301 = pneg %p106
      $region42: #{cnn_forward.9} parent=39 // pred_check_branch
        %1303 = sbr.rel (%p1301) target = $region44
      $region43: #{cnn_forward.9} parent=39 // pred_region
        %s1304 = smul.u32 72, %s15
        %p1305 = scmp.lt.s32.totalorder %s1304, 143
        %s1306 = scalar_select %p1305, %s1304, 143
        %s1307 = smul.addr %s1306, 4
        %s1308 = scalar_lea.vmem %s3, %s1307
      $region44: #{cnn_forward.9} parent=39 // pred_fallthru
        _
    $region40: #{cnn_forward.9} parent=5 // pred_fallthru
      _
  $region6: #{cnn_forward.9} parent=0 // loop_footer
    %s13 = sadd.s32 1, %s9
  $region7: #{cnn_forward.9} parent=0 // loop_footer_branch
    %8 = sbr.rel target = $region3
  $region8: #{cnn_forward.9} parent=0 // loop_exit
    _

// kernel: cnn_forward.10
$region0: #{cnn_forward.10}
  #allocation0 [shape = 'u32[]', space=smem, size = 0x4, offset = 0x4, fixed_abs, tag = 'smem constant byte address 0x4 - core index']
  #allocation1 [shape = 'u32[144,128]{1,0:T(1,128)}', space=vmem, size = 0x12000, scoped, tag = 'internal scratch']
  %s0 = inlined_call_operand.vmem [shape: bf16[24,2,12,256], index: 0, kind: input, shape index: {}]
  %s1 = inlined_call_operand.vmem [shape: bf16[24,12,128], index: 1, kind: output, shape index: {}]
  %s2 = sld [smem:[#allocation0]]
  $region14: #{cnn_forward.10} parent=0
    _
  %s4 = ssub.s32 1, %s2
  %s5 = scalar_select 0, %s4, %s2
  // Predicated region
  $region2: #{cnn_forward.10} parent=0 // pred_check
    _
  $region3: #{cnn_forward.10} parent=0 // pred_check_branch
    %7 = sbr.rel (0) target = $region5
  $region4: #{cnn_forward.10} parent=0 // pred_region
    _
  $region5: #{cnn_forward.10} parent=0 // pred_fallthru
    _
  %v8 = vld [vmem:[%s0] sm:$0xff]
  %v9 = vld [vmem:[%s0 + $0x8] sm:$0x33]
  %v10 = vld [vmem:[%s0 + $0x10] sm:$0xff]
  %v11 = vld [vmem:[%s0 + $0x18] sm:$0x33]
  %v12 = vld [vmem:[%s0 + $0x20] sm:$0xff]
  %v13 = vld [vmem:[%s0 + $0x28] sm:$0x33]
  %v14 = vld [vmem:[%s0 + $0x30] sm:$0xff]
  %v15 = vld [vmem:[%s0 + $0x38] sm:$0x33]
  %v16 = vld [vmem:[%s0 + $0x40] sm:$0xff]
  %v17 = vld [vmem:[%s0 + $0x48] sm:$0x33]
  %v18 = vld [vmem:[%s0 + $0x50] sm:$0xff]
  %v19 = vld [vmem:[%s0 + $0x58] sm:$0x33]
  %v20 = vld [vmem:[%s0 + $0x60] sm:$0xff]
  %v21 = vld [vmem:[%s0 + $0x68] sm:$0x33]
  %v22 = vld [vmem:[%s0 + $0x70] sm:$0xff]
  %v23 = vld [vmem:[%s0 + $0x78] sm:$0x33]
  %v24 = vld [vmem:[%s0 + $0x80] sm:$0xff]
  %v25 = vld [vmem:[%s0 + $0x88] sm:$0x33]
  %v26 = vld [vmem:[%s0 + $0x90] sm:$0xff]
  %v27 = vld [vmem:[%s0 + $0x98] sm:$0x33]
  %v28 = vld [vmem:[%s0 + $0xa0] sm:$0xff]
  %v29 = vld [vmem:[%s0 + $0xa8] sm:$0x33]
  %v30 = vld [vmem:[%s0 + $0xb0] sm:$0xff]
  %v31 = vld [vmem:[%s0 + $0xb8] sm:$0x33]
  %v32 = vld [vmem:[%s0 + $0xc0] sm:$0xff]
  %v33 = vld [vmem:[%s0 + $0xc8] sm:$0x33]
  %v34 = vld [vmem:[%s0 + $0xd0] sm:$0xff]
  %v35 = vld [vmem:[%s0 + $0xd8] sm:$0x33]
  %v36 = vld [vmem:[%s0 + $0xe0] sm:$0xff]
  %v37 = vld [vmem:[%s0 + $0xe8] sm:$0x33]
  %v38 = vld [vmem:[%s0 + $0xf0] sm:$0xff]
  %v39 = vld [vmem:[%s0 + $0xf8] sm:$0x33]
  %v40 = vld [vmem:[%s0 + $0x100] sm:$0xff]
  %v41 = vld [vmem:[%s0 + $0x108] sm:$0x33]
  %v42 = vld [vmem:[%s0 + $0x110] sm:$0xff]
  %v43 = vld [vmem:[%s0 + $0x118] sm:$0x33]
  %v44 = vld [vmem:[%s0 + $0x120] sm:$0xff]
  %v45 = vld [vmem:[%s0 + $0x128] sm:$0x33]
  %v46 = vld [vmem:[%s0 + $0x130] sm:$0xff]
  %v47 = vld [vmem:[%s0 + $0x138] sm:$0x33]
  %v48 = vld [vmem:[%s0 + $0x140] sm:$0xff]
  %v49 = vld [vmem:[%s0 + $0x148] sm:$0x33]
  %v50 = vld [vmem:[%s0 + $0x150] sm:$0xff]
  %v51 = vld [vmem:[%s0 + $0x158] sm:$0x33]
  %v52 = vld [vmem:[%s0 + $0x160] sm:$0xff]
  %v53 = vld [vmem:[%s0 + $0x168] sm:$0x33]
  %v54 = vld [vmem:[%s0 + $0x170] sm:$0xff]
  %v55 = vld [vmem:[%s0 + $0x178] sm:$0x33]
  %v56 = vld [vmem:[%s0 + $0x180] sm:$0xff]
  %v57 = vld [vmem:[%s0 + $0x188] sm:$0x33]
  %v58 = vld [vmem:[%s0 + $0x190] sm:$0xff]
  %v59 = vld [vmem:[%s0 + $0x198] sm:$0x33]
  %v60 = vld [vmem:[%s0 + $0x1a0] sm:$0xff]
  %v61 = vld [vmem:[%s0 + $0x1a8] sm:$0x33]
  %v62 = vld [vmem:[%s0 + $0x1b0] sm:$0xff]
  %v63 = vld [vmem:[%s0 + $0x1b8] sm:$0x33]
  %v64 = vld [vmem:[%s0 + $0x1c0] sm:$0xff]
  %v65 = vld [vmem:[%s0 + $0x1c8] sm:$0x33]
  %v66 = vld [vmem:[%s0 + $0x1d0] sm:$0xff]
  %v67 = vld [vmem:[%s0 + $0x1d8] sm:$0x33]
  %v68 = vld [vmem:[%s0 + $0x1e0] sm:$0xff]
  %v69 = vld [vmem:[%s0 + $0x1e8] sm:$0x33]
  %v70 = vld [vmem:[%s0 + $0x1f0] sm:$0xff]
  %v71 = vld [vmem:[%s0 + $0x1f8] sm:$0x33]
  %v72 = vld [vmem:[%s0 + $0x200] sm:$0xff]
  %v73 = vld [vmem:[%s0 + $0x208] sm:$0x33]
  %v74 = vld [vmem:[%s0 + $0x210] sm:$0xff]
  %v75 = vld [vmem:[%s0 + $0x218] sm:$0x33]
  %v76 = vld [vmem:[%s0 + $0x220] sm:$0xff]
  %v77 = vld [vmem:[%s0 + $0x228] sm:$0x33]
  %v78 = vld [vmem:[%s0 + $0x230] sm:$0xff]
  %v79 = vld [vmem:[%s0 + $0x238] sm:$0x33]
  %v80 = vld [vmem:[%s0 + $0x240] sm:$0xff]
  %v81 = vld [vmem:[%s0 + $0x248] sm:$0x33]
  %v82 = vld [vmem:[%s0 + $0x250] sm:$0xff]
  %v83 = vld [vmem:[%s0 + $0x258] sm:$0x33]
  %v84 = vld [vmem:[%s0 + $0x260] sm:$0xff]
  %v85 = vld [vmem:[%s0 + $0x268] sm:$0x33]
  %v86 = vld [vmem:[%s0 + $0x270] sm:$0xff]
  %v87 = vld [vmem:[%s0 + $0x278] sm:$0x33]
  %v88 = vld [vmem:[%s0 + $0x280] sm:$0xff]
  %v89 = vld [vmem:[%s0 + $0x288] sm:$0x33]
  %v90 = vld [vmem:[%s0 + $0x290] sm:$0xff]
  %v91 = vld [vmem:[%s0 + $0x298] sm:$0x33]
  %v92 = vld [vmem:[%s0 + $0x2a0] sm:$0xff]
  %v93 = vld [vmem:[%s0 + $0x2a8] sm:$0x33]
  %v94 = vld [vmem:[%s0 + $0x2b0] sm:$0xff]
  %v95 = vld [vmem:[%s0 + $0x2b8] sm:$0x33]
  %v96 = vld [vmem:[%s0 + $0x2c0] sm:$0xff]
  %v97 = vld [vmem:[%s0 + $0x2c8] sm:$0x33]
  %v98 = vld [vmem:[%s0 + $0x2d0] sm:$0xff]
  %v99 = vld [vmem:[%s0 + $0x2d8] sm:$0x33]
  %v100 = vld [vmem:[%s0 + $0x2e0] sm:$0xff]
  %v101 = vld [vmem:[%s0 + $0x2e8] sm:$0x33]
  %v102 = vld [vmem:[%s0 + $0x2f0] sm:$0xff]
  %v103 = vld [vmem:[%s0 + $0x2f8] sm:$0x33]
  %v104 = vmax.bf16 %v8, %v10
  %v105 = vmax.bf16 %v9, %v11
  %v106 = vmax.bf16 %v12, %v14
  %v107 = vmax.bf16 %v13, %v15
  %v108 = vmax.bf16 %v16, %v18
  %v109 = vmax.bf16 %v17, %v19
  %v110 = vmax.bf16 %v20, %v22
  %v111 = vmax.bf16 %v21, %v23
  %v112 = vmax.bf16 %v24, %v26
  %v113 = vmax.bf16 %v25, %v27
  %v114 = vmax.bf16 %v28, %v30
  %v115 = vmax.bf16 %v29, %v31
  %v116 = vmax.bf16 %v32, %v34
  %v117 = vmax.bf16 %v33, %v35
  %v118 = vmax.bf16 %v36, %v38
  %v119 = vmax.bf16 %v37, %v39
  %v120 = vmax.bf16 %v40, %v42
  %v121 = vmax.bf16 %v41, %v43
  %v122 = vmax.bf16 %v44, %v46
  %v123 = vmax.bf16 %v45, %v47
  %v124 = vmax.bf16 %v48, %v50
  %v125 = vmax.bf16 %v49, %v51
  %v126 = vmax.bf16 %v52, %v54
  %v127 = vmax.bf16 %v53, %v55
  %v128 = vmax.bf16 %v56, %v58
  %v129 = vmax.bf16 %v57, %v59
  %v130 = vmax.bf16 %v60, %v62
  %v131 = vmax.bf16 %v61, %v63
  %v132 = vmax.bf16 %v64, %v66
  %v133 = vmax.bf16 %v65, %v67
  %v134 = vmax.bf16 %v68, %v70
  %v135 = vmax.bf16 %v69, %v71
  %v136 = vmax.bf16 %v72, %v74
  %v137 = vmax.bf16 %v73, %v75
  %v138 = vmax.bf16 %v76, %v78
  %v139 = vmax.bf16 %v77, %v79
  %v140 = vmax.bf16 %v80, %v82
  %v141 = vmax.bf16 %v81, %v83
  %v142 = vmax.bf16 %v84, %v86
  %v143 = vmax.bf16 %v85, %v87
  %v144 = vmax.bf16 %v88, %v90
  %v145 = vmax.bf16 %v89, %v91
  %v146 = vmax.bf16 %v92, %v94
  %v147 = vmax.bf16 %v93, %v95
  %v148 = vmax.bf16 %v96, %v98
  %v149 = vmax.bf16 %v97, %v99
  %v150 = vmax.bf16 %v100, %v102
  %v151 = vmax.bf16 %v101, %v103
  %v200 = vrot.slane %v104, 4
  %v201 = vrot.slane %v105, 4
  %v202 = vrot.slane %v106, 4
  %v203 = vrot.slane %v107, 4
  %v204 = vrot.slane %v108, 4
  %v205 = vrot.slane %v109, 4
  %v206 = vrot.slane %v110, 4
  %v207 = vrot.slane %v111, 4
  %v208 = vrot.slane %v112, 4
  %v209 = vrot.slane %v113, 4
  %v210 = vrot.slane %v114, 4
  %v211 = vrot.slane %v115, 4
  %v212 = vrot.slane %v116, 4
  %v213 = vrot.slane %v117, 4
  %v214 = vrot.slane %v118, 4
  %v215 = vrot.slane %v119, 4
  %v216 = vrot.slane %v120, 4
  %v217 = vrot.slane %v121, 4
  %v218 = vrot.slane %v122, 4
  %v219 = vrot.slane %v123, 4
  %v220 = vrot.slane %v124, 4
  %v221 = vrot.slane %v125, 4
  %v222 = vrot.slane %v126, 4
  %v223 = vrot.slane %v127, 4
  %v224 = vrot.slane %v128, 4
  %v225 = vrot.slane %v129, 4
  %v226 = vrot.slane %v130, 4
  %v227 = vrot.slane %v131, 4
  %v228 = vrot.slane %v132, 4
  %v229 = vrot.slane %v133, 4
  %v230 = vrot.slane %v134, 4
  %v231 = vrot.slane %v135, 4
  %v232 = vrot.slane %v136, 4
  %v233 = vrot.slane %v137, 4
  %v234 = vrot.slane %v138, 4
  %v235 = vrot.slane %v139, 4
  %v236 = vrot.slane %v140, 4
  %v237 = vrot.slane %v141, 4
  %v238 = vrot.slane %v142, 4
  %v239 = vrot.slane %v143, 4
  %v240 = vrot.slane %v144, 4
  %v241 = vrot.slane %v145, 4
  %v242 = vrot.slane %v146, 4
  %v243 = vrot.slane %v147, 4
  %v244 = vrot.slane %v148, 4
  %v245 = vrot.slane %v149, 4
  %v246 = vrot.slane %v150, 4
  %v247 = vrot.slane %v151, 4
  %v296 = vmax.bf16 %v104, %v200
  %v297 = vmax.bf16 %v105, %v201
  %v298 = vmax.bf16 %v106, %v202
  %v299 = vmax.bf16 %v107, %v203
  %v300 = vmax.bf16 %v108, %v204
  %v301 = vmax.bf16 %v109, %v205
  %v302 = vmax.bf16 %v110, %v206
  %v303 = vmax.bf16 %v111, %v207
  %v304 = vmax.bf16 %v112, %v208
  %v305 = vmax.bf16 %v113, %v209
  %v306 = vmax.bf16 %v114, %v210
  %v307 = vmax.bf16 %v115, %v211
  %v308 = vmax.bf16 %v116, %v212
  %v309 = vmax.bf16 %v117, %v213
  %v310 = vmax.bf16 %v118, %v214
  %v311 = vmax.bf16 %v119, %v215
  %v312 = vmax.bf16 %v120, %v216
  %v313 = vmax.bf16 %v121, %v217
  %v314 = vmax.bf16 %v122, %v218
  %v315 = vmax.bf16 %v123, %v219
  %v316 = vmax.bf16 %v124, %v220
  %v317 = vmax.bf16 %v125, %v221
  %v318 = vmax.bf16 %v126, %v222
  %v319 = vmax.bf16 %v127, %v223
  %v320 = vmax.bf16 %v128, %v224
  %v321 = vmax.bf16 %v129, %v225
  %v322 = vmax.bf16 %v130, %v226
  %v323 = vmax.bf16 %v131, %v227
  %v324 = vmax.bf16 %v132, %v228
  %v325 = vmax.bf16 %v133, %v229
  %v326 = vmax.bf16 %v134, %v230
  %v327 = vmax.bf16 %v135, %v231
  %v328 = vmax.bf16 %v136, %v232
  %v329 = vmax.bf16 %v137, %v233
  %v330 = vmax.bf16 %v138, %v234
  %v331 = vmax.bf16 %v139, %v235
  %v332 = vmax.bf16 %v140, %v236
  %v333 = vmax.bf16 %v141, %v237
  %v334 = vmax.bf16 %v142, %v238
  %v335 = vmax.bf16 %v143, %v239
  %v336 = vmax.bf16 %v144, %v240
  %v337 = vmax.bf16 %v145, %v241
  %v338 = vmax.bf16 %v146, %v242
  %v339 = vmax.bf16 %v147, %v243
  %v340 = vmax.bf16 %v148, %v244
  %v341 = vmax.bf16 %v149, %v245
  %v342 = vmax.bf16 %v150, %v246
  %v343 = vmax.bf16 %v151, %v247
  %344 = vst [vmem:[%s1] sm:$0xf] %v296
  %345 = vst [vmem:[%s1 + $0x4] sm:$0x3] %v297
  %346 = vst [vmem:[%s1 + $0x8] sm:$0xf] %v298
  %347 = vst [vmem:[%s1 + $0xc] sm:$0x3] %v299
  %348 = vst [vmem:[%s1 + $0x10] sm:$0xf] %v300
  %349 = vst [vmem:[%s1 + $0x14] sm:$0x3] %v301
  %350 = vst [vmem:[%s1 + $0x18] sm:$0xf] %v302
  %351 = vst [vmem:[%s1 + $0x1c] sm:$0x3] %v303
  %352 = vst [vmem:[%s1 + $0x20] sm:$0xf] %v304
  %353 = vst [vmem:[%s1 + $0x24] sm:$0x3] %v305
  %354 = vst [vmem:[%s1 + $0x28] sm:$0xf] %v306
  %355 = vst [vmem:[%s1 + $0x2c] sm:$0x3] %v307
  %356 = vst [vmem:[%s1 + $0x30] sm:$0xf] %v308
  %357 = vst [vmem:[%s1 + $0x34] sm:$0x3] %v309
  %358 = vst [vmem:[%s1 + $0x38] sm:$0xf] %v310
  %359 = vst [vmem:[%s1 + $0x3c] sm:$0x3] %v311
  %360 = vst [vmem:[%s1 + $0x40] sm:$0xf] %v312
  %361 = vst [vmem:[%s1 + $0x44] sm:$0x3] %v313
  %362 = vst [vmem:[%s1 + $0x48] sm:$0xf] %v314
  %363 = vst [vmem:[%s1 + $0x4c] sm:$0x3] %v315
  %364 = vst [vmem:[%s1 + $0x50] sm:$0xf] %v316
  %365 = vst [vmem:[%s1 + $0x54] sm:$0x3] %v317
  %366 = vst [vmem:[%s1 + $0x58] sm:$0xf] %v318
  %367 = vst [vmem:[%s1 + $0x5c] sm:$0x3] %v319
  %368 = vst [vmem:[%s1 + $0x60] sm:$0xf] %v320
  %369 = vst [vmem:[%s1 + $0x64] sm:$0x3] %v321
  %370 = vst [vmem:[%s1 + $0x68] sm:$0xf] %v322
  %371 = vst [vmem:[%s1 + $0x6c] sm:$0x3] %v323
  %372 = vst [vmem:[%s1 + $0x70] sm:$0xf] %v324
  %373 = vst [vmem:[%s1 + $0x74] sm:$0x3] %v325
  %374 = vst [vmem:[%s1 + $0x78] sm:$0xf] %v326
  %375 = vst [vmem:[%s1 + $0x7c] sm:$0x3] %v327
  %376 = vst [vmem:[%s1 + $0x80] sm:$0xf] %v328
  %377 = vst [vmem:[%s1 + $0x84] sm:$0x3] %v329
  %378 = vst [vmem:[%s1 + $0x88] sm:$0xf] %v330
  %379 = vst [vmem:[%s1 + $0x8c] sm:$0x3] %v331
  %380 = vst [vmem:[%s1 + $0x90] sm:$0xf] %v332
  %381 = vst [vmem:[%s1 + $0x94] sm:$0x3] %v333
  %382 = vst [vmem:[%s1 + $0x98] sm:$0xf] %v334
  %383 = vst [vmem:[%s1 + $0x9c] sm:$0x3] %v335
  %384 = vst [vmem:[%s1 + $0xa0] sm:$0xf] %v336
  %385 = vst [vmem:[%s1 + $0xa4] sm:$0x3] %v337
  %386 = vst [vmem:[%s1 + $0xa8] sm:$0xf] %v338
  %387 = vst [vmem:[%s1 + $0xac] sm:$0x3] %v339
  %388 = vst [vmem:[%s1 + $0xb0] sm:$0xf] %v340
  %389 = vst [vmem:[%s1 + $0xb4] sm:$0x3] %v341
  %390 = vst [vmem:[%s1 + $0xb8] sm:$0xf] %v342
  %391 = vst [vmem:[%s1 + $0xbc] sm:$0x3] %v343
  // Predicated region
  $region6: #{cnn_forward.10} parent=0 // pred_check
    _
  $region7: #{cnn_forward.10} parent=0 // pred_check_branch
    %393 = sbr.rel (0) target = $region9
  $region8: #{cnn_forward.10} parent=0 // pred_region
    _
  $region9: #{cnn_forward.10} parent=0 // pred_fallthru
    _
  // Predicated region
  $region10: #{cnn_forward.10} parent=0 // pred_check
    _
  $region11: #{cnn_forward.10} parent=0 // pred_check_branch
    %395 = sbr.rel (0) target = $region13
  $region12: #{cnn_forward.10} parent=0 // pred_region
    _
  $region13: #{cnn_forward.10} parent=0 // pred_fallthru
    _

// kernel: cnn_forward.11
$region0: #{cnn_forward.11}
  #allocation0 [shape = 'u32[]', space=smem, size = 0x4, offset = 0x4, fixed_abs, tag = 'smem constant byte address 0x4 - core index']
  #allocation1 [shape = 'u32[144,128]{1,0:T(1,128)}', space=vmem, size = 0x12000, scoped, tag = 'internal scratch']
  %s0 = inlined_call_operand.vmem [shape: bf16[224,128], index: 0, kind: input, shape index: {}]
  %s1 = inlined_call_operand.vmem [shape: bf16[128,128], index: 1, kind: input, shape index: {}]
  %s2 = inlined_call_operand.vmem [shape: f32[1,128], index: 2, kind: input, shape index: {}]
  %s3 = inlined_call_operand.vmem [shape: bf16[224,128], index: 3, kind: output, shape index: {}]
  %s4 = sld [smem:[#allocation0]]
  $region45: #{cnn_forward.11} parent=0
    _
  %s6 = ssub.s32 1, %s4
  %s7 = scalar_select 0, %s6, %s4
  loop: start=0, step=1, limit=4
  $region2: #{cnn_forward.11} parent=0 // loop_pre_header
    _
  $region3: #{cnn_forward.11} parent=0 // loop_header
    %s9 = sphi 0, %s13
    %p10 = scmp.ge.s32.totalorder %s9, 4
    %s19 = sphi 0, %s21
    %s22 = sphi 0, %s19
    %s23 = sphi 0, %s22
    %s39 = sphi 0, %s23
    %s43 = sphi 0, %s43
    %s45 = sphi 0, %s43
    %s46 = sphi 0, %s45
    %s60 = sphi 0, %s46
    %s64 = sphi 0, %s64
    %s66 = sphi 0, %s64
    %s67 = sphi 0, %s66
    %s81 = sphi 0, %s67
    %s87 = sphi 0, %s89
    %s90 = sphi 0, %s87
    %s91 = sphi 0, %s90
    %s107 = sphi 0, %s91
  $region4: #{cnn_forward.11} parent=0 // loop_header_branch
    %12 = sbr.rel (%p10) target = $region8
  $region5: #{cnn_forward.11} parent=0 // loop_body
    %s14 = ssub.s32 %s9, 1
    %s15 = ssub.s32 %s9, 2
    %s16 = sadd.s32 %s9, 1
    %s17 = ssub.s32 %s9, %s16
    %p18 = scmp.eq.s32.totalorder %s17, 0
    %s20 = sadd.s32 %s19, 1
    %s21 = scalar_select %p18, %s19, %s20
    %p24 = pneg %p18
    %p25 = scmp.eq.s32.totalorder %s9, 1
    %p26 = por %p24, %p25
    %p27 = scmp.ne.s32.totalorder %s19, %s22
    %p28 = scmp.eq.s32.totalorder %s9, 0
    %p29 = por %p27, %p28
    %p30 = scmp.ne.s32.totalorder %s19, %s22
    %p31 = scmp.eq.s32.totalorder %s14, 1
    %p32 = por %p30, %p31
    %p33 = scmp.ne.s32.totalorder %s22, %s23
    %p34 = scmp.eq.s32.totalorder %s14, 0
    %p35 = por %p33, %p34
    %p36 = scmp.ne.s32.totalorder %s22, %s23
    %p37 = scmp.eq.s32.totalorder %s15, 1
    %p38 = por %p36, %p37
    %p40 = scmp.ne.s32.totalorder %s23, %s39
    %p41 = scmp.eq.s32.totalorder %s15, 0
    %p42 = por %p40, %p41
    %s44 = sadd.s32 %s43, 1
    %p47 = scmp.eq.s32.totalorder %s9, 1
    %p48 = scmp.ne.s32.totalorder %s43, %s45
    %p49 = scmp.eq.s32.totalorder %s9, 0
    %p50 = por %p48, %p49
    %p51 = scmp.ne.s32.totalorder %s43, %s45
    %p52 = scmp.eq.s32.totalorder %s14, 1
    %p53 = por %p51, %p52
    %p54 = scmp.ne.s32.totalorder %s45, %s46
    %p55 = scmp.eq.s32.totalorder %s14, 0
    %p56 = por %p54, %p55
    %p57 = scmp.ne.s32.totalorder %s45, %s46
    %p58 = scmp.eq.s32.totalorder %s15, 1
    %p59 = por %p57, %p58
    %p61 = scmp.ne.s32.totalorder %s46, %s60
    %p62 = scmp.eq.s32.totalorder %s15, 0
    %p63 = por %p61, %p62
    %s65 = sadd.s32 %s64, 1
    %p68 = scmp.eq.s32.totalorder %s9, 1
    %p69 = scmp.ne.s32.totalorder %s64, %s66
    %p70 = scmp.eq.s32.totalorder %s9, 0
    %p71 = por %p69, %p70
    %p72 = scmp.ne.s32.totalorder %s64, %s66
    %p73 = scmp.eq.s32.totalorder %s14, 1
    %p74 = por %p72, %p73
    %p75 = scmp.ne.s32.totalorder %s66, %s67
    %p76 = scmp.eq.s32.totalorder %s14, 0
    %p77 = por %p75, %p76
    %p78 = scmp.ne.s32.totalorder %s66, %s67
    %p79 = scmp.eq.s32.totalorder %s15, 1
    %p80 = por %p78, %p79
    %p82 = scmp.ne.s32.totalorder %s67, %s81
    %p83 = scmp.eq.s32.totalorder %s15, 0
    %p84 = por %p82, %p83
    %s85 = ssub.s32 %s9, %s16
    %p86 = scmp.eq.s32.totalorder %s85, 0
    %s88 = sadd.s32 %s87, 1
    %s89 = scalar_select %p86, %s87, %s88
    %p92 = pneg %p86
    %p93 = scmp.eq.s32.totalorder %s9, 1
    %p94 = por %p92, %p93
    %p95 = scmp.ne.s32.totalorder %s87, %s90
    %p96 = scmp.eq.s32.totalorder %s9, 0
    %p97 = por %p95, %p96
    %p98 = scmp.ne.s32.totalorder %s87, %s90
    %p99 = scmp.eq.s32.totalorder %s14, 1
    %p100 = por %p98, %p99
    %p101 = scmp.ne.s32.totalorder %s90, %s91
    %p102 = scmp.eq.s32.totalorder %s14, 0
    %p103 = por %p101, %p102
    %p104 = scmp.ne.s32.totalorder %s90, %s91
    %p105 = scmp.eq.s32.totalorder %s15, 1
    %p106 = por %p104, %p105
    %p108 = scmp.ne.s32.totalorder %s91, %s107
    %p109 = scmp.eq.s32.totalorder %s15, 0
    %p110 = por %p108, %p109
    %p111 = scmp.le.s32.totalorder 1, %s9
    %p112 = scmp.lt.s32.totalorder %s9, 3
    %p113 = pnand %p111, %p112
    %p114 = pneg %p113
    // Predicated region
    $region9: #{cnn_forward.11} parent=5 // pred_check
      _
    $region10: #{cnn_forward.11} parent=5 // pred_check_branch
      %116 = sbr.rel (%p113) target = $region12
    $region11: #{cnn_forward.11} parent=5 // pred_region
      %s117 = ssub.s32 %s9, 1
      // Predicated region
      $region13: #{cnn_forward.11} parent=11 // pred_check
        %p118 = pneg %p56
      $region14: #{cnn_forward.11} parent=11 // pred_check_branch
        %120 = sbr.rel (%p118) target = $region16
      $region15: #{cnn_forward.11} parent=11 // pred_region
        _
      $region16: #{cnn_forward.11} parent=11 // pred_fallthru
        _
      // Predicated region
      $region17: #{cnn_forward.11} parent=11 // pred_check
        %p121 = pneg %p77
      $region18: #{cnn_forward.11} parent=11 // pred_check_branch
        %123 = sbr.rel (%p121) target = $region20
      $region19: #{cnn_forward.11} parent=11 // pred_region
        _
      $region20: #{cnn_forward.11} parent=11 // pred_fallthru
        _
    $region12: #{cnn_forward.11} parent=5 // pred_fallthru
      _
    %p124 = scmp.lt.s32.totalorder %s9, 2
    // Predicated region
    $region21: #{cnn_forward.11} parent=5 // pred_check
      %p125 = pneg %p124
    $region22: #{cnn_forward.11} parent=5 // pred_check_branch
      %127 = sbr.rel (%p125) target = $region24
    $region23: #{cnn_forward.11} parent=5 // pred_region
      // Predicated region
      $region25: #{cnn_forward.11} parent=23 // pred_check
        %p128 = pneg %p29
      $region26: #{cnn_forward.11} parent=23 // pred_check_branch
        %130 = sbr.rel (%p128) target = $region28
      $region27: #{cnn_forward.11} parent=23 // pred_region
        %s131 = smul.u32 14, %s9
        %p132 = scmp.lt.s32.totalorder %s131, 27
        %s133 = scalar_select %p132, %s131, 27
        %s134 = smul.addr %s133, 4
        %s135 = scalar_lea.vmem %s0, %s134
        %s136 = smul.u32 14, %s9
      $region28: #{cnn_forward.11} parent=23 // pred_fallthru
        _
    $region24: #{cnn_forward.11} parent=5 // pred_fallthru
      _
    %p137 = scmp.le.s32.totalorder 1, %s9
    %p138 = scmp.lt.s32.totalorder %s9, 3
    %p139 = pnand %p137, %p138
    %p140 = pneg %p139
    // Predicated region
    $region29: #{cnn_forward.11} parent=5 // pred_check
      _
    $region30: #{cnn_forward.11} parent=5 // pred_check_branch
      %142 = sbr.rel (%p139) target = $region32
    $region31: #{cnn_forward.11} parent=5 // pred_region
      %s143 = ssub.s32 %s9, 1
      %s144 = smul.u32 14, %s14
      %p145 = scmp.lt.s32.totalorder %s144, 27
      %s146 = scalar_select %p145, %s144, 27
      %s147 = smul.addr %s146, 4
      %s148 = scalar_lea.vmem %s0, %s147
      %p149 = pneg %p35
      %p150 = pneg %p32
      %p151 = pneg %p56
      %p152 = pneg %p53
      %p153 = pneg %p77
      %p154 = pneg %p74
      %p155 = pneg %p103
      %p156 = pneg %p100
      %s157 = smul.u32 14, %s14
      %p158 = scmp.lt.s32.totalorder %s157, 27
      %s159 = scalar_select %p158, %s157, 27
      %s160 = smul.addr %s159, 4
      %s161 = scalar_lea.vmem %s3, %s160
      %s162 = smul.u32 14, %s14
      %p163 = scmp.lt.s32.totalorder %s162, 27
      %s164 = scalar_select %p163, %s162, 27
      %s165 = smul.addr %s164, 4
      %s166 = scalar_lea.vmem %s0, %s165
      %s167 = smul.u32 14, %s14
      %s168 = smul.u32 14, %s14
      %p169 = scmp.lt.s32.totalorder %s168, 27
      %s170 = scalar_select %p169, %s168, 27
      %s171 = smul.addr %s170, 4
      %s172 = scalar_lea.vmem %s3, %s171
      %s173 = smul.u32 14, %s14
      %v175 = vld [vmem:[%s166] sm:$0xf]
      %v176 = vld [vmem:[%s166 + $0x4] sm:$0xf]
      %v177 = vld [vmem:[%s166 + $0x8] sm:$0xf]
      %v178 = vld [vmem:[%s166 + $0xc] sm:$0xf]
      %v179 = vld [vmem:[%s166 + $0x10] sm:$0xf]
      %v180 = vld [vmem:[%s166 + $0x14] sm:$0xf]
      %v181 = vld [vmem:[%s166 + $0x18] sm:$0xf]
      %v182 = vld [vmem:[%s166 + $0x1c] sm:$0xf]
      %v183 = vld [vmem:[%s166 + $0x20] sm:$0xf]
      %v184 = vld [vmem:[%s166 + $0x24] sm:$0xf]
      %v185 = vld [vmem:[%s166 + $0x28] sm:$0xf]
      %v186 = vld [vmem:[%s166 + $0x2c] sm:$0xf]
      %v187 = vld [vmem:[%s166 + $0x30] sm:$0xf]
      %v188 = vld [vmem:[%s166 + $0x34] sm:$0xf]
      %v189 = vld [vmem:[%s1] sm:$0xf]
      %v190 = vld [vmem:[%s1 + $0x4] sm:$0xf]
      %v191 = vld [vmem:[%s1 + $0x8] sm:$0xf]
      %v192 = vld [vmem:[%s1 + $0xc] sm:$0xf]
      %v193 = vld [vmem:[%s1 + $0x10] sm:$0xf]
      %v194 = vld [vmem:[%s1 + $0x14] sm:$0xf]
      %v195 = vld [vmem:[%s1 + $0x18] sm:$0xf]
      %v196 = vld [vmem:[%s1 + $0x1c] sm:$0xf]
      %v197 = vld [vmem:[%s1 + $0x20] sm:$0xf]
      %v198 = vld [vmem:[%s1 + $0x24] sm:$0xf]
      %v199 = vld [vmem:[%s1 + $0x28] sm:$0xf]
      %v200 = vld [vmem:[%s1 + $0x2c] sm:$0xf]
      %v201 = vld [vmem:[%s1 + $0x30] sm:$0xf]
      %v202 = vld [vmem:[%s1 + $0x34] sm:$0xf]
      %v203 = vld [vmem:[%s1 + $0x38] sm:$0xf]
      %v204 = vld [vmem:[%s1 + $0x3c] sm:$0xf]
      %v205 = vld [vmem:[%s2] sm:$0x1]
      %v207 = vlaneseq
      %v208 = vshrl.u32 %v207, 7
      %v209 = vsub.s32 0, %v208
      %v210 = vrot.slane %v205, %v209
      %v226 = vunpack.c.l.b16 %v175
      %v227 = vunpack.c.l.b16 %v176
      %v228 = vunpack.c.l.b16 %v177
      %v229 = vunpack.c.l.b16 %v178
      %v230 = vunpack.c.l.b16 %v179
      %v231 = vunpack.c.l.b16 %v180
      %v232 = vunpack.c.l.b16 %v181
      %v233 = vunpack.c.l.b16 %v182
      %v234 = vunpack.c.l.b16 %v183
      %v235 = vunpack.c.l.b16 %v184
      %v236 = vunpack.c.l.b16 %v185
      %v237 = vunpack.c.l.b16 %v186
      %v238 = vunpack.c.l.b16 %v187
      %v239 = vunpack.c.l.b16 %v188
      %v240 = vpack.c.b16 %v227, %v226
      %v241 = vpack.c.b16 %v229, %v228
      %v242 = vpack.c.b16 %v231, %v230
      %v243 = vpack.c.b16 %v233, %v232
      %v244 = vpack.c.b16 %v235, %v234
      %v245 = vpack.c.b16 %v237, %v236
      %v246 = vpack.c.b16 %v239, %v238
      %v270 = vunpack.c.l.b16 %v189
      %v271 = vunpack.c.l.b16 %v190
      %v272 = vunpack.c.l.b16 %v191
      %v273 = vunpack.c.l.b16 %v192
      %v274 = vunpack.c.l.b16 %v193
      %v275 = vunpack.c.l.b16 %v194
      %v276 = vunpack.c.l.b16 %v195
      %v277 = vunpack.c.l.b16 %v196
      %v278 = vunpack.c.l.b16 %v197
      %v279 = vunpack.c.l.b16 %v198
      %v280 = vunpack.c.l.b16 %v199
      %v281 = vunpack.c.l.b16 %v200
      %v282 = vunpack.c.l.b16 %v201
      %v283 = vunpack.c.l.b16 %v202
      %v284 = vunpack.c.l.b16 %v203
      %v285 = vunpack.c.l.b16 %v204
      %v286 = vpack.c.b16 %v271, %v270
      %v287 = vpack.c.b16 %v273, %v272
      %v288 = vpack.c.b16 %v275, %v274
      %v289 = vpack.c.b16 %v277, %v276
      %v290 = vpack.c.b16 %v279, %v278
      %v291 = vpack.c.b16 %v281, %v280
      %v292 = vpack.c.b16 %v283, %v282
      %v293 = vpack.c.b16 %v285, %v284
      %302 = vmatprep.subr.bf16.mxu0 0
      %303 = vmatpush1.bf16.msra.mxu0 %v286
      %304 = vmatprep.subr.bf16.mxu0 0
      %305 = vmatpush1.bf16.msra.mxu0 %v287
      %306 = vmatprep.subr.bf16.mxu0 0
      %307 = vmatpush1.bf16.msra.mxu0 %v288
      %308 = vmatprep.subr.bf16.mxu0 0
      %309 = vmatpush1.bf16.msra.mxu0 %v289
      %310 = vmatprep.subr.bf16.mxu0 0
      %311 = vmatpush1.bf16.msra.mxu0 %v290
      %312 = vmatprep.subr.bf16.mxu0 0
      %313 = vmatpush1.bf16.msra.mxu0 %v291
      %314 = vmatprep.subr.bf16.mxu0 0
      %315 = vmatpush1.bf16.msra.mxu0 %v292
      %316 = vmatprep.subr.bf16.mxu0 0
      %317 = vmatpush1.bf16.msra.mxu0 %v293
      %318 = vmatprep.subr.bf16.mxu0 0
      %319 = vmatpush1.bf16.msra.mxu0 0
      %320 = vmatprep.subr.bf16.mxu0 0
      %321 = vmatpush1.bf16.msra.mxu0 0
      %322 = vmatprep.subr.bf16.mxu0 0
      %323 = vmatpush1.bf16.msra.mxu0 0
      %324 = vmatprep.subr.bf16.mxu0 0
      %325 = vmatpush1.bf16.msra.mxu0 0
      %326 = vmatprep.subr.bf16.mxu0 0
      %327 = vmatpush1.bf16.msra.mxu0 0
      %328 = vmatprep.subr.bf16.mxu0 0
      %329 = vmatpush1.bf16.msra.mxu0 0
      %330 = vmatprep.subr.bf16.mxu0 0
      %331 = vmatpush1.bf16.msra.mxu0 0
      %332 = vmatprep.subr.bf16.mxu0 0
      %333 = vmatpush1.bf16.msra.mxu0 0
      %334 = vmatprep.mubr.bf16.mxu0 0
      %335 = vmatmul.mubr.bf16.gmra.mrb[0].mxu0 %v240
      %v336 = vpop.f32.mrb[0].mxu0
      %v337 = vadd.f32 %v210, %v336
      %v338 = vpop.f32.mrb[0].mxu0
      %v339 = vpop.f32.mrb[0].mxu0
      %v340 = vadd.f32 %v210, %v339
      %v341 = vpop.f32.mrb[0].mxu0
      %342 = vmatprep.mubr.bf16.mxu0 0
      %343 = vmatmul.mubr.bf16.gmra.mrb[0].mxu0 %v241
      %v344 = vpop.f32.mrb[0].mxu0
      %v345 = vadd.f32 %v210, %v344
      %v346 = vpop.f32.mrb[0].mxu0
      %v347 = vpop.f32.mrb[0].mxu0
      %v348 = vadd.f32 %v210, %v347
      %v349 = vpop.f32.mrb[0].mxu0
      %350 = vmatprep.mubr.bf16.mxu0 0
      %351 = vmatmul.mubr.bf16.gmra.mrb[0].mxu0 %v242
      %v352 = vpop.f32.mrb[0].mxu0
      %v353 = vadd.f32 %v210, %v352
      %v354 = vpop.f32.mrb[0].mxu0
      %v355 = vpop.f32.mrb[0].mxu0
      %v356 = vadd.f32 %v210, %v355
      %v357 = vpop.f32.mrb[0].mxu0
      %358 = vmatprep.mubr.bf16.mxu0 0
      %359 = vmatmul.mubr.bf16.gmra.mrb[0].mxu0 %v243
      %v360 = vpop.f32.mrb[0].mxu0
      %v361 = vadd.f32 %v210, %v360
      %v362 = vpop.f32.mrb[0].mxu0
      %v363 = vpop.f32.mrb[0].mxu0
      %v364 = vadd.f32 %v210, %v363
      %v365 = vpop.f32.mrb[0].mxu0
      %366 = vmatprep.mubr.bf16.mxu0 0
      %367 = vmatmul.mubr.bf16.gmra.mrb[0].mxu0 %v244
      %v368 = vpop.f32.mrb[0].mxu0
      %v369 = vadd.f32 %v210, %v368
      %v370 = vpop.f32.mrb[0].mxu0
      %v371 = vpop.f32.mrb[0].mxu0
      %v372 = vadd.f32 %v210, %v371
      %v373 = vpop.f32.mrb[0].mxu0
      %374 = vmatprep.mubr.bf16.mxu0 0
      %375 = vmatmul.mubr.bf16.gmra.mrb[0].mxu0 %v245
      %v376 = vpop.f32.mrb[0].mxu0
      %v377 = vadd.f32 %v210, %v376
      %v378 = vpop.f32.mrb[0].mxu0
      %v379 = vpop.f32.mrb[0].mxu0
      %v380 = vadd.f32 %v210, %v379
      %v381 = vpop.f32.mrb[0].mxu0
      %382 = vmatprep.mubr.bf16.mxu0 0
      %383 = vmatmul.mubr.bf16.gmra.mrb[0].mxu0 %v246
      %v384 = vpop.f32.mrb[0].mxu0
      %v385 = vadd.f32 %v210, %v384
      %v386 = vpop.f32.mrb[0].mxu0
      %v387 = vpop.f32.mrb[0].mxu0
      %v388 = vadd.f32 %v210, %v387
      %v389 = vpop.f32.mrb[0].mxu0
      %390 = vdwg.mxu0
      %v391 = vmax.f32 %v337, 0.0
      %v392 = vmax.f32 %v340, 0.0
      %v393 = vmax.f32 %v345, 0.0
      %v394 = vmax.f32 %v348, 0.0
      %v395 = vmax.f32 %v353, 0.0
      %v396 = vmax.f32 %v356, 0.0
      %v397 = vmax.f32 %v361, 0.0
      %v398 = vmax.f32 %v364, 0.0
      %v399 = vmax.f32 %v369, 0.0
      %v400 = vmax.f32 %v372, 0.0
      %v401 = vmax.f32 %v377, 0.0
      %v402 = vmax.f32 %v380, 0.0
      %v403 = vmax.f32 %v385, 0.0
      %v404 = vmax.f32 %v388, 0.0
      %v405 = vpack.c.bf16 %v392, %v391
      %v406 = vpack.c.bf16 %v394, %v393
      %v407 = vpack.c.bf16 %v396, %v395
      %v408 = vpack.c.bf16 %v398, %v397
      %v409 = vpack.c.bf16 %v400, %v399
      %v410 = vpack.c.bf16 %v402, %v401
      %v411 = vpack.c.bf16 %v404, %v403
      %v419 = vunpack.c.l.b16 %v405
      %v420 = vunpack.c.h.b16 %v405
      %v421 = vunpack.c.l.b16 %v406
      %v422 = vunpack.c.h.b16 %v406
      %v423 = vunpack.c.l.b16 %v407
      %v424 = vunpack.c.h.b16 %v407
      %v425 = vunpack.c.l.b16 %v408
      %v426 = vunpack.c.h.b16 %v408
      %v427 = vunpack.c.l.b16 %v409
      %v428 = vunpack.c.h.b16 %v409
      %v429 = vunpack.c.l.b16 %v410
      %v430 = vunpack.c.h.b16 %v410
      %v431 = vunpack.c.l.b16 %v411
      %v432 = vunpack.c.h.b16 %v411
      %v433 = vpack.c.b16 %v419, %v419
      %v434 = vpack.c.b16 %v420, %v420
      %v435 = vpack.c.b16 %v421, %v421
      %v436 = vpack.c.b16 %v422, %v422
      %v437 = vpack.c.b16 %v423, %v423
      %v438 = vpack.c.b16 %v424, %v424
      %v439 = vpack.c.b16 %v425, %v425
      %v440 = vpack.c.b16 %v426, %v426
      %v441 = vpack.c.b16 %v427, %v427
      %v442 = vpack.c.b16 %v428, %v428
      %v443 = vpack.c.b16 %v429, %v429
      %v444 = vpack.c.b16 %v430, %v430
      %v445 = vpack.c.b16 %v431, %v431
      %v446 = vpack.c.b16 %v432, %v432
      %461 = vst [vmem:[%s172] sm:$0xf] %v433
      %462 = vst [vmem:[%s172 + $0x4] sm:$0xf] %v434
      %463 = vst [vmem:[%s172 + $0x8] sm:$0xf] %v435
      %464 = vst [vmem:[%s172 + $0xc] sm:$0xf] %v436
      %465 = vst [vmem:[%s172 + $0x10] sm:$0xf] %v437
      %466 = vst [vmem:[%s172 + $0x14] sm:$0xf] %v438
      %467 = vst [vmem:[%s172 + $0x18] sm:$0xf] %v439
      %468 = vst [vmem:[%s172 + $0x1c] sm:$0xf] %v440
      %469 = vst [vmem:[%s172 + $0x20] sm:$0xf] %v441
      %470 = vst [vmem:[%s172 + $0x24] sm:$0xf] %v442
      %471 = vst [vmem:[%s172 + $0x28] sm:$0xf] %v443
      %472 = vst [vmem:[%s172 + $0x2c] sm:$0xf] %v444
      %473 = vst [vmem:[%s172 + $0x30] sm:$0xf] %v445
      %474 = vst [vmem:[%s172 + $0x34] sm:$0xf] %v446
      %s475 = smul.u32 14, %s14
      %p476 = scmp.lt.s32.totalorder %s475, 27
      %s477 = scalar_select %p476, %s475, 27
      %s478 = smul.addr %s477, 4
      %s479 = scalar_lea.vmem %s3, %s478
      // Predicated region
      $region33: #{cnn_forward.11} parent=31 // pred_check
        %p480 = pneg %p100
      $region34: #{cnn_forward.11} parent=31 // pred_check_branch
        %482 = sbr.rel (%p480) target = $region36
      $region35: #{cnn_forward.11} parent=31 // pred_region
        %s483 = smul.u32 14, %s14
      $region36: #{cnn_forward.11} parent=31 // pred_fallthru
        _
    $region32: #{cnn_forward.11} parent=5 // pred_fallthru
      _
    %p484 = scmp.le.s32.totalorder 2, %s9
    // Predicated region
    $region37: #{cnn_forward.11} parent=5 // pred_check
      %p485 = pneg %p484
    $region38: #{cnn_forward.11} parent=5 // pred_check_branch
      %487 = sbr.rel (%p485) target = $region40
    $region39: #{cnn_forward.11} parent=5 // pred_region
      %s488 = ssub.s32 %s9, 2
      // Predicated region
      $region41: #{cnn_forward.11} parent=39 // pred_check
        %p489 = pneg %p106
      $region42: #{cnn_forward.11} parent=39 // pred_check_branch
        %491 = sbr.rel (%p489) target = $region44
      $region43: #{cnn_forward.11} parent=39 // pred_region
        %s492 = smul.u32 14, %s15
        %p493 = scmp.lt.s32.totalorder %s492, 27
        %s494 = scalar_select %p493, %s492, 27
        %s495 = smul.addr %s494, 4
        %s496 = scalar_lea.vmem %s3, %s495
      $region44: #{cnn_forward.11} parent=39 // pred_fallthru
        _
    $region40: #{cnn_forward.11} parent=5 // pred_fallthru
      _
  $region6: #{cnn_forward.11} parent=0 // loop_footer
    %s13 = sadd.s32 1, %s9
  $region7: #{cnn_forward.11} parent=0 // loop_footer_branch
    %8 = sbr.rel target = $region3
  $region8: #{cnn_forward.11} parent=0 // loop_exit
    _

// kernel: cnn_forward.12
$region0: #{cnn_forward.12}
  #allocation0 [shape = 'u32[]', space=smem, size = 0x4, offset = 0x4, fixed_abs, tag = 'smem constant byte address 0x4 - core index']
  #allocation1 [shape = 'u32[144,128]{1,0:T(1,128)}', space=vmem, size = 0x12000, scoped, tag = 'internal scratch']
  %s0 = inlined_call_operand.vmem [shape: bf16[128,384], index: 0, kind: input, shape index: {}]
  %s1 = inlined_call_operand.vmem [shape: bf16[384,128], index: 1, kind: input, shape index: {}]
  %s2 = inlined_call_operand.vmem [shape: f32[1,128], index: 2, kind: input, shape index: {}]
  %s3 = inlined_call_operand.vmem [shape: bf16[128,128], index: 3, kind: output, shape index: {}]
  %s4 = sld [smem:[#allocation0]]
  $region45: #{cnn_forward.12} parent=0
    _
  %s6 = ssub.s32 1, %s4
  %s7 = scalar_select 0, %s6, %s4
  loop: start=0, step=1, limit=4
  $region2: #{cnn_forward.12} parent=0 // loop_pre_header
    _
  $region3: #{cnn_forward.12} parent=0 // loop_header
    %s9 = sphi 0, %s13
    %p10 = scmp.ge.s32.totalorder %s9, 4
    %s19 = sphi 0, %s21
    %s22 = sphi 0, %s19
    %s23 = sphi 0, %s22
    %s39 = sphi 0, %s23
    %s43 = sphi 0, %s43
    %s45 = sphi 0, %s43
    %s46 = sphi 0, %s45
    %s60 = sphi 0, %s46
    %s64 = sphi 0, %s64
    %s66 = sphi 0, %s64
    %s67 = sphi 0, %s66
    %s81 = sphi 0, %s67
    %s87 = sphi 0, %s89
    %s90 = sphi 0, %s87
    %s91 = sphi 0, %s90
    %s107 = sphi 0, %s91
  $region4: #{cnn_forward.12} parent=0 // loop_header_branch
    %12 = sbr.rel (%p10) target = $region8
  $region5: #{cnn_forward.12} parent=0 // loop_body
    %s14 = ssub.s32 %s9, 1
    %s15 = ssub.s32 %s9, 2
    %s16 = sadd.s32 %s9, 1
    %s17 = ssub.s32 %s9, %s16
    %p18 = scmp.eq.s32.totalorder %s17, 0
    %s20 = sadd.s32 %s19, 1
    %s21 = scalar_select %p18, %s19, %s20
    %p24 = pneg %p18
    %p25 = scmp.eq.s32.totalorder %s9, 1
    %p26 = por %p24, %p25
    %p27 = scmp.ne.s32.totalorder %s19, %s22
    %p28 = scmp.eq.s32.totalorder %s9, 0
    %p29 = por %p27, %p28
    %p30 = scmp.ne.s32.totalorder %s19, %s22
    %p31 = scmp.eq.s32.totalorder %s14, 1
    %p32 = por %p30, %p31
    %p33 = scmp.ne.s32.totalorder %s22, %s23
    %p34 = scmp.eq.s32.totalorder %s14, 0
    %p35 = por %p33, %p34
    %p36 = scmp.ne.s32.totalorder %s22, %s23
    %p37 = scmp.eq.s32.totalorder %s15, 1
    %p38 = por %p36, %p37
    %p40 = scmp.ne.s32.totalorder %s23, %s39
    %p41 = scmp.eq.s32.totalorder %s15, 0
    %p42 = por %p40, %p41
    %s44 = sadd.s32 %s43, 1
    %p47 = scmp.eq.s32.totalorder %s9, 1
    %p48 = scmp.ne.s32.totalorder %s43, %s45
    %p49 = scmp.eq.s32.totalorder %s9, 0
    %p50 = por %p48, %p49
    %p51 = scmp.ne.s32.totalorder %s43, %s45
    %p52 = scmp.eq.s32.totalorder %s14, 1
    %p53 = por %p51, %p52
    %p54 = scmp.ne.s32.totalorder %s45, %s46
    %p55 = scmp.eq.s32.totalorder %s14, 0
    %p56 = por %p54, %p55
    %p57 = scmp.ne.s32.totalorder %s45, %s46
    %p58 = scmp.eq.s32.totalorder %s15, 1
    %p59 = por %p57, %p58
    %p61 = scmp.ne.s32.totalorder %s46, %s60
    %p62 = scmp.eq.s32.totalorder %s15, 0
    %p63 = por %p61, %p62
    %s65 = sadd.s32 %s64, 1
    %p68 = scmp.eq.s32.totalorder %s9, 1
    %p69 = scmp.ne.s32.totalorder %s64, %s66
    %p70 = scmp.eq.s32.totalorder %s9, 0
    %p71 = por %p69, %p70
    %p72 = scmp.ne.s32.totalorder %s64, %s66
    %p73 = scmp.eq.s32.totalorder %s14, 1
    %p74 = por %p72, %p73
    %p75 = scmp.ne.s32.totalorder %s66, %s67
    %p76 = scmp.eq.s32.totalorder %s14, 0
    %p77 = por %p75, %p76
    %p78 = scmp.ne.s32.totalorder %s66, %s67
    %p79 = scmp.eq.s32.totalorder %s15, 1
    %p80 = por %p78, %p79
    %p82 = scmp.ne.s32.totalorder %s67, %s81
    %p83 = scmp.eq.s32.totalorder %s15, 0
    %p84 = por %p82, %p83
    %s85 = ssub.s32 %s9, %s16
    %p86 = scmp.eq.s32.totalorder %s85, 0
    %s88 = sadd.s32 %s87, 1
    %s89 = scalar_select %p86, %s87, %s88
    %p92 = pneg %p86
    %p93 = scmp.eq.s32.totalorder %s9, 1
    %p94 = por %p92, %p93
    %p95 = scmp.ne.s32.totalorder %s87, %s90
    %p96 = scmp.eq.s32.totalorder %s9, 0
    %p97 = por %p95, %p96
    %p98 = scmp.ne.s32.totalorder %s87, %s90
    %p99 = scmp.eq.s32.totalorder %s14, 1
    %p100 = por %p98, %p99
    %p101 = scmp.ne.s32.totalorder %s90, %s91
    %p102 = scmp.eq.s32.totalorder %s14, 0
    %p103 = por %p101, %p102
    %p104 = scmp.ne.s32.totalorder %s90, %s91
    %p105 = scmp.eq.s32.totalorder %s15, 1
    %p106 = por %p104, %p105
    %p108 = scmp.ne.s32.totalorder %s91, %s107
    %p109 = scmp.eq.s32.totalorder %s15, 0
    %p110 = por %p108, %p109
    %p111 = scmp.le.s32.totalorder 1, %s9
    %p112 = scmp.lt.s32.totalorder %s9, 3
    %p113 = pnand %p111, %p112
    %p114 = pneg %p113
    // Predicated region
    $region9: #{cnn_forward.12} parent=5 // pred_check
      _
    $region10: #{cnn_forward.12} parent=5 // pred_check_branch
      %116 = sbr.rel (%p113) target = $region12
    $region11: #{cnn_forward.12} parent=5 // pred_region
      %s117 = ssub.s32 %s9, 1
      // Predicated region
      $region13: #{cnn_forward.12} parent=11 // pred_check
        %p118 = pneg %p56
      $region14: #{cnn_forward.12} parent=11 // pred_check_branch
        %120 = sbr.rel (%p118) target = $region16
      $region15: #{cnn_forward.12} parent=11 // pred_region
        _
      $region16: #{cnn_forward.12} parent=11 // pred_fallthru
        _
      // Predicated region
      $region17: #{cnn_forward.12} parent=11 // pred_check
        %p121 = pneg %p77
      $region18: #{cnn_forward.12} parent=11 // pred_check_branch
        %123 = sbr.rel (%p121) target = $region20
      $region19: #{cnn_forward.12} parent=11 // pred_region
        _
      $region20: #{cnn_forward.12} parent=11 // pred_fallthru
        _
    $region12: #{cnn_forward.12} parent=5 // pred_fallthru
      _
    %p124 = scmp.lt.s32.totalorder %s9, 2
    // Predicated region
    $region21: #{cnn_forward.12} parent=5 // pred_check
      %p125 = pneg %p124
    $region22: #{cnn_forward.12} parent=5 // pred_check_branch
      %127 = sbr.rel (%p125) target = $region24
    $region23: #{cnn_forward.12} parent=5 // pred_region
      // Predicated region
      $region25: #{cnn_forward.12} parent=23 // pred_check
        %p128 = pneg %p29
      $region26: #{cnn_forward.12} parent=23 // pred_check_branch
        %130 = sbr.rel (%p128) target = $region28
      $region27: #{cnn_forward.12} parent=23 // pred_region
        %s131 = smul.u32 8, %s9
        %p132 = scmp.lt.s32.totalorder %s131, 15
        %s133 = scalar_select %p132, %s131, 15
        %s134 = smul.addr %s133, 3
        %s135 = smul.addr %s134, 4
        %s136 = scalar_lea.vmem %s0, %s135
        %s137 = smul.u32 8, %s9
      $region28: #{cnn_forward.12} parent=23 // pred_fallthru
        _
    $region24: #{cnn_forward.12} parent=5 // pred_fallthru
      _
    %p138 = scmp.le.s32.totalorder 1, %s9
    %p139 = scmp.lt.s32.totalorder %s9, 3
    %p140 = pnand %p138, %p139
    %p141 = pneg %p140
    // Predicated region
    $region29: #{cnn_forward.12} parent=5 // pred_check
      _
    $region30: #{cnn_forward.12} parent=5 // pred_check_branch
      %143 = sbr.rel (%p140) target = $region32
    $region31: #{cnn_forward.12} parent=5 // pred_region
      %s144 = ssub.s32 %s9, 1
      %s145 = smul.u32 8, %s14
      %p146 = scmp.lt.s32.totalorder %s145, 15
      %s147 = scalar_select %p146, %s145, 15
      %s148 = smul.addr %s147, 3
      %s149 = smul.addr %s148, 4
      %s150 = scalar_lea.vmem %s0, %s149
      %p151 = pneg %p35
      %p152 = pneg %p32
      %p153 = pneg %p56
      %p154 = pneg %p53
      %p155 = pneg %p77
      %p156 = pneg %p74
      %p157 = pneg %p103
      %p158 = pneg %p100
      %s159 = smul.u32 8, %s14
      %p160 = scmp.lt.s32.totalorder %s159, 15
      %s161 = scalar_select %p160, %s159, 15
      %s162 = smul.addr %s161, 4
      %s163 = scalar_lea.vmem %s3, %s162
      %s164 = smul.u32 8, %s14
      %p165 = scmp.lt.s32.totalorder %s164, 15
      %s166 = scalar_select %p165, %s164, 15
      %s167 = smul.addr %s166, 3
      %s168 = smul.addr %s167, 4
      %s169 = scalar_lea.vmem %s0, %s168
      %s170 = smul.u32 8, %s14
      %s171 = smul.u32 8, %s14
      %p172 = scmp.lt.s32.totalorder %s171, 15
      %s173 = scalar_select %p172, %s171, 15
      %s174 = smul.addr %s173, 4
      %s175 = scalar_lea.vmem %s3, %s174
      %s176 = smul.u32 8, %s14
      %v178 = vld [vmem:[%s169] sm:$0xff]
      %v179 = vld [vmem:[%s169 + $0x8] sm:$0xf]
      %v180 = vld [vmem:[%s169 + $0xc] sm:$0xff]
      %v181 = vld [vmem:[%s169 + $0x14] sm:$0xf]
      %v182 = vld [vmem:[%s169 + $0x18] sm:$0xff]
      %v183 = vld [vmem:[%s169 + $0x20] sm:$0xf]
      %v184 = vld [vmem:[%s169 + $0x24] sm:$0xff]
      %v185 = vld [vmem:[%s169 + $0x2c] sm:$0xf]
      %v186 = vld [vmem:[%s169 + $0x30] sm:$0xff]
      %v187 = vld [vmem:[%s169 + $0x38] sm:$0xf]
      %v188 = vld [vmem:[%s169 + $0x3c] sm:$0xff]
      %v189 = vld [vmem:[%s169 + $0x44] sm:$0xf]
      %v190 = vld [vmem:[%s169 + $0x48] sm:$0xff]
      %v191 = vld [vmem:[%s169 + $0x50] sm:$0xf]
      %v192 = vld [vmem:[%s169 + $0x54] sm:$0xff]
      %v193 = vld [vmem:[%s169 + $0x5c] sm:$0xf]
      %v194 = vld [vmem:[%s1] sm:$0xf]
      %v195 = vld [vmem:[%s1 + $0x4] sm:$0xf]
      %v196 = vld [vmem:[%s1 + $0x8] sm:$0xf]
      %v197 = vld [vmem:[%s1 + $0xc] sm:$0xf]
      %v198 = vld [vmem:[%s1 + $0x10] sm:$0xf]
      %v199 = vld [vmem:[%s1 + $0x14] sm:$0xf]
      %v200 = vld [vmem:[%s1 + $0x18] sm:$0xf]
      %v201 = vld [vmem:[%s1 + $0x1c] sm:$0xf]
      %v202 = vld [vmem:[%s1 + $0x20] sm:$0xf]
      %v203 = vld [vmem:[%s1 + $0x24] sm:$0xf]
      %v204 = vld [vmem:[%s1 + $0x28] sm:$0xf]
      %v205 = vld [vmem:[%s1 + $0x2c] sm:$0xf]
      %v206 = vld [vmem:[%s1 + $0x30] sm:$0xf]
      %v207 = vld [vmem:[%s1 + $0x34] sm:$0xf]
      %v208 = vld [vmem:[%s1 + $0x38] sm:$0xf]
      %v209 = vld [vmem:[%s1 + $0x3c] sm:$0xf]
      %v210 = vld [vmem:[%s1 + $0x40] sm:$0xf]
      %v211 = vld [vmem:[%s1 + $0x44] sm:$0xf]
      %v212 = vld [vmem:[%s1 + $0x48] sm:$0xf]
      %v213 = vld [vmem:[%s1 + $0x4c] sm:$0xf]
      %v214 = vld [vmem:[%s1 + $0x50] sm:$0xf]
      %v215 = vld [vmem:[%s1 + $0x54] sm:$0xf]
      %v216 = vld [vmem:[%s1 + $0x58] sm:$0xf]
      %v217 = vld [vmem:[%s1 + $0x5c] sm:$0xf]
      %v218 = vld [vmem:[%s1 + $0x60] sm:$0xf]
      %v219 = vld [vmem:[%s1 + $0x64] sm:$0xf]
      %v220 = vld [vmem:[%s1 + $0x68] sm:$0xf]
      %v221 = vld [vmem:[%s1 + $0x6c] sm:$0xf]
      %v222 = vld [vmem:[%s1 + $0x70] sm:$0xf]
      %v223 = vld [vmem:[%s1 + $0x74] sm:$0xf]
      %v224 = vld [vmem:[%s1 + $0x78] sm:$0xf]
      %v225 = vld [vmem:[%s1 + $0x7c] sm:$0xf]
      %v226 = vld [vmem:[%s1 + $0x80] sm:$0xf]
      %v227 = vld [vmem:[%s1 + $0x84] sm:$0xf]
      %v228 = vld [vmem:[%s1 + $0x88] sm:$0xf]
      %v229 = vld [vmem:[%s1 + $0x8c] sm:$0xf]
      %v230 = vld [vmem:[%s1 + $0x90] sm:$0xf]
      %v231 = vld [vmem:[%s1 + $0x94] sm:$0xf]
      %v232 = vld [vmem:[%s1 + $0x98] sm:$0xf]
      %v233 = vld [vmem:[%s1 + $0x9c] sm:$0xf]
      %v234 = vld [vmem:[%s1 + $0xa0] sm:$0xf]
      %v235 = vld [vmem:[%s1 + $0xa4] sm:$0xf]
      %v236 = vld [vmem:[%s1 + $0xa8] sm:$0xf]
      %v237 = vld [vmem:[%s1 + $0xac] sm:$0xf]
      %v238 = vld [vmem:[%s1 + $0xb0] sm:$0xf]
      %v239 = vld [vmem:[%s1 + $0xb4] sm:$0xf]
      %v240 = vld [vmem:[%s1 + $0xb8] sm:$0xf]
      %v241 = vld [vmem:[%s1 + $0xbc] sm:$0xf]
      %v242 = vld [vmem:[%s2] sm:$0x1]
      %v244 = vlaneseq
      %v245 = vshrl.u32 %v244, 7
      %v246 = vsub.s32 0, %v245
      %v247 = vrot.slane %v242, %v246
      %v265 = vunpack.c.l.b16 %v178
      %v266 = vunpack.c.h.b16 %v178
      %v267 = vunpack.c.l.b16 %v179
      %v268 = vunpack.c.l.b16 %v180
      %v269 = vunpack.c.h.b16 %v180
      %v270 = vunpack.c.l.b16 %v181
      %v271 = vunpack.c.l.b16 %v182
      %v272 = vunpack.c.h.b16 %v182
      %v273 = vunpack.c.l.b16 %v183
      %v274 = vunpack.c.l.b16 %v184
      %v275 = vunpack.c.h.b16 %v184
      %v276 = vunpack.c.l.b16 %v185
      %v277 = vunpack.c.l.b16 %v186
      %v278 = vunpack.c.h.b16 %v186
      %v279 = vunpack.c.l.b16 %v187
      %v280 = vunpack.c.l.b16 %v188
      %v281 = vunpack.c.h.b16 %v188
      %v282 = vunpack.c.l.b16 %v189
      %v283 = vunpack.c.l.b16 %v190
      %v284 = vunpack.c.h.b16 %v190
      %v285 = vunpack.c.l.b16 %v191
      %v286 = vunpack.c.l.b16 %v192
      %v287 = vunpack.c.h.b16 %v192
      %v288 = vunpack.c.l.b16 %v193
      %v289 = vpack.c.b16 %v268, %v265
      %v290 = vpack.c.b16 %v269, %v266
      %v291 = vpack.c.b16 %v270, %v267
      %v292 = vpack.c.b16 %v274, %v271
      %v293 = vpack.c.b16 %v275, %v272
      %v294 = vpack.c.b16 %v276, %v273
      %v295 = vpack.c.b16 %v280, %v277
      %v296 = vpack.c.b16 %v281, %v278
      %v297 = vpack.c.b16 %v282, %v279
      %v298 = vpack.c.b16 %v286, %v283
      %v299 = vpack.c.b16 %v287, %v284
      %v300 = vpack.c.b16 %v288, %v285
      %v361 = vunpack.c.l.b16 %v194
      %v362 = vunpack.c.l.b16 %v195
      %v363 = vunpack.c.l.b16 %v196
      %v364 = vunpack.c.l.b16 %v197
      %v365 = vunpack.c.l.b16 %v198
      %v366 = vunpack.c.l.b16 %v199
      %v367 = vunpack.c.l.b16 %v200
      %v368 = vunpack.c.l.b16 %v201
      %v369 = vunpack.c.l.b16 %v202
      %v370 = vunpack.c.l.b16 %v203
      %v371 = vunpack.c.l.b16 %v204
      %v372 = vunpack.c.l.b16 %v205
      %v373 = vunpack.c.l.b16 %v206
      %v374 = vunpack.c.l.b16 %v207
      %v375 = vunpack.c.l.b16 %v208
      %v376 = vunpack.c.l.b16 %v209
      %v377 = vunpack.c.l.b16 %v210
      %v378 = vunpack.c.l.b16 %v211
      %v379 = vunpack.c.l.b16 %v212
      %v380 = vunpack.c.l.b16 %v213
      %v381 = vunpack.c.l.b16 %v214
      %v382 = vunpack.c.l.b16 %v215
      %v383 = vunpack.c.l.b16 %v216
      %v384 = vunpack.c.l.b16 %v217
      %v385 = vunpack.c.l.b16 %v218
      %v386 = vunpack.c.l.b16 %v219
      %v387 = vunpack.c.l.b16 %v220
      %v388 = vunpack.c.l.b16 %v221
      %v389 = vunpack.c.l.b16 %v222
      %v390 = vunpack.c.l.b16 %v223
      %v391 = vunpack.c.l.b16 %v224
      %v392 = vunpack.c.l.b16 %v225
      %v393 = vunpack.c.l.b16 %v226
      %v394 = vunpack.c.l.b16 %v227
      %v395 = vunpack.c.l.b16 %v228
      %v396 = vunpack.c.l.b16 %v229
      %v397 = vunpack.c.l.b16 %v230
      %v398 = vunpack.c.l.b16 %v231
      %v399 = vunpack.c.l.b16 %v232
      %v400 = vunpack.c.l.b16 %v233
      %v401 = vunpack.c.l.b16 %v234
      %v402 = vunpack.c.l.b16 %v235
      %v403 = vunpack.c.l.b16 %v236
      %v404 = vunpack.c.l.b16 %v237
      %v405 = vunpack.c.l.b16 %v238
      %v406 = vunpack.c.l.b16 %v239
      %v407 = vunpack.c.l.b16 %v240
      %v408 = vunpack.c.l.b16 %v241
      %v409 = vpack.c.b16 %v362, %v361
      %v410 = vpack.c.b16 %v364, %v363
      %v411 = vpack.c.b16 %v366, %v365
      %v412 = vpack.c.b16 %v368, %v367
      %v413 = vpack.c.b16 %v370, %v369
      %v414 = vpack.c.b16 %v372, %v371
      %v415 = vpack.c.b16 %v374, %v373
      %v416 = vpack.c.b16 %v376, %v375
      %v417 = vpack.c.b16 %v378, %v377
      %v418 = vpack.c.b16 %v380, %v379
      %v419 = vpack.c.b16 %v382, %v381
      %v420 = vpack.c.b16 %v384, %v383
      %v421 = vpack.c.b16 %v386, %v385
      %v422 = vpack.c.b16 %v388, %v387
      %v423 = vpack.c.b16 %v390, %v389
      %v424 = vpack.c.b16 %v392, %v391
      %v425 = vpack.c.b16 %v394, %v393
      %v426 = vpack.c.b16 %v396, %v395
      %v427 = vpack.c.b16 %v398, %v397
      %v428 = vpack.c.b16 %v400, %v399
      %v429 = vpack.c.b16 %v402, %v401
      %v430 = vpack.c.b16 %v404, %v403
      %v431 = vpack.c.b16 %v406, %v405
      %v432 = vpack.c.b16 %v408, %v407
      %457 = vmatprep.subr.bf16.mxu0 0
      %458 = vmatpush1.bf16.msra.mxu0 %v409
      %459 = vmatprep.subr.bf16.mxu0 0
      %460 = vmatpush1.bf16.msra.mxu0 %v410
      %461 = vmatprep.subr.bf16.mxu0 0
      %462 = vmatpush1.bf16.msra.mxu0 %v411
      %463 = vmatprep.subr.bf16.mxu0 0
      %464 = vmatpush1.bf16.msra.mxu0 %v412
      %465 = vmatprep.subr.bf16.mxu0 0
      %466 = vmatpush1.bf16.msra.mxu0 %v413
      %467 = vmatprep.subr.bf16.mxu0 0
      %468 = vmatpush1.bf16.msra.mxu0 %v414
      %469 = vmatprep.subr.bf16.mxu0 0
      %470 = vmatpush1.bf16.msra.mxu0 %v415
      %471 = vmatprep.subr.bf16.mxu0 0
      %472 = vmatpush1.bf16.msra.mxu0 %v416
      %473 = vmatprep.subr.bf16.mxu0 0
      %474 = vmatpush1.bf16.msra.mxu0 %v417
      %475 = vmatprep.subr.bf16.mxu0 0
      %476 = vmatpush1.bf16.msra.mxu0 %v418
      %477 = vmatprep.subr.bf16.mxu0 0
      %478 = vmatpush1.bf16.msra.mxu0 %v419
      %479 = vmatprep.subr.bf16.mxu0 0
      %480 = vmatpush1.bf16.msra.mxu0 %v420
      %481 = vmatprep.subr.bf16.mxu0 0
      %482 = vmatpush1.bf16.msra.mxu0 %v421
      %483 = vmatprep.subr.bf16.mxu0 0
      %484 = vmatpush1.bf16.msra.mxu0 %v422
      %485 = vmatprep.subr.bf16.mxu0 0
      %486 = vmatpush1.bf16.msra.mxu0 %v423
      %487 = vmatprep.subr.bf16.mxu0 0
      %488 = vmatpush1.bf16.msra.mxu0 %v424
      %489 = vmatprep.mubr.bf16.mxu0 %v290
      %490 = vmatmul.mubr.bf16.gmra.mrb[0].mxu0 %v289
      %v491 = vpop.f32.mrb[0].mxu0
      %v492 = vadd.f32 %v247, %v491
      %v493 = vpop.f32.mrb[0].mxu0
      %v494 = vpop.f32.mrb[0].mxu0
      %v495 = vadd.f32 %v247, %v494
      %v496 = vpop.f32.mrb[0].mxu0
      %497 = vmatprep.mubr.bf16.mxu0 %v293
      %498 = vmatmul.mubr.bf16.gmra.mrb[0].mxu0 %v292
      %v499 = vpop.f32.mrb[0].mxu0
      %v500 = vadd.f32 %v247, %v499
      %v501 = vpop.f32.mrb[0].mxu0
      %v502 = vpop.f32.mrb[0].mxu0
      %v503 = vadd.f32 %v247, %v502
      %v504 = vpop.f32.mrb[0].mxu0
      %505 = vmatprep.mubr.bf16.mxu0 %v296
      %506 = vmatmul.mubr.bf16.gmra.mrb[0].mxu0 %v295
      %v507 = vpop.f32.mrb[0].mxu0
      %v508 = vadd.f32 %v247, %v507
      %v509 = vpop.f32.mrb[0].mxu0
      %v510 = vpop.f32.mrb[0].mxu0
      %v511 = vadd.f32 %v247, %v510
      %v512 = vpop.f32.mrb[0].mxu0
      %513 = vmatprep.mubr.bf16.mxu0 %v299
      %514 = vmatmul.mubr.bf16.gmra.mrb[0].mxu0 %v298
      %v515 = vpop.f32.mrb[0].mxu0
      %v516 = vadd.f32 %v247, %v515
      %v517 = vpop.f32.mrb[0].mxu0
      %v518 = vpop.f32.mrb[0].mxu0
      %v519 = vadd.f32 %v247, %v518
      %v520 = vpop.f32.mrb[0].mxu0
      %521 = vdwg.mxu0
      %522 = vmatprep.subr.bf16.mxu0 0
      %523 = vmatpush1.bf16.msra.mxu0 %v425
      %524 = vmatprep.subr.bf16.mxu0 0
      %525 = vmatpush1.bf16.msra.mxu0 %v426
      %526 = vmatprep.subr.bf16.mxu0 0
      %527 = vmatpush1.bf16.msra.mxu0 %v427
      %528 = vmatprep.subr.bf16.mxu0 0
      %529 = vmatpush1.bf16.msra.mxu0 %v428
      %530 = vmatprep.subr.bf16.mxu0 0
      %531 = vmatpush1.bf16.msra.mxu0 %v429
      %532 = vmatprep.subr.bf16.mxu0 0
      %533 = vmatpush1.bf16.msra.mxu0 %v430
      %534 = vmatprep.subr.bf16.mxu0 0
      %535 = vmatpush1.bf16.msra.mxu0 %v431
      %536 = vmatprep.subr.bf16.mxu0 0
      %537 = vmatpush1.bf16.msra.mxu0 %v432
      %538 = vmatprep.subr.bf16.mxu0 0
      %539 = vmatpush1.bf16.msra.mxu0 0
      %540 = vmatprep.subr.bf16.mxu0 0
      %541 = vmatpush1.bf16.msra.mxu0 0
      %542 = vmatprep.subr.bf16.mxu0 0
      %543 = vmatpush1.bf16.msra.mxu0 0
      %544 = vmatprep.subr.bf16.mxu0 0
      %545 = vmatpush1.bf16.msra.mxu0 0
      %546 = vmatprep.subr.bf16.mxu0 0
      %547 = vmatpush1.bf16.msra.mxu0 0
      %548 = vmatprep.subr.bf16.mxu0 0
      %549 = vmatpush1.bf16.msra.mxu0 0
      %550 = vmatprep.subr.bf16.mxu0 0
      %551 = vmatpush1.bf16.msra.mxu0 0
      %552 = vmatprep.subr.bf16.mxu0 0
      %553 = vmatpush1.bf16.msra.mxu0 0
      %554 = vmatprep.mubr.bf16.mxu0 0
      %555 = vmatmul.mubr.bf16.gmra.mrb[0].mxu0 %v291
      %v556 = vpop.f32.mrb[0].mxu0
      %v557 = vadd.f32 %v492, %v556
      %v558 = vpop.f32.mrb[0].mxu0
      %v559 = vpop.f32.mrb[0].mxu0
      %v560 = vadd.f32 %v495, %v559
      %v561 = vpop.f32.mrb[0].mxu0
      %562 = vmatprep.mubr.bf16.mxu0 0
      %563 = vmatmul.mubr.bf16.gmra.mrb[0].mxu0 %v294
      %v564 = vpop.f32.mrb[0].mxu0
      %v565 = vadd.f32 %v500, %v564
      %v566 = vpop.f32.mrb[0].mxu0
      %v567 = vpop.f32.mrb[0].mxu0
      %v568 = vadd.f32 %v503, %v567
      %v569 = vpop.f32.mrb[0].mxu0
      %570 = vmatprep.mubr.bf16.mxu0 0
      %571 = vmatmul.mubr.bf16.gmra.mrb[0].mxu0 %v297
      %v572 = vpop.f32.mrb[0].mxu0
      %v573 = vadd.f32 %v508, %v572
      %v574 = vpop.f32.mrb[0].mxu0
      %v575 = vpop.f32.mrb[0].mxu0
      %v576 = vadd.f32 %v511, %v575
      %v577 = vpop.f32.mrb[0].mxu0
      %578 = vmatprep.mubr.bf16.mxu0 0
      %579 = vmatmul.mubr.bf16.gmra.mrb[0].mxu0 %v300
      %v580 = vpop.f32.mrb[0].mxu0
      %v581 = vadd.f32 %v516, %v580
      %v582 = vpop.f32.mrb[0].mxu0
      %v583 = vpop.f32.mrb[0].mxu0
      %v584 = vadd.f32 %v519, %v583
      %v585 = vpop.f32.mrb[0].mxu0
      %586 = vdwg.mxu0
      %v587 = vmax.f32 %v557, 0.0
      %v588 = vmax.f32 %v560, 0.0
      %v589 = vmax.f32 %v565, 0.0
      %v590 = vmax.f32 %v568, 0.0
      %v591 = vmax.f32 %v573, 0.0
      %v592 = vmax.f32 %v576, 0.0
      %v593 = vmax.f32 %v581, 0.0
      %v594 = vmax.f32 %v584, 0.0
      %v595 = vpack.c.bf16 %v588, %v587
      %v596 = vpack.c.bf16 %v590, %v589
      %v597 = vpack.c.bf16 %v592, %v591
      %v598 = vpack.c.bf16 %v594, %v593
      %v603 = vunpack.c.l.b16 %v595
      %v604 = vunpack.c.h.b16 %v595
      %v605 = vunpack.c.l.b16 %v596
      %v606 = vunpack.c.h.b16 %v596
      %v607 = vunpack.c.l.b16 %v597
      %v608 = vunpack.c.h.b16 %v597
      %v609 = vunpack.c.l.b16 %v598
      %v610 = vunpack.c.h.b16 %v598
      %v611 = vpack.c.b16 %v603, %v603
      %v612 = vpack.c.b16 %v604, %v604
      %v613 = vpack.c.b16 %v605, %v605
      %v614 = vpack.c.b16 %v606, %v606
      %v615 = vpack.c.b16 %v607, %v607
      %v616 = vpack.c.b16 %v608, %v608
      %v617 = vpack.c.b16 %v609, %v609
      %v618 = vpack.c.b16 %v610, %v610
      %627 = vst [vmem:[%s175] sm:$0xf] %v611
      %628 = vst [vmem:[%s175 + $0x4] sm:$0xf] %v612
      %629 = vst [vmem:[%s175 + $0x8] sm:$0xf] %v613
      %630 = vst [vmem:[%s175 + $0xc] sm:$0xf] %v614
      %631 = vst [vmem:[%s175 + $0x10] sm:$0xf] %v615
      %632 = vst [vmem:[%s175 + $0x14] sm:$0xf] %v616
      %633 = vst [vmem:[%s175 + $0x18] sm:$0xf] %v617
      %634 = vst [vmem:[%s175 + $0x1c] sm:$0xf] %v618
      %s635 = smul.u32 8, %s14
      %p636 = scmp.lt.s32.totalorder %s635, 15
      %s637 = scalar_select %p636, %s635, 15
      %s638 = smul.addr %s637, 4
      %s639 = scalar_lea.vmem %s3, %s638
      // Predicated region
      $region33: #{cnn_forward.12} parent=31 // pred_check
        %p640 = pneg %p100
      $region34: #{cnn_forward.12} parent=31 // pred_check_branch
        %642 = sbr.rel (%p640) target = $region36
      $region35: #{cnn_forward.12} parent=31 // pred_region
        %s643 = smul.u32 8, %s14
      $region36: #{cnn_forward.12} parent=31 // pred_fallthru
        _
    $region32: #{cnn_forward.12} parent=5 // pred_fallthru
      _
    %p644 = scmp.le.s32.totalorder 2, %s9
    // Predicated region
    $region37: #{cnn_forward.12} parent=5 // pred_check
      %p645 = pneg %p644
    $region38: #{cnn_forward.12} parent=5 // pred_check_branch
      %647 = sbr.rel (%p645) target = $region40
    $region39: #{cnn_forward.12} parent=5 // pred_region
      %s648 = ssub.s32 %s9, 2
      // Predicated region
      $region41: #{cnn_forward.12} parent=39 // pred_check
        %p649 = pneg %p106
      $region42: #{cnn_forward.12} parent=39 // pred_check_branch
        %651 = sbr.rel (%p649) target = $region44
      $region43: #{cnn_forward.12} parent=39 // pred_region
        %s652 = smul.u32 8, %s15
        %p653 = scmp.lt.s32.totalorder %s652, 15
        %s654 = scalar_select %p653, %s652, 15
        %s655 = smul.addr %s654, 4
        %s656 = scalar_lea.vmem %s3, %s655
      $region44: #{cnn_forward.12} parent=39 // pred_fallthru
        _
    $region40: #{cnn_forward.12} parent=5 // pred_fallthru
      _
  $region6: #{cnn_forward.12} parent=0 // loop_footer
    %s13 = sadd.s32 1, %s9
  $region7: #{cnn_forward.12} parent=0 // loop_footer_branch
    %8 = sbr.rel target = $region3
  $region8: #{cnn_forward.12} parent=0 // loop_exit
    _

// kernel: cnn_forward.14
$region0: #{cnn_forward.14}
  #allocation0 [shape = 'u32[]', space=smem, size = 0x4, offset = 0x4, fixed_abs, tag = 'smem constant byte address 0x4 - core index']
  #allocation1 [shape = 'u32[144,128]{1,0:T(1,128)}', space=vmem, size = 0x12000, scoped, tag = 'internal scratch']
  %s0 = inlined_call_operand.vmem [shape: bf16[8,2,4,256], index: 0, kind: input, shape index: {}]
  %s1 = inlined_call_operand.vmem [shape: bf16[8,4,128], index: 1, kind: output, shape index: {}]
  %s2 = sld [smem:[#allocation0]]
  $region14: #{cnn_forward.14} parent=0
    _
  %s4 = ssub.s32 1, %s2
  %s5 = scalar_select 0, %s4, %s2
  // Predicated region
  $region2: #{cnn_forward.14} parent=0 // pred_check
    _
  $region3: #{cnn_forward.14} parent=0 // pred_check_branch
    %7 = sbr.rel (0) target = $region5
  $region4: #{cnn_forward.14} parent=0 // pred_region
    _
  $region5: #{cnn_forward.14} parent=0 // pred_fallthru
    _
  %v8 = vld [vmem:[%s0] sm:$0xf]
  %v9 = vld [vmem:[%s0 + $0x4] sm:$0xf]
  %v10 = vld [vmem:[%s0 + $0x8] sm:$0xf]
  %v11 = vld [vmem:[%s0 + $0xc] sm:$0xf]
  %v12 = vld [vmem:[%s0 + $0x10] sm:$0xf]
  %v13 = vld [vmem:[%s0 + $0x14] sm:$0xf]
  %v14 = vld [vmem:[%s0 + $0x18] sm:$0xf]
  %v15 = vld [vmem:[%s0 + $0x1c] sm:$0xf]
  %v16 = vld [vmem:[%s0 + $0x20] sm:$0xf]
  %v17 = vld [vmem:[%s0 + $0x24] sm:$0xf]
  %v18 = vld [vmem:[%s0 + $0x28] sm:$0xf]
  %v19 = vld [vmem:[%s0 + $0x2c] sm:$0xf]
  %v20 = vld [vmem:[%s0 + $0x30] sm:$0xf]
  %v21 = vld [vmem:[%s0 + $0x34] sm:$0xf]
  %v22 = vld [vmem:[%s0 + $0x38] sm:$0xf]
  %v23 = vld [vmem:[%s0 + $0x3c] sm:$0xf]
  %v24 = vmax.bf16 %v8, %v9
  %v25 = vmax.bf16 %v10, %v11
  %v26 = vmax.bf16 %v12, %v13
  %v27 = vmax.bf16 %v14, %v15
  %v28 = vmax.bf16 %v16, %v17
  %v29 = vmax.bf16 %v18, %v19
  %v30 = vmax.bf16 %v20, %v21
  %v31 = vmax.bf16 %v22, %v23
  %v40 = vrot.slane %v24, 2
  %v41 = vrot.slane %v25, 2
  %v42 = vrot.slane %v26, 2
  %v43 = vrot.slane %v27, 2
  %v44 = vrot.slane %v28, 2
  %v45 = vrot.slane %v29, 2
  %v46 = vrot.slane %v30, 2
  %v47 = vrot.slane %v31, 2
  %v56 = vmax.bf16 %v24, %v40
  %v57 = vmax.bf16 %v25, %v41
  %v58 = vmax.bf16 %v26, %v42
  %v59 = vmax.bf16 %v27, %v43
  %v60 = vmax.bf16 %v28, %v44
  %v61 = vmax.bf16 %v29, %v45
  %v62 = vmax.bf16 %v30, %v46
  %v63 = vmax.bf16 %v31, %v47
  %64 = vst [vmem:[%s1] sm:$0x3] %v56
  %65 = vst [vmem:[%s1 + $0x2] sm:$0x3] %v57
  %66 = vst [vmem:[%s1 + $0x4] sm:$0x3] %v58
  %67 = vst [vmem:[%s1 + $0x6] sm:$0x3] %v59
  %68 = vst [vmem:[%s1 + $0x8] sm:$0x3] %v60
  %69 = vst [vmem:[%s1 + $0xa] sm:$0x3] %v61
  %70 = vst [vmem:[%s1 + $0xc] sm:$0x3] %v62
  %71 = vst [vmem:[%s1 + $0xe] sm:$0x3] %v63
  // Predicated region
  $region6: #{cnn_forward.14} parent=0 // pred_check
    _
  $region7: #{cnn_forward.14} parent=0 // pred_check_branch
    %73 = sbr.rel (0) target = $region9
  $region8: #{cnn_forward.14} parent=0 // pred_region
    _
  $region9: #{cnn_forward.14} parent=0 // pred_fallthru
    _
  // Predicated region
  $region10: #{cnn_forward.14} parent=0 // pred_check
    _
  $region11: #{cnn_forward.14} parent=0 // pred_check_branch
    %75 = sbr.rel (0) target = $region13
  $region12: #{cnn_forward.14} parent=0 // pred_region
    _
  $region13: #{cnn_forward.14} parent=0 // pred_fallthru
    _

// kernel: cnn_forward.15
$region0: #{cnn_forward.15}
  #allocation0 [shape = 'u32[]', space=smem, size = 0x4, offset = 0x4, fixed_abs, tag = 'smem constant byte address 0x4 - core index']
  #allocation1 [shape = 'u32[144,128]{1,0:T(1,128)}', space=vmem, size = 0x12000, scoped, tag = 'internal scratch']
  %s0 = inlined_call_operand.vmem [shape: bf16[16,512], index: 0, kind: input, shape index: {}]
  %s1 = inlined_call_operand.vmem [shape: bf16[512,128], index: 1, kind: input, shape index: {}]
  %s2 = inlined_call_operand.vmem [shape: f32[1,128], index: 2, kind: input, shape index: {}]
  %s3 = inlined_call_operand.vmem [shape: bf16[128,128], index: 3, kind: input, shape index: {}]
  %s4 = inlined_call_operand.vmem [shape: f32[1,128], index: 4, kind: input, shape index: {}]
  %s5 = inlined_call_operand.vmem [shape: bf16[128,128], index: 5, kind: input, shape index: {}]
  %s6 = inlined_call_operand.vmem [shape: f32[1,128], index: 6, kind: input, shape index: {}]
  %s7 = inlined_call_operand.vmem [shape: f32[16,128], index: 7, kind: output, shape index: {}]
  %s8 = sld [smem:[#allocation0]]
  $region38: #{cnn_forward.15} parent=0
    _
  %s10 = ssub.s32 1, %s8
  %s11 = scalar_select 0, %s10, %s8
  // Predicated region
  $region2: #{cnn_forward.15} parent=0 // pred_check
    _
  $region3: #{cnn_forward.15} parent=0 // pred_check_branch
    %13 = sbr.rel (0) target = $region5
  $region4: #{cnn_forward.15} parent=0 // pred_region
    _
  $region5: #{cnn_forward.15} parent=0 // pred_fallthru
    _
  // Predicated region
  $region6: #{cnn_forward.15} parent=0 // pred_check
    _
  $region7: #{cnn_forward.15} parent=0 // pred_check_branch
    %15 = sbr.rel (0) target = $region9
  $region8: #{cnn_forward.15} parent=0 // pred_region
    _
  $region9: #{cnn_forward.15} parent=0 // pred_fallthru
    _
  // Predicated region
  $region10: #{cnn_forward.15} parent=0 // pred_check
    _
  $region11: #{cnn_forward.15} parent=0 // pred_check_branch
    %17 = sbr.rel (0) target = $region13
  $region12: #{cnn_forward.15} parent=0 // pred_region
    _
  $region13: #{cnn_forward.15} parent=0 // pred_fallthru
    _
  // Predicated region
  $region14: #{cnn_forward.15} parent=0 // pred_check
    _
  $region15: #{cnn_forward.15} parent=0 // pred_check_branch
    %19 = sbr.rel (0) target = $region17
  $region16: #{cnn_forward.15} parent=0 // pred_region
    _
  $region17: #{cnn_forward.15} parent=0 // pred_fallthru
    _
  // Predicated region
  $region18: #{cnn_forward.15} parent=0 // pred_check
    _
  $region19: #{cnn_forward.15} parent=0 // pred_check_branch
    %21 = sbr.rel (0) target = $region21
  $region20: #{cnn_forward.15} parent=0 // pred_region
    _
  $region21: #{cnn_forward.15} parent=0 // pred_fallthru
    _
  // Predicated region
  $region22: #{cnn_forward.15} parent=0 // pred_check
    _
  $region23: #{cnn_forward.15} parent=0 // pred_check_branch
    %23 = sbr.rel (0) target = $region25
  $region24: #{cnn_forward.15} parent=0 // pred_region
    _
  $region25: #{cnn_forward.15} parent=0 // pred_fallthru
    _
  // Predicated region
  $region26: #{cnn_forward.15} parent=0 // pred_check
    _
  $region27: #{cnn_forward.15} parent=0 // pred_check_branch
    %25 = sbr.rel (0) target = $region29
  $region28: #{cnn_forward.15} parent=0 // pred_region
    _
  $region29: #{cnn_forward.15} parent=0 // pred_fallthru
    _
  %v27 = vld [vmem:[%s0] sm:$0xff]
  %v28 = vld [vmem:[%s0 + $0x8] sm:$0xff]
  %v29 = vld [vmem:[%s0 + $0x10] sm:$0xff]
  %v30 = vld [vmem:[%s0 + $0x18] sm:$0xff]
  %v31 = vld [vmem:[%s1] sm:$0xf]
  %v32 = vld [vmem:[%s1 + $0x4] sm:$0xf]
  %v33 = vld [vmem:[%s1 + $0x8] sm:$0xf]
  %v34 = vld [vmem:[%s1 + $0xc] sm:$0xf]
  %v35 = vld [vmem:[%s1 + $0x10] sm:$0xf]
  %v36 = vld [vmem:[%s1 + $0x14] sm:$0xf]
  %v37 = vld [vmem:[%s1 + $0x18] sm:$0xf]
  %v38 = vld [vmem:[%s1 + $0x1c] sm:$0xf]
  %v39 = vld [vmem:[%s1 + $0x20] sm:$0xf]
  %v40 = vld [vmem:[%s1 + $0x24] sm:$0xf]
  %v41 = vld [vmem:[%s1 + $0x28] sm:$0xf]
  %v42 = vld [vmem:[%s1 + $0x2c] sm:$0xf]
  %v43 = vld [vmem:[%s1 + $0x30] sm:$0xf]
  %v44 = vld [vmem:[%s1 + $0x34] sm:$0xf]
  %v45 = vld [vmem:[%s1 + $0x38] sm:$0xf]
  %v46 = vld [vmem:[%s1 + $0x3c] sm:$0xf]
  %v47 = vld [vmem:[%s1 + $0x40] sm:$0xf]
  %v48 = vld [vmem:[%s1 + $0x44] sm:$0xf]
  %v49 = vld [vmem:[%s1 + $0x48] sm:$0xf]
  %v50 = vld [vmem:[%s1 + $0x4c] sm:$0xf]
  %v51 = vld [vmem:[%s1 + $0x50] sm:$0xf]
  %v52 = vld [vmem:[%s1 + $0x54] sm:$0xf]
  %v53 = vld [vmem:[%s1 + $0x58] sm:$0xf]
  %v54 = vld [vmem:[%s1 + $0x5c] sm:$0xf]
  %v55 = vld [vmem:[%s1 + $0x60] sm:$0xf]
  %v56 = vld [vmem:[%s1 + $0x64] sm:$0xf]
  %v57 = vld [vmem:[%s1 + $0x68] sm:$0xf]
  %v58 = vld [vmem:[%s1 + $0x6c] sm:$0xf]
  %v59 = vld [vmem:[%s1 + $0x70] sm:$0xf]
  %v60 = vld [vmem:[%s1 + $0x74] sm:$0xf]
  %v61 = vld [vmem:[%s1 + $0x78] sm:$0xf]
  %v62 = vld [vmem:[%s1 + $0x7c] sm:$0xf]
  %v63 = vld [vmem:[%s1 + $0x80] sm:$0xf]
  %v64 = vld [vmem:[%s1 + $0x84] sm:$0xf]
  %v65 = vld [vmem:[%s1 + $0x88] sm:$0xf]
  %v66 = vld [vmem:[%s1 + $0x8c] sm:$0xf]
  %v67 = vld [vmem:[%s1 + $0x90] sm:$0xf]
  %v68 = vld [vmem:[%s1 + $0x94] sm:$0xf]
  %v69 = vld [vmem:[%s1 + $0x98] sm:$0xf]
  %v70 = vld [vmem:[%s1 + $0x9c] sm:$0xf]
  %v71 = vld [vmem:[%s1 + $0xa0] sm:$0xf]
  %v72 = vld [vmem:[%s1 + $0xa4] sm:$0xf]
  %v73 = vld [vmem:[%s1 + $0xa8] sm:$0xf]
  %v74 = vld [vmem:[%s1 + $0xac] sm:$0xf]
  %v75 = vld [vmem:[%s1 + $0xb0] sm:$0xf]
  %v76 = vld [vmem:[%s1 + $0xb4] sm:$0xf]
  %v77 = vld [vmem:[%s1 + $0xb8] sm:$0xf]
  %v78 = vld [vmem:[%s1 + $0xbc] sm:$0xf]
  %v79 = vld [vmem:[%s1 + $0xc0] sm:$0xf]
  %v80 = vld [vmem:[%s1 + $0xc4] sm:$0xf]
  %v81 = vld [vmem:[%s1 + $0xc8] sm:$0xf]
  %v82 = vld [vmem:[%s1 + $0xcc] sm:$0xf]
  %v83 = vld [vmem:[%s1 + $0xd0] sm:$0xf]
  %v84 = vld [vmem:[%s1 + $0xd4] sm:$0xf]
  %v85 = vld [vmem:[%s1 + $0xd8] sm:$0xf]
  %v86 = vld [vmem:[%s1 + $0xdc] sm:$0xf]
  %v87 = vld [vmem:[%s1 + $0xe0] sm:$0xf]
  %v88 = vld [vmem:[%s1 + $0xe4] sm:$0xf]
  %v89 = vld [vmem:[%s1 + $0xe8] sm:$0xf]
  %v90 = vld [vmem:[%s1 + $0xec] sm:$0xf]
  %v91 = vld [vmem:[%s1 + $0xf0] sm:$0xf]
  %v92 = vld [vmem:[%s1 + $0xf4] sm:$0xf]
  %v93 = vld [vmem:[%s1 + $0xf8] sm:$0xf]
  %v94 = vld [vmem:[%s1 + $0xfc] sm:$0xf]
  %v95 = vld [vmem:[%s2] sm:$0x1]
  %v97 = vlaneseq
  %v98 = vshrl.u32 %v97, 7
  %v99 = vsub.s32 0, %v98
  %v100 = vrot.slane %v95, %v99
  %v106 = vunpack.c.l.b16 %v27
  %v107 = vunpack.c.h.b16 %v27
  %v108 = vunpack.c.l.b16 %v28
  %v109 = vunpack.c.h.b16 %v28
  %v110 = vunpack.c.l.b16 %v29
  %v111 = vunpack.c.h.b16 %v29
  %v112 = vunpack.c.l.b16 %v30
  %v113 = vunpack.c.h.b16 %v30
  %v114 = vpack.c.b16 %v110, %v106
  %v115 = vpack.c.b16 %v111, %v107
  %v116 = vpack.c.b16 %v112, %v108
  %v117 = vpack.c.b16 %v113, %v109
  %v186 = vunpack.c.l.b16 %v31
  %v187 = vunpack.c.l.b16 %v32
  %v188 = vunpack.c.l.b16 %v33
  %v189 = vunpack.c.l.b16 %v34
  %v190 = vunpack.c.l.b16 %v35
  %v191 = vunpack.c.l.b16 %v36
  %v192 = vunpack.c.l.b16 %v37
  %v193 = vunpack.c.l.b16 %v38
  %v194 = vunpack.c.l.b16 %v39
  %v195 = vunpack.c.l.b16 %v40
  %v196 = vunpack.c.l.b16 %v41
  %v197 = vunpack.c.l.b16 %v42
  %v198 = vunpack.c.l.b16 %v43
  %v199 = vunpack.c.l.b16 %v44
  %v200 = vunpack.c.l.b16 %v45
  %v201 = vunpack.c.l.b16 %v46
  %v202 = vunpack.c.l.b16 %v47
  %v203 = vunpack.c.l.b16 %v48
  %v204 = vunpack.c.l.b16 %v49
  %v205 = vunpack.c.l.b16 %v50
  %v206 = vunpack.c.l.b16 %v51
  %v207 = vunpack.c.l.b16 %v52
  %v208 = vunpack.c.l.b16 %v53
  %v209 = vunpack.c.l.b16 %v54
  %v210 = vunpack.c.l.b16 %v55
  %v211 = vunpack.c.l.b16 %v56
  %v212 = vunpack.c.l.b16 %v57
  %v213 = vunpack.c.l.b16 %v58
  %v214 = vunpack.c.l.b16 %v59
  %v215 = vunpack.c.l.b16 %v60
  %v216 = vunpack.c.l.b16 %v61
  %v217 = vunpack.c.l.b16 %v62
  %v218 = vunpack.c.l.b16 %v63
  %v219 = vunpack.c.l.b16 %v64
  %v220 = vunpack.c.l.b16 %v65
  %v221 = vunpack.c.l.b16 %v66
  %v222 = vunpack.c.l.b16 %v67
  %v223 = vunpack.c.l.b16 %v68
  %v224 = vunpack.c.l.b16 %v69
  %v225 = vunpack.c.l.b16 %v70
  %v226 = vunpack.c.l.b16 %v71
  %v227 = vunpack.c.l.b16 %v72
  %v228 = vunpack.c.l.b16 %v73
  %v229 = vunpack.c.l.b16 %v74
  %v230 = vunpack.c.l.b16 %v75
  %v231 = vunpack.c.l.b16 %v76
  %v232 = vunpack.c.l.b16 %v77
  %v233 = vunpack.c.l.b16 %v78
  %v234 = vunpack.c.l.b16 %v79
  %v235 = vunpack.c.l.b16 %v80
  %v236 = vunpack.c.l.b16 %v81
  %v237 = vunpack.c.l.b16 %v82
  %v238 = vunpack.c.l.b16 %v83
  %v239 = vunpack.c.l.b16 %v84
  %v240 = vunpack.c.l.b16 %v85
  %v241 = vunpack.c.l.b16 %v86
  %v242 = vunpack.c.l.b16 %v87
  %v243 = vunpack.c.l.b16 %v88
  %v244 = vunpack.c.l.b16 %v89
  %v245 = vunpack.c.l.b16 %v90
  %v246 = vunpack.c.l.b16 %v91
  %v247 = vunpack.c.l.b16 %v92
  %v248 = vunpack.c.l.b16 %v93
  %v249 = vunpack.c.l.b16 %v94
  %v250 = vpack.c.b16 %v187, %v186
  %v251 = vpack.c.b16 %v189, %v188
  %v252 = vpack.c.b16 %v191, %v190
  %v253 = vpack.c.b16 %v193, %v192
  %v254 = vpack.c.b16 %v195, %v194
  %v255 = vpack.c.b16 %v197, %v196
  %v256 = vpack.c.b16 %v199, %v198
  %v257 = vpack.c.b16 %v201, %v200
  %v258 = vpack.c.b16 %v203, %v202
  %v259 = vpack.c.b16 %v205, %v204
  %v260 = vpack.c.b16 %v207, %v206
  %v261 = vpack.c.b16 %v209, %v208
  %v262 = vpack.c.b16 %v211, %v210
  %v263 = vpack.c.b16 %v213, %v212
  %v264 = vpack.c.b16 %v215, %v214
  %v265 = vpack.c.b16 %v217, %v216
  %v266 = vpack.c.b16 %v219, %v218
  %v267 = vpack.c.b16 %v221, %v220
  %v268 = vpack.c.b16 %v223, %v222
  %v269 = vpack.c.b16 %v225, %v224
  %v270 = vpack.c.b16 %v227, %v226
  %v271 = vpack.c.b16 %v229, %v228
  %v272 = vpack.c.b16 %v231, %v230
  %v273 = vpack.c.b16 %v233, %v232
  %v274 = vpack.c.b16 %v235, %v234
  %v275 = vpack.c.b16 %v237, %v236
  %v276 = vpack.c.b16 %v239, %v238
  %v277 = vpack.c.b16 %v241, %v240
  %v278 = vpack.c.b16 %v243, %v242
  %v279 = vpack.c.b16 %v245, %v244
  %v280 = vpack.c.b16 %v247, %v246
  %v281 = vpack.c.b16 %v249, %v248
  %314 = vmatprep.subr.bf16.mxu0 0
  %315 = vmatpush1.bf16.msra.mxu0 %v250
  %316 = vmatprep.subr.bf16.mxu0 0
  %317 = vmatpush1.bf16.msra.mxu0 %v251
  %318 = vmatprep.subr.bf16.mxu0 0
  %319 = vmatpush1.bf16.msra.mxu0 %v252
  %320 = vmatprep.subr.bf16.mxu0 0
  %321 = vmatpush1.bf16.msra.mxu0 %v253
  %322 = vmatprep.subr.bf16.mxu0 0
  %323 = vmatpush1.bf16.msra.mxu0 %v254
  %324 = vmatprep.subr.bf16.mxu0 0
  %325 = vmatpush1.bf16.msra.mxu0 %v255
  %326 = vmatprep.subr.bf16.mxu0 0
  %327 = vmatpush1.bf16.msra.mxu0 %v256
  %328 = vmatprep.subr.bf16.mxu0 0
  %329 = vmatpush1.bf16.msra.mxu0 %v257
  %330 = vmatprep.subr.bf16.mxu0 0
  %331 = vmatpush1.bf16.msra.mxu0 %v258
  %332 = vmatprep.subr.bf16.mxu0 0
  %333 = vmatpush1.bf16.msra.mxu0 %v259
  %334 = vmatprep.subr.bf16.mxu0 0
  %335 = vmatpush1.bf16.msra.mxu0 %v260
  %336 = vmatprep.subr.bf16.mxu0 0
  %337 = vmatpush1.bf16.msra.mxu0 %v261
  %338 = vmatprep.subr.bf16.mxu0 0
  %339 = vmatpush1.bf16.msra.mxu0 %v262
  %340 = vmatprep.subr.bf16.mxu0 0
  %341 = vmatpush1.bf16.msra.mxu0 %v263
  %342 = vmatprep.subr.bf16.mxu0 0
  %343 = vmatpush1.bf16.msra.mxu0 %v264
  %344 = vmatprep.subr.bf16.mxu0 0
  %345 = vmatpush1.bf16.msra.mxu0 %v265
  %346 = vmatprep.mubr.bf16.mxu0 %v115
  %347 = vmatmul.mubr.bf16.gmra.mrb[0].mxu0 %v114
  %v348 = vpop.f32.mrb[0].mxu0
  %v349 = vadd.f32 %v100, %v348
  %v350 = vpop.f32.mrb[0].mxu0
  %v351 = vpop.f32.mrb[0].mxu0
  %v352 = vadd.f32 %v100, %v351
  %v353 = vpop.f32.mrb[0].mxu0
  %354 = vdwg.mxu0
  %355 = vmatprep.subr.bf16.mxu0 0
  %356 = vmatpush1.bf16.msra.mxu0 %v266
  %357 = vmatprep.subr.bf16.mxu0 0
  %358 = vmatpush1.bf16.msra.mxu0 %v267
  %359 = vmatprep.subr.bf16.mxu0 0
  %360 = vmatpush1.bf16.msra.mxu0 %v268
  %361 = vmatprep.subr.bf16.mxu0 0
  %362 = vmatpush1.bf16.msra.mxu0 %v269
  %363 = vmatprep.subr.bf16.mxu0 0
  %364 = vmatpush1.bf16.msra.mxu0 %v270
  %365 = vmatprep.subr.bf16.mxu0 0
  %366 = vmatpush1.bf16.msra.mxu0 %v271
  %367 = vmatprep.subr.bf16.mxu0 0
  %368 = vmatpush1.bf16.msra.mxu0 %v272
  %369 = vmatprep.subr.bf16.mxu0 0
  %370 = vmatpush1.bf16.msra.mxu0 %v273
  %371 = vmatprep.subr.bf16.mxu0 0
  %372 = vmatpush1.bf16.msra.mxu0 %v274
  %373 = vmatprep.subr.bf16.mxu0 0
  %374 = vmatpush1.bf16.msra.mxu0 %v275
  %375 = vmatprep.subr.bf16.mxu0 0
  %376 = vmatpush1.bf16.msra.mxu0 %v276
  %377 = vmatprep.subr.bf16.mxu0 0
  %378 = vmatpush1.bf16.msra.mxu0 %v277
  %379 = vmatprep.subr.bf16.mxu0 0
  %380 = vmatpush1.bf16.msra.mxu0 %v278
  %381 = vmatprep.subr.bf16.mxu0 0
  %382 = vmatpush1.bf16.msra.mxu0 %v279
  %383 = vmatprep.subr.bf16.mxu0 0
  %384 = vmatpush1.bf16.msra.mxu0 %v280
  %385 = vmatprep.subr.bf16.mxu0 0
  %386 = vmatpush1.bf16.msra.mxu0 %v281
  %387 = vmatprep.mubr.bf16.mxu0 %v117
  %388 = vmatmul.mubr.bf16.gmra.mrb[0].mxu0 %v116
  %v389 = vpop.f32.mrb[0].mxu0
  %v390 = vadd.f32 %v349, %v389
  %v391 = vpop.f32.mrb[0].mxu0
  %v392 = vpop.f32.mrb[0].mxu0
  %v393 = vadd.f32 %v352, %v392
  %v394 = vpop.f32.mrb[0].mxu0
  %395 = vdwg.mxu0
  %v396 = vmax.f32 %v390, 0.0
  %v397 = vmax.f32 %v393, 0.0
  %v398 = vpack.c.bf16 %v397, %v396
  %v399 = vld [vmem:[%s3] sm:$0xf]
  %v400 = vld [vmem:[%s3 + $0x4] sm:$0xf]
  %v401 = vld [vmem:[%s3 + $0x8] sm:$0xf]
  %v402 = vld [vmem:[%s3 + $0xc] sm:$0xf]
  %v403 = vld [vmem:[%s3 + $0x10] sm:$0xf]
  %v404 = vld [vmem:[%s3 + $0x14] sm:$0xf]
  %v405 = vld [vmem:[%s3 + $0x18] sm:$0xf]
  %v406 = vld [vmem:[%s3 + $0x1c] sm:$0xf]
  %v407 = vld [vmem:[%s3 + $0x20] sm:$0xf]
  %v408 = vld [vmem:[%s3 + $0x24] sm:$0xf]
  %v409 = vld [vmem:[%s3 + $0x28] sm:$0xf]
  %v410 = vld [vmem:[%s3 + $0x2c] sm:$0xf]
  %v411 = vld [vmem:[%s3 + $0x30] sm:$0xf]
  %v412 = vld [vmem:[%s3 + $0x34] sm:$0xf]
  %v413 = vld [vmem:[%s3 + $0x38] sm:$0xf]
  %v414 = vld [vmem:[%s3 + $0x3c] sm:$0xf]
  %v415 = vld [vmem:[%s4] sm:$0x1]
  %v417 = vlaneseq
  %v418 = vshrl.u32 %v417, 7
  %v419 = vsub.s32 0, %v418
  %v420 = vrot.slane %v415, %v419
  %v438 = vunpack.c.l.b16 %v399
  %v439 = vunpack.c.l.b16 %v400
  %v440 = vunpack.c.l.b16 %v401
  %v441 = vunpack.c.l.b16 %v402
  %v442 = vunpack.c.l.b16 %v403
  %v443 = vunpack.c.l.b16 %v404
  %v444 = vunpack.c.l.b16 %v405
  %v445 = vunpack.c.l.b16 %v406
  %v446 = vunpack.c.l.b16 %v407
  %v447 = vunpack.c.l.b16 %v408
  %v448 = vunpack.c.l.b16 %v409
  %v449 = vunpack.c.l.b16 %v410
  %v450 = vunpack.c.l.b16 %v411
  %v451 = vunpack.c.l.b16 %v412
  %v452 = vunpack.c.l.b16 %v413
  %v453 = vunpack.c.l.b16 %v414
  %v454 = vpack.c.b16 %v439, %v438
  %v455 = vpack.c.b16 %v441, %v440
  %v456 = vpack.c.b16 %v443, %v442
  %v457 = vpack.c.b16 %v445, %v444
  %v458 = vpack.c.b16 %v447, %v446
  %v459 = vpack.c.b16 %v449, %v448
  %v460 = vpack.c.b16 %v451, %v450
  %v461 = vpack.c.b16 %v453, %v452
  %470 = vmatprep.subr.bf16.mxu0 0
  %471 = vmatpush1.bf16.msra.mxu0 %v454
  %472 = vmatprep.subr.bf16.mxu0 0
  %473 = vmatpush1.bf16.msra.mxu0 %v455
  %474 = vmatprep.subr.bf16.mxu0 0
  %475 = vmatpush1.bf16.msra.mxu0 %v456
  %476 = vmatprep.subr.bf16.mxu0 0
  %477 = vmatpush1.bf16.msra.mxu0 %v457
  %478 = vmatprep.subr.bf16.mxu0 0
  %479 = vmatpush1.bf16.msra.mxu0 %v458
  %480 = vmatprep.subr.bf16.mxu0 0
  %481 = vmatpush1.bf16.msra.mxu0 %v459
  %482 = vmatprep.subr.bf16.mxu0 0
  %483 = vmatpush1.bf16.msra.mxu0 %v460
  %484 = vmatprep.subr.bf16.mxu0 0
  %485 = vmatpush1.bf16.msra.mxu0 %v461
  %486 = vmatprep.subr.bf16.mxu0 0
  %487 = vmatpush1.bf16.msra.mxu0 0
  %488 = vmatprep.subr.bf16.mxu0 0
  %489 = vmatpush1.bf16.msra.mxu0 0
  %490 = vmatprep.subr.bf16.mxu0 0
  %491 = vmatpush1.bf16.msra.mxu0 0
  %492 = vmatprep.subr.bf16.mxu0 0
  %493 = vmatpush1.bf16.msra.mxu0 0
  %494 = vmatprep.subr.bf16.mxu0 0
  %495 = vmatpush1.bf16.msra.mxu0 0
  %496 = vmatprep.subr.bf16.mxu0 0
  %497 = vmatpush1.bf16.msra.mxu0 0
  %498 = vmatprep.subr.bf16.mxu0 0
  %499 = vmatpush1.bf16.msra.mxu0 0
  %500 = vmatprep.subr.bf16.mxu0 0
  %501 = vmatpush1.bf16.msra.mxu0 0
  %502 = vmatprep.mubr.bf16.mxu0 0
  %503 = vmatmul.mubr.bf16.gmra.mrb[0].mxu0 %v398
  %v504 = vpop.f32.mrb[0].mxu0
  %v505 = vadd.f32 %v420, %v504
  %v506 = vpop.f32.mrb[0].mxu0
  %v507 = vpop.f32.mrb[0].mxu0
  %v508 = vadd.f32 %v420, %v507
  %v509 = vpop.f32.mrb[0].mxu0
  %510 = vdwg.mxu0
  %v511 = vmax.f32 %v505, 0.0
  %v512 = vmax.f32 %v508, 0.0
  %v513 = vpack.c.bf16 %v512, %v511
  %v514 = vld [vmem:[%s5] sm:$0xf]
  %v515 = vld [vmem:[%s5 + $0x4] sm:$0xf]
  %v516 = vld [vmem:[%s5 + $0x8] sm:$0xf]
  %v517 = vld [vmem:[%s5 + $0xc] sm:$0xf]
  %v518 = vld [vmem:[%s5 + $0x10] sm:$0xf]
  %v519 = vld [vmem:[%s5 + $0x14] sm:$0xf]
  %v520 = vld [vmem:[%s5 + $0x18] sm:$0xf]
  %v521 = vld [vmem:[%s5 + $0x1c] sm:$0xf]
  %v522 = vld [vmem:[%s5 + $0x20] sm:$0xf]
  %v523 = vld [vmem:[%s5 + $0x24] sm:$0xf]
  %v524 = vld [vmem:[%s5 + $0x28] sm:$0xf]
  %v525 = vld [vmem:[%s5 + $0x2c] sm:$0xf]
  %v526 = vld [vmem:[%s5 + $0x30] sm:$0xf]
  %v527 = vld [vmem:[%s5 + $0x34] sm:$0xf]
  %v528 = vld [vmem:[%s5 + $0x38] sm:$0xf]
  %v529 = vld [vmem:[%s5 + $0x3c] sm:$0xf]
  %v530 = vld [vmem:[%s6] sm:$0x1]
  %v532 = vlaneseq
  %v533 = vshrl.u32 %v532, 7
  %v534 = vsub.s32 0, %v533
  %v535 = vrot.slane %v530, %v534
  %v553 = vunpack.c.l.b16 %v514
  %v554 = vunpack.c.l.b16 %v515
  %v555 = vunpack.c.l.b16 %v516
  %v556 = vunpack.c.l.b16 %v517
  %v557 = vunpack.c.l.b16 %v518
  %v558 = vunpack.c.l.b16 %v519
  %v559 = vunpack.c.l.b16 %v520
  %v560 = vunpack.c.l.b16 %v521
  %v561 = vunpack.c.l.b16 %v522
  %v562 = vunpack.c.l.b16 %v523
  %v563 = vunpack.c.l.b16 %v524
  %v564 = vunpack.c.l.b16 %v525
  %v565 = vunpack.c.l.b16 %v526
  %v566 = vunpack.c.l.b16 %v527
  %v567 = vunpack.c.l.b16 %v528
  %v568 = vunpack.c.l.b16 %v529
  %v569 = vpack.c.b16 %v554, %v553
  %v570 = vpack.c.b16 %v556, %v555
  %v571 = vpack.c.b16 %v558, %v557
  %v572 = vpack.c.b16 %v560, %v559
  %v573 = vpack.c.b16 %v562, %v561
  %v574 = vpack.c.b16 %v564, %v563
  %v575 = vpack.c.b16 %v566, %v565
  %v576 = vpack.c.b16 %v568, %v567
  %585 = vmatprep.subr.bf16.mxu0 0
  %586 = vmatpush1.bf16.msra.mxu0 %v569
  %587 = vmatprep.subr.bf16.mxu0 0
  %588 = vmatpush1.bf16.msra.mxu0 %v570
  %589 = vmatprep.subr.bf16.mxu0 0
  %590 = vmatpush1.bf16.msra.mxu0 %v571
  %591 = vmatprep.subr.bf16.mxu0 0
  %592 = vmatpush1.bf16.msra.mxu0 %v572
  %593 = vmatprep.subr.bf16.mxu0 0
  %594 = vmatpush1.bf16.msra.mxu0 %v573
  %595 = vmatprep.subr.bf16.mxu0 0
  %596 = vmatpush1.bf16.msra.mxu0 %v574
  %597 = vmatprep.subr.bf16.mxu0 0
  %598 = vmatpush1.bf16.msra.mxu0 %v575
  %599 = vmatprep.subr.bf16.mxu0 0
  %600 = vmatpush1.bf16.msra.mxu0 %v576
  %601 = vmatprep.subr.bf16.mxu0 0
  %602 = vmatpush1.bf16.msra.mxu0 0
  %603 = vmatprep.subr.bf16.mxu0 0
  %604 = vmatpush1.bf16.msra.mxu0 0
  %605 = vmatprep.subr.bf16.mxu0 0
  %606 = vmatpush1.bf16.msra.mxu0 0
  %607 = vmatprep.subr.bf16.mxu0 0
  %608 = vmatpush1.bf16.msra.mxu0 0
  %609 = vmatprep.subr.bf16.mxu0 0
  %610 = vmatpush1.bf16.msra.mxu0 0
  %611 = vmatprep.subr.bf16.mxu0 0
  %612 = vmatpush1.bf16.msra.mxu0 0
  %613 = vmatprep.subr.bf16.mxu0 0
  %614 = vmatpush1.bf16.msra.mxu0 0
  %615 = vmatprep.subr.bf16.mxu0 0
  %616 = vmatpush1.bf16.msra.mxu0 0
  %617 = vmatprep.mubr.bf16.mxu0 0
  %618 = vmatmul.mubr.bf16.gmra.mrb[0].mxu0 %v513
  %v619 = vpop.f32.mrb[0].mxu0
  %v620 = vadd.f32 %v535, %v619
  %v621 = vpop.f32.mrb[0].mxu0
  %v622 = vpop.f32.mrb[0].mxu0
  %v623 = vadd.f32 %v535, %v622
  %v624 = vpop.f32.mrb[0].mxu0
  %625 = vdwg.mxu0
  %626 = vst [vmem:[%s7] sm:$0xff] %v620
  %627 = vst [vmem:[%s7 + $0x8] sm:$0xff] %v623
  // Predicated region
  $region30: #{cnn_forward.15} parent=0 // pred_check
    _
  $region31: #{cnn_forward.15} parent=0 // pred_check_branch
    %629 = sbr.rel (0) target = $region33
  $region32: #{cnn_forward.15} parent=0 // pred_region
    _
  $region33: #{cnn_forward.15} parent=0 // pred_fallthru
    _
  // Predicated region
  $region34: #{cnn_forward.15} parent=0 // pred_check
    _
  $region35: #{cnn_forward.15} parent=0 // pred_check_branch
    %631 = sbr.rel (0) target = $region37
  $region36: #{cnn_forward.15} parent=0 // pred_region
    _
  $region37: #{cnn_forward.15} parent=0 // pred_fallthru
    _

</llo_original>
